<compile_context>
chip_gen: v7x
topology: tpu7x:2x2x1
jax: 0.10.0
libtpu: 0.0.40
codegen_flags: <defaults>
</compile_context>

<pallas_src>
import jax
import jax.numpy as jnp
import numpy as np
from jax.experimental import pallas as pl
from jax.experimental.pallas import tpu as pltpu


# ----------------------------- Pallas kernel ------------------------------- #
def _disc_kernel(mask_ref, xp_ref, w1_ref, b1_ref, rw_ref, rb_ref,
                 wl_ref, sel_ref, bl_ref, o_ref):
    val, Lp = xp_ref.shape                 # (val_size, padded packed length)
    dim = w1_ref.shape[0]

    # ---- 1x1 Conv1d(val -> dim): K=val is tiny, keep it off the MXU (VPU). ----
    h = w1_ref[:, pl.ds(0, 1)] * xp_ref[pl.ds(0, 1), :]          # (dim, Lp)
    for v in range(1, val):
        h = h + w1_ref[:, pl.ds(v, 1)] * xp_ref[pl.ds(v, 1), :]
    h = h + b1_ref[...]

    # Per-tap boundary-mask rows (1, Lp); hoisted once, reused by all 10 convs.
    masks = {k: mask_ref[pl.ds(k, 1), :] for k in (0, 1, 3, 4)}

    # ---- Conv1d(dim, dim, 5, pad=2), output-roll form:
    #      one bf16 matmul -> (5*dim, Lp), then roll/mask/add the tap sub-blocks. ----
    def conv5(z, idx):
        y = jnp.dot(rw_ref[idx], z.astype(jnp.bfloat16),
                    preferred_element_type=jnp.float32)          # (5*dim, Lp) f32
        out = y[2 * dim:3 * dim, :]                              # center tap: no roll/mask
        for k in (0, 1, 3, 4):
            rolled = pltpu.roll(y[k * dim:(k + 1) * dim, :],
                                shift=(2 - k) % Lp, axis=1)
            out = out + rolled * masks[k]
        return out + rb_ref[idx]                                 # (dim, Lp)

    # 5 ResBlocks: h + conv2'(relu(conv1(relu(h)))), 0.3 folded into conv2'.
    for r in range(5):
        y = conv5(jnp.maximum(h, 0.0), 2 * r)
        y = conv5(jnp.maximum(y, 0.0), 2 * r + 1)
        h = h + y

    # ---- Linear(feat*dim -> 1) for all batches: product + batch-keyed selector. ----
    per_b = jnp.dot(h * wl_ref[...], sel_ref[...],
                    preferred_element_type=jnp.float32)          # (dim, 128)
    o_ref[...] = jnp.sum(per_b, axis=0, keepdims=True) + bl_ref[0, 0]


# ------------------------- one-time constant prep --------------------------- #
def build_constants(params, B, feat, val):
    """Build all parameter-derived kernel operands ONCE per parameter set."""
    assert B <= 128, "batch-keyed selector supports B <= 128"
    dim = params["b1"].shape[0]
    L = B * feat
    Lp = max(128, ((L + 127) // 128) * 128)          # lane-padded packed length

    w1_k = params["w1"][:, :, 0].astype(jnp.float32)             # (dim, val)
    b1_k = params["b1"][:, None].astype(jnp.float32)             # (dim, 1)

    # Tap-stacked conv weights (output-roll form):
    #   rw_k[2r+p][k*dim + o, c] = rw[r, p, o, c, k] * scale[p], scale = (1.0, 0.3).
    scale5 = jnp.array([1.0, 0.3], jnp.float32).reshape(1, 2, 1, 1, 1)
    rw_k = (jnp.transpose(params["rw"], (0, 1, 4, 2, 3)) * scale5)   # (5,2,5,dim,dim)
    rw_k = rw_k.reshape(10, 5 * dim, dim).astype(jnp.bfloat16)       # bf16 for the MXU
    rb_k = (params["rb"] * jnp.array([1.0, 0.3], jnp.float32).reshape(1, 2, 1)
            ).reshape(10, dim, 1).astype(jnp.float32)

    # Per-tap boundary masks, one row per tap, padded to 8 sublanes: tap k is valid at
    # packed lane l iff l is a real lane and 0 <= (l % feat) + k - 2 < feat.
    l_idx = jnp.arange(Lp)
    f_idx = l_idx % feat
    real = l_idx < L
    rows = [(real & (f_idx + (k - 2) >= 0) & (f_idx + (k - 2) < feat)
             ).astype(jnp.float32) for k in range(5)]
    mask = jnp.stack(rows + [jnp.zeros((Lp,), jnp.float32)] * 3, axis=0)   # (8, Lp)

    # Linear: d-major flattening -> (dim, feat) weight, tiled across batch lanes.
    wl_k = jnp.pad(jnp.tile(params["lw"].reshape(dim, feat), (1, B)),
                   ((0, 0), (0, Lp - L))).astype(jnp.float32)    # (dim, Lp)
    # Batch-keyed lane selector: sel[l, b] = 1 iff packed lane l belongs to batch b.
    sel = ((l_idx[:, None] // feat == jnp.arange(128)[None, :]) & real[:, None]
           ).astype(jnp.float32)                                 # (Lp, 128)
    bl_k = params["lb"].reshape(1, 1).astype(jnp.float32)        # scalar -> SMEM

    return dict(mask=mask, w1=w1_k, b1=b1_k, rw=rw_k, rb=rb_k,
                wl=wl_k, sel=sel, lb=bl_k,
                dims=(B, feat, val, dim, L, Lp))


# ------------------------------ JAX wrapper -------------------------------- #
def discriminator_forward(x, consts):
    """x: (B, feat_size, val_size) float32 -> (B, 1) float32."""
    B, feat, val, dim, L, Lp = consts["dims"]

    # Packed input: xp[v, b*feat + f] = x[b, f, v], zero padded to Lp lanes.
    xp = jnp.transpose(x, (2, 0, 1)).reshape(val, L)
    xp = jnp.pad(xp, ((0, 0), (0, Lp - L)))

    out = pl.pallas_call(
        _disc_kernel,
        out_shape=jax.ShapeDtypeStruct((1, 128), jnp.float32),
        grid=(1,),
        in_specs=[
            pl.BlockSpec((8, Lp), lambda i: (0, 0)),                 # mask (per-tap rows)
            pl.BlockSpec((val, Lp), lambda i: (0, 0)),               # xp
            pl.BlockSpec((dim, val), lambda i: (0, 0)),              # w1
            pl.BlockSpec((dim, 1), lambda i: (0, 0)),                # b1
            pl.BlockSpec((10, 5 * dim, dim), lambda i: (0, 0, 0)),   # rw (tap-stacked, bf16)
            pl.BlockSpec((10, dim, 1), lambda i: (0, 0, 0)),         # rb
            pl.BlockSpec((dim, Lp), lambda i: (0, 0)),               # wl
            pl.BlockSpec((Lp, 128), lambda i: (0, 0)),               # sel (batch-keyed)
            pl.BlockSpec(memory_space=pltpu.MemorySpace.SMEM),       # lb (scalar)
        ],
        out_specs=pl.BlockSpec((1, 128), lambda i: (0, 0)),
    )(consts["mask"], xp, consts["w1"], consts["b1"], consts["rw"],
      consts["rb"], consts["wl"], consts["sel"], consts["lb"])
    return out[0, :B].reshape(B, 1)


# --------------------------- pure-JAX reference ----------------------------- #
def _conv1d_ref(x, w, b, pad):
    # x: (B, C, L), w: (O, C, K) (PyTorch layout, cross-correlation), b: (O,)
    out = jax.lax.conv_general_dilated(
        x, w, window_strides=(1,), padding=[(pad, pad)],
        dimension_numbers=("NCH", "OIH", "NCH"))
    return out + b[None, :, None]


def reference_forward(x, params):
    xt = jnp.transpose(x, (0, 2, 1))                      # (B, val, feat)
    h = _conv1d_ref(xt, params["w1"], params["b1"], 0)    # (B, dim, feat)
    for r in range(5):
        y = jax.nn.relu(h)
        y = _conv1d_ref(y, params["rw"][r, 0], params["rb"][r, 0], 2)
        y = jax.nn.relu(y)
        y = _conv1d_ref(y, params["rw"][r, 1], params["rb"][r, 1], 2)
        h = h + 0.3 * y
    flat = h.reshape(x.shape[0], -1)                      # (B, dim*feat)
    return flat @ params["lw"].T + params["lb"][None, :]  # (B, 1)


# ---------------------------------- main ------------------------------------ #
if __name__ == "__main__":
    B, FEAT, VAL, DIM = 2, 16, 4, 32

    key = jax.random.PRNGKey(0)
    kx, k1, k2, k3, k4, k5, k6 = jax.random.split(key, 7)

    params = {
        "w1": 0.2 * jax.random.normal(k1, (DIM, VAL, 1), jnp.float32),
        "b1": 0.1 * jax.random.normal(k2, (DIM,), jnp.float32),
        "rw": 0.1 * jax.random.normal(k3, (5, 2, DIM, DIM, 5), jnp.float32),
        "rb": 0.1 * jax.random.normal(k4, (5, 2, DIM), jnp.float32),
        "lw": 0.1 * jax.random.normal(k5, (1, FEAT * DIM), jnp.float32),
        "lb": 0.1 * jax.random.normal(k6, (1,), jnp.float32),
    }
    x = jax.random.normal(kx, (B, FEAT, VAL), jnp.float32)

    # Constants built once; the jitted forward only packs x + runs the kernel.
    consts = build_constants(params, B, FEAT, VAL)
    fwd = jax.jit(lambda inp: discriminator_forward(inp, consts))

    out = jax.block_until_ready(fwd(x))
    ref = jax.block_until_ready(reference_forward(x, params))

    assert out.shape == (B, 1), out.shape
    np.testing.assert_allclose(np.asarray(out), np.asarray(ref),
                               rtol=2e-2, atol=2e-2)
    print("KERNEL_OK")
</pallas_src>

<mosaic_0001>
module attributes {stable_mosaic.version = 11 : i64} {
  func.func @_disc_kernel(%arg0: i32, %arg1: memref<8x128xf32, #tpu.memory_space<vmem>>, %arg2: memref<4x128xf32, #tpu.memory_space<vmem>>, %arg3: memref<32x4xf32, #tpu.memory_space<vmem>>, %arg4: memref<32x1xf32, #tpu.memory_space<vmem>>, %arg5: memref<10x160x32xbf16, #tpu.memory_space<vmem>>, %arg6: memref<10x32x1xf32, #tpu.memory_space<vmem>>, %arg7: memref<32x128xf32, #tpu.memory_space<vmem>>, %arg8: memref<128x128xf32, #tpu.memory_space<vmem>>, %arg9: memref<1x1xf32, #tpu.memory_space<smem>>, %arg10: memref<1x128xf32, #tpu.memory_space<vmem>>) attributes {dimension_semantics = [#tpu.dimension_semantics<arbitrary>], iteration_bounds = array<i64: 1>, scalar_prefetch = 0 : i64, scratch_operands = 0 : i64, tpu.core_type = #tpu.core_type<tc>, window_params = [{pipeline_mode = #tpu.pipeline_mode<synchronous>, transform_indices = @transform_0, window_bounds = array<i64: 8, 128>}, {pipeline_mode = #tpu.pipeline_mode<synchronous>, transform_indices = @transform_1, window_bounds = array<i64: 4, 128>}, {pipeline_mode = #tpu.pipeline_mode<synchronous>, transform_indices = @transform_2, window_bounds = array<i64: 32, 4>}, {pipeline_mode = #tpu.pipeline_mode<synchronous>, transform_indices = @transform_3, window_bounds = array<i64: 32, 1>}, {pipeline_mode = #tpu.pipeline_mode<synchronous>, transform_indices = @transform_4, window_bounds = array<i64: 10, 160, 32>}, {pipeline_mode = #tpu.pipeline_mode<synchronous>, transform_indices = @transform_5, window_bounds = array<i64: 10, 32, 1>}, {pipeline_mode = #tpu.pipeline_mode<synchronous>, transform_indices = @transform_6, window_bounds = array<i64: 32, 128>}, {pipeline_mode = #tpu.pipeline_mode<synchronous>, transform_indices = @transform_7, window_bounds = array<i64: 128, 128>}, {transform_indices = @transform_8, window_bounds = array<i64: 1, 1>}, {pipeline_mode = #tpu.pipeline_mode<synchronous>, transform_indices = @transform_9, window_bounds = array<i64: 1, 128>}]} {
    %c0 = arith.constant 0 : index
    %c0_0 = arith.constant 0 : index
    %0 = vector.load %arg3[%c0, %c0_0] : memref<32x4xf32, #tpu.memory_space<vmem>>, vector<32x1xf32>
    %c0_1 = arith.constant 0 : index
    %c0_2 = arith.constant 0 : index
    %1 = vector.load %arg2[%c0_1, %c0_2] : memref<4x128xf32, #tpu.memory_space<vmem>>, vector<1x128xf32>
    %2 = vector.broadcast %0 : vector<32x1xf32> to vector<32x128xf32>
    %3 = vector.broadcast %1 : vector<1x128xf32> to vector<32x128xf32>
    %4 = arith.mulf %2, %3 : vector<32x128xf32>
    %c0_3 = arith.constant 0 : index
    %c1 = arith.constant 1 : index
    %5 = vector.load %arg3[%c0_3, %c1] : memref<32x4xf32, #tpu.memory_space<vmem>>, vector<32x1xf32>
    %c1_4 = arith.constant 1 : index
    %c0_5 = arith.constant 0 : index
    %6 = vector.load %arg2[%c1_4, %c0_5] : memref<4x128xf32, #tpu.memory_space<vmem>>, vector<1x128xf32>
    %7 = vector.broadcast %5 : vector<32x1xf32> to vector<32x128xf32>
    %8 = vector.broadcast %6 : vector<1x128xf32> to vector<32x128xf32>
    %9 = arith.mulf %7, %8 : vector<32x128xf32>
    %10 = arith.addf %4, %9 : vector<32x128xf32>
    %c0_6 = arith.constant 0 : index
    %c2 = arith.constant 2 : index
    %11 = vector.load %arg3[%c0_6, %c2] : memref<32x4xf32, #tpu.memory_space<vmem>>, vector<32x1xf32>
    %c2_7 = arith.constant 2 : index
    %c0_8 = arith.constant 0 : index
    %12 = vector.load %arg2[%c2_7, %c0_8] : memref<4x128xf32, #tpu.memory_space<vmem>>, vector<1x128xf32>
    %13 = vector.broadcast %11 : vector<32x1xf32> to vector<32x128xf32>
    %14 = vector.broadcast %12 : vector<1x128xf32> to vector<32x128xf32>
    %15 = arith.mulf %13, %14 : vector<32x128xf32>
    %16 = arith.addf %10, %15 : vector<32x128xf32>
    %c0_9 = arith.constant 0 : index
    %c3 = arith.constant 3 : index
    %17 = vector.load %arg3[%c0_9, %c3] : memref<32x4xf32, #tpu.memory_space<vmem>>, vector<32x1xf32>
    %c3_10 = arith.constant 3 : index
    %c0_11 = arith.constant 0 : index
    %18 = vector.load %arg2[%c3_10, %c0_11] : memref<4x128xf32, #tpu.memory_space<vmem>>, vector<1x128xf32>
    %19 = vector.broadcast %17 : vector<32x1xf32> to vector<32x128xf32>
    %20 = vector.broadcast %18 : vector<1x128xf32> to vector<32x128xf32>
    %21 = arith.mulf %19, %20 : vector<32x128xf32>
    %22 = arith.addf %16, %21 : vector<32x128xf32>
    %c0_12 = arith.constant 0 : index
    %c0_13 = arith.constant 0 : index
    %23 = vector.load %arg4[%c0_12, %c0_13] : memref<32x1xf32, #tpu.memory_space<vmem>>, vector<32x1xf32>
    %24 = vector.broadcast %23 : vector<32x1xf32> to vector<32x128xf32>
    %25 = arith.addf %22, %24 : vector<32x128xf32>
    %c0_14 = arith.constant 0 : index
    %c0_15 = arith.constant 0 : index
    %26 = vector.load %arg1[%c0_14, %c0_15] : memref<8x128xf32, #tpu.memory_space<vmem>>, vector<1x128xf32>
    %c1_16 = arith.constant 1 : index
    %c0_17 = arith.constant 0 : index
    %27 = vector.load %arg1[%c1_16, %c0_17] : memref<8x128xf32, #tpu.memory_space<vmem>>, vector<1x128xf32>
    %c3_18 = arith.constant 3 : index
    %c0_19 = arith.constant 0 : index
    %28 = vector.load %arg1[%c3_18, %c0_19] : memref<8x128xf32, #tpu.memory_space<vmem>>, vector<1x128xf32>
    %c4 = arith.constant 4 : index
    %c0_20 = arith.constant 0 : index
    %29 = vector.load %arg1[%c4, %c0_20] : memref<8x128xf32, #tpu.memory_space<vmem>>, vector<1x128xf32>
    %cst = arith.constant 0.000000e+00 : f32
    %30 = vector.broadcast %cst : f32 to vector<32x128xf32>
    %31 = arith.maximumf %25, %30 : vector<32x128xf32>
    %c0_21 = arith.constant 0 : index
    %c0_22 = arith.constant 0 : index
    %c0_23 = arith.constant 0 : index
    %32 = vector.load %arg5[%c0_21, %c0_22, %c0_23] : memref<10x160x32xbf16, #tpu.memory_space<vmem>>, vector<1x160x32xbf16>
    %33 = vector.shape_cast %32 : vector<1x160x32xbf16> to vector<160x32xbf16>
    %34 = arith.truncf %31 : vector<32x128xf32> to vector<32x128xbf16>
    %cst_24 = arith.constant dense<0.000000e+00> : vector<160x128xf32>
    %35 = tpu.matmul %33, %34, %cst_24 {dimension_numbers = #tpu.dot_dimension_numbers<[1], [0], [0], [1], [0, 0, 1, 1], [], []>} : vector<160x32xbf16>, vector<32x128xbf16>, vector<160x128xf32> -> vector<160x128xf32>
    %36 = vector.extract_strided_slice %35 {offsets = [64, 0], sizes = [32, 128], strides = [1, 1]} : vector<160x128xf32> to vector<32x128xf32>
    %37 = vector.extract_strided_slice %35 {offsets = [0, 0], sizes = [32, 128], strides = [1, 1]} : vector<160x128xf32> to vector<32x128xf32>
    %c2_i32 = arith.constant 2 : i32
    %38 = tpu.dynamic_rotate %37 by %c2_i32 dim 1 : vector<32x128xf32>, i32 -> vector<32x128xf32>
    %39 = vector.broadcast %26 : vector<1x128xf32> to vector<32x128xf32>
    %40 = arith.mulf %38, %39 : vector<32x128xf32>
    %41 = arith.addf %36, %40 : vector<32x128xf32>
    %42 = vector.extract_strided_slice %35 {offsets = [32, 0], sizes = [32, 128], strides = [1, 1]} : vector<160x128xf32> to vector<32x128xf32>
    %c1_i32 = arith.constant 1 : i32
    %43 = tpu.dynamic_rotate %42 by %c1_i32 dim 1 : vector<32x128xf32>, i32 -> vector<32x128xf32>
    %44 = vector.broadcast %27 : vector<1x128xf32> to vector<32x128xf32>
    %45 = arith.mulf %43, %44 : vector<32x128xf32>
    %46 = arith.addf %41, %45 : vector<32x128xf32>
    %47 = vector.extract_strided_slice %35 {offsets = [96, 0], sizes = [32, 128], strides = [1, 1]} : vector<160x128xf32> to vector<32x128xf32>
    %c127_i32 = arith.constant 127 : i32
    %48 = tpu.dynamic_rotate %47 by %c127_i32 dim 1 : vector<32x128xf32>, i32 -> vector<32x128xf32>
    %49 = vector.broadcast %28 : vector<1x128xf32> to vector<32x128xf32>
    %50 = arith.mulf %48, %49 : vector<32x128xf32>
    %51 = arith.addf %46, %50 : vector<32x128xf32>
    %52 = vector.extract_strided_slice %35 {offsets = [128, 0], sizes = [32, 128], strides = [1, 1]} : vector<160x128xf32> to vector<32x128xf32>
    %c126_i32 = arith.constant 126 : i32
    %53 = tpu.dynamic_rotate %52 by %c126_i32 dim 1 : vector<32x128xf32>, i32 -> vector<32x128xf32>
    %54 = vector.broadcast %29 : vector<1x128xf32> to vector<32x128xf32>
    %55 = arith.mulf %53, %54 : vector<32x128xf32>
    %56 = arith.addf %51, %55 : vector<32x128xf32>
    %c0_25 = arith.constant 0 : index
    %c0_26 = arith.constant 0 : index
    %c0_27 = arith.constant 0 : index
    %57 = vector.load %arg6[%c0_25, %c0_26, %c0_27] : memref<10x32x1xf32, #tpu.memory_space<vmem>>, vector<1x32x1xf32>
    %58 = vector.shape_cast %57 : vector<1x32x1xf32> to vector<32x1xf32>
    %59 = vector.broadcast %58 : vector<32x1xf32> to vector<32x128xf32>
    %60 = arith.addf %56, %59 : vector<32x128xf32>
    %cst_28 = arith.constant 0.000000e+00 : f32
    %61 = vector.broadcast %cst_28 : f32 to vector<32x128xf32>
    %62 = arith.maximumf %60, %61 : vector<32x128xf32>
    %c1_29 = arith.constant 1 : index
    %c0_30 = arith.constant 0 : index
    %c0_31 = arith.constant 0 : index
    %63 = vector.load %arg5[%c1_29, %c0_30, %c0_31] : memref<10x160x32xbf16, #tpu.memory_space<vmem>>, vector<1x160x32xbf16>
    %64 = vector.shape_cast %63 : vector<1x160x32xbf16> to vector<160x32xbf16>
    %65 = arith.truncf %62 : vector<32x128xf32> to vector<32x128xbf16>
    %cst_32 = arith.constant dense<0.000000e+00> : vector<160x128xf32>
    %66 = tpu.matmul %64, %65, %cst_32 {dimension_numbers = #tpu.dot_dimension_numbers<[1], [0], [0], [1], [0, 0, 1, 1], [], []>} : vector<160x32xbf16>, vector<32x128xbf16>, vector<160x128xf32> -> vector<160x128xf32>
    %67 = vector.extract_strided_slice %66 {offsets = [64, 0], sizes = [32, 128], strides = [1, 1]} : vector<160x128xf32> to vector<32x128xf32>
    %68 = vector.extract_strided_slice %66 {offsets = [0, 0], sizes = [32, 128], strides = [1, 1]} : vector<160x128xf32> to vector<32x128xf32>
    %c2_i32_33 = arith.constant 2 : i32
    %69 = tpu.dynamic_rotate %68 by %c2_i32_33 dim 1 : vector<32x128xf32>, i32 -> vector<32x128xf32>
    %70 = vector.broadcast %26 : vector<1x128xf32> to vector<32x128xf32>
    %71 = arith.mulf %69, %70 : vector<32x128xf32>
    %72 = arith.addf %67, %71 : vector<32x128xf32>
    %73 = vector.extract_strided_slice %66 {offsets = [32, 0], sizes = [32, 128], strides = [1, 1]} : vector<160x128xf32> to vector<32x128xf32>
    %c1_i32_34 = arith.constant 1 : i32
    %74 = tpu.dynamic_rotate %73 by %c1_i32_34 dim 1 : vector<32x128xf32>, i32 -> vector<32x128xf32>
    %75 = vector.broadcast %27 : vector<1x128xf32> to vector<32x128xf32>
    %76 = arith.mulf %74, %75 : vector<32x128xf32>
    %77 = arith.addf %72, %76 : vector<32x128xf32>
    %78 = vector.extract_strided_slice %66 {offsets = [96, 0], sizes = [32, 128], strides = [1, 1]} : vector<160x128xf32> to vector<32x128xf32>
    %c127_i32_35 = arith.constant 127 : i32
    %79 = tpu.dynamic_rotate %78 by %c127_i32_35 dim 1 : vector<32x128xf32>, i32 -> vector<32x128xf32>
    %80 = vector.broadcast %28 : vector<1x128xf32> to vector<32x128xf32>
    %81 = arith.mulf %79, %80 : vector<32x128xf32>
    %82 = arith.addf %77, %81 : vector<32x128xf32>
    %83 = vector.extract_strided_slice %66 {offsets = [128, 0], sizes = [32, 128], strides = [1, 1]} : vector<160x128xf32> to vector<32x128xf32>
    %c126_i32_36 = arith.constant 126 : i32
    %84 = tpu.dynamic_rotate %83 by %c126_i32_36 dim 1 : vector<32x128xf32>, i32 -> vector<32x128xf32>
    %85 = vector.broadcast %29 : vector<1x128xf32> to vector<32x128xf32>
    %86 = arith.mulf %84, %85 : vector<32x128xf32>
    %87 = arith.addf %82, %86 : vector<32x128xf32>
    %c1_37 = arith.constant 1 : index
    %c0_38 = arith.constant 0 : index
    %c0_39 = arith.constant 0 : index
    %88 = vector.load %arg6[%c1_37, %c0_38, %c0_39] : memref<10x32x1xf32, #tpu.memory_space<vmem>>, vector<1x32x1xf32>
    %89 = vector.shape_cast %88 : vector<1x32x1xf32> to vector<32x1xf32>
    %90 = vector.broadcast %89 : vector<32x1xf32> to vector<32x128xf32>
    %91 = arith.addf %87, %90 : vector<32x128xf32>
    %92 = arith.addf %25, %91 : vector<32x128xf32>
    %cst_40 = arith.constant 0.000000e+00 : f32
    %93 = vector.broadcast %cst_40 : f32 to vector<32x128xf32>
    %94 = arith.maximumf %92, %93 : vector<32x128xf32>
    %c2_41 = arith.constant 2 : index
    %c0_42 = arith.constant 0 : index
    %c0_43 = arith.constant 0 : index
    %95 = vector.load %arg5[%c2_41, %c0_42, %c0_43] : memref<10x160x32xbf16, #tpu.memory_space<vmem>>, vector<1x160x32xbf16>
    %96 = vector.shape_cast %95 : vector<1x160x32xbf16> to vector<160x32xbf16>
    %97 = arith.truncf %94 : vector<32x128xf32> to vector<32x128xbf16>
    %cst_44 = arith.constant dense<0.000000e+00> : vector<160x128xf32>
    %98 = tpu.matmul %96, %97, %cst_44 {dimension_numbers = #tpu.dot_dimension_numbers<[1], [0], [0], [1], [0, 0, 1, 1], [], []>} : vector<160x32xbf16>, vector<32x128xbf16>, vector<160x128xf32> -> vector<160x128xf32>
    %99 = vector.extract_strided_slice %98 {offsets = [64, 0], sizes = [32, 128], strides = [1, 1]} : vector<160x128xf32> to vector<32x128xf32>
    %100 = vector.extract_strided_slice %98 {offsets = [0, 0], sizes = [32, 128], strides = [1, 1]} : vector<160x128xf32> to vector<32x128xf32>
    %c2_i32_45 = arith.constant 2 : i32
    %101 = tpu.dynamic_rotate %100 by %c2_i32_45 dim 1 : vector<32x128xf32>, i32 -> vector<32x128xf32>
    %102 = vector.broadcast %26 : vector<1x128xf32> to vector<32x128xf32>
    %103 = arith.mulf %101, %102 : vector<32x128xf32>
    %104 = arith.addf %99, %103 : vector<32x128xf32>
    %105 = vector.extract_strided_slice %98 {offsets = [32, 0], sizes = [32, 128], strides = [1, 1]} : vector<160x128xf32> to vector<32x128xf32>
    %c1_i32_46 = arith.constant 1 : i32
    %106 = tpu.dynamic_rotate %105 by %c1_i32_46 dim 1 : vector<32x128xf32>, i32 -> vector<32x128xf32>
    %107 = vector.broadcast %27 : vector<1x128xf32> to vector<32x128xf32>
    %108 = arith.mulf %106, %107 : vector<32x128xf32>
    %109 = arith.addf %104, %108 : vector<32x128xf32>
    %110 = vector.extract_strided_slice %98 {offsets = [96, 0], sizes = [32, 128], strides = [1, 1]} : vector<160x128xf32> to vector<32x128xf32>
    %c127_i32_47 = arith.constant 127 : i32
    %111 = tpu.dynamic_rotate %110 by %c127_i32_47 dim 1 : vector<32x128xf32>, i32 -> vector<32x128xf32>
    %112 = vector.broadcast %28 : vector<1x128xf32> to vector<32x128xf32>
    %113 = arith.mulf %111, %112 : vector<32x128xf32>
    %114 = arith.addf %109, %113 : vector<32x128xf32>
    %115 = vector.extract_strided_slice %98 {offsets = [128, 0], sizes = [32, 128], strides = [1, 1]} : vector<160x128xf32> to vector<32x128xf32>
    %c126_i32_48 = arith.constant 126 : i32
    %116 = tpu.dynamic_rotate %115 by %c126_i32_48 dim 1 : vector<32x128xf32>, i32 -> vector<32x128xf32>
    %117 = vector.broadcast %29 : vector<1x128xf32> to vector<32x128xf32>
    %118 = arith.mulf %116, %117 : vector<32x128xf32>
    %119 = arith.addf %114, %118 : vector<32x128xf32>
    %c2_49 = arith.constant 2 : index
    %c0_50 = arith.constant 0 : index
    %c0_51 = arith.constant 0 : index
    %120 = vector.load %arg6[%c2_49, %c0_50, %c0_51] : memref<10x32x1xf32, #tpu.memory_space<vmem>>, vector<1x32x1xf32>
    %121 = vector.shape_cast %120 : vector<1x32x1xf32> to vector<32x1xf32>
    %122 = vector.broadcast %121 : vector<32x1xf32> to vector<32x128xf32>
    %123 = arith.addf %119, %122 : vector<32x128xf32>
    %cst_52 = arith.constant 0.000000e+00 : f32
    %124 = vector.broadcast %cst_52 : f32 to vector<32x128xf32>
    %125 = arith.maximumf %123, %124 : vector<32x128xf32>
    %c3_53 = arith.constant 3 : index
    %c0_54 = arith.constant 0 : index
    %c0_55 = arith.constant 0 : index
    %126 = vector.load %arg5[%c3_53, %c0_54, %c0_55] : memref<10x160x32xbf16, #tpu.memory_space<vmem>>, vector<1x160x32xbf16>
    %127 = vector.shape_cast %126 : vector<1x160x32xbf16> to vector<160x32xbf16>
    %128 = arith.truncf %125 : vector<32x128xf32> to vector<32x128xbf16>
    %cst_56 = arith.constant dense<0.000000e+00> : vector<160x128xf32>
    %129 = tpu.matmul %127, %128, %cst_56 {dimension_numbers = #tpu.dot_dimension_numbers<[1], [0], [0], [1], [0, 0, 1, 1], [], []>} : vector<160x32xbf16>, vector<32x128xbf16>, vector<160x128xf32> -> vector<160x128xf32>
    %130 = vector.extract_strided_slice %129 {offsets = [64, 0], sizes = [32, 128], strides = [1, 1]} : vector<160x128xf32> to vector<32x128xf32>
    %131 = vector.extract_strided_slice %129 {offsets = [0, 0], sizes = [32, 128], strides = [1, 1]} : vector<160x128xf32> to vector<32x128xf32>
    %c2_i32_57 = arith.constant 2 : i32
    %132 = tpu.dynamic_rotate %131 by %c2_i32_57 dim 1 : vector<32x128xf32>, i32 -> vector<32x128xf32>
    %133 = vector.broadcast %26 : vector<1x128xf32> to vector<32x128xf32>
    %134 = arith.mulf %132, %133 : vector<32x128xf32>
    %135 = arith.addf %130, %134 : vector<32x128xf32>
    %136 = vector.extract_strided_slice %129 {offsets = [32, 0], sizes = [32, 128], strides = [1, 1]} : vector<160x128xf32> to vector<32x128xf32>
    %c1_i32_58 = arith.constant 1 : i32
    %137 = tpu.dynamic_rotate %136 by %c1_i32_58 dim 1 : vector<32x128xf32>, i32 -> vector<32x128xf32>
    %138 = vector.broadcast %27 : vector<1x128xf32> to vector<32x128xf32>
    %139 = arith.mulf %137, %138 : vector<32x128xf32>
    %140 = arith.addf %135, %139 : vector<32x128xf32>
    %141 = vector.extract_strided_slice %129 {offsets = [96, 0], sizes = [32, 128], strides = [1, 1]} : vector<160x128xf32> to vector<32x128xf32>
    %c127_i32_59 = arith.constant 127 : i32
    %142 = tpu.dynamic_rotate %141 by %c127_i32_59 dim 1 : vector<32x128xf32>, i32 -> vector<32x128xf32>
    %143 = vector.broadcast %28 : vector<1x128xf32> to vector<32x128xf32>
    %144 = arith.mulf %142, %143 : vector<32x128xf32>
    %145 = arith.addf %140, %144 : vector<32x128xf32>
    %146 = vector.extract_strided_slice %129 {offsets = [128, 0], sizes = [32, 128], strides = [1, 1]} : vector<160x128xf32> to vector<32x128xf32>
    %c126_i32_60 = arith.constant 126 : i32
    %147 = tpu.dynamic_rotate %146 by %c126_i32_60 dim 1 : vector<32x128xf32>, i32 -> vector<32x128xf32>
    %148 = vector.broadcast %29 : vector<1x128xf32> to vector<32x128xf32>
    %149 = arith.mulf %147, %148 : vector<32x128xf32>
    %150 = arith.addf %145, %149 : vector<32x128xf32>
    %c3_61 = arith.constant 3 : index
    %c0_62 = arith.constant 0 : index
    %c0_63 = arith.constant 0 : index
    %151 = vector.load %arg6[%c3_61, %c0_62, %c0_63] : memref<10x32x1xf32, #tpu.memory_space<vmem>>, vector<1x32x1xf32>
    %152 = vector.shape_cast %151 : vector<1x32x1xf32> to vector<32x1xf32>
    %153 = vector.broadcast %152 : vector<32x1xf32> to vector<32x128xf32>
    %154 = arith.addf %150, %153 : vector<32x128xf32>
    %155 = arith.addf %92, %154 : vector<32x128xf32>
    %cst_64 = arith.constant 0.000000e+00 : f32
    %156 = vector.broadcast %cst_64 : f32 to vector<32x128xf32>
    %157 = arith.maximumf %155, %156 : vector<32x128xf32>
    %c4_65 = arith.constant 4 : index
    %c0_66 = arith.constant 0 : index
    %c0_67 = arith.constant 0 : index
    %158 = vector.load %arg5[%c4_65, %c0_66, %c0_67] : memref<10x160x32xbf16, #tpu.memory_space<vmem>>, vector<1x160x32xbf16>
    %159 = vector.shape_cast %158 : vector<1x160x32xbf16> to vector<160x32xbf16>
    %160 = arith.truncf %157 : vector<32x128xf32> to vector<32x128xbf16>
    %cst_68 = arith.constant dense<0.000000e+00> : vector<160x128xf32>
    %161 = tpu.matmul %159, %160, %cst_68 {dimension_numbers = #tpu.dot_dimension_numbers<[1], [0], [0], [1], [0, 0, 1, 1], [], []>} : vector<160x32xbf16>, vector<32x128xbf16>, vector<160x128xf32> -> vector<160x128xf32>
    %162 = vector.extract_strided_slice %161 {offsets = [64, 0], sizes = [32, 128], strides = [1, 1]} : vector<160x128xf32> to vector<32x128xf32>
    %163 = vector.extract_strided_slice %161 {offsets = [0, 0], sizes = [32, 128], strides = [1, 1]} : vector<160x128xf32> to vector<32x128xf32>
    %c2_i32_69 = arith.constant 2 : i32
    %164 = tpu.dynamic_rotate %163 by %c2_i32_69 dim 1 : vector<32x128xf32>, i32 -> vector<32x128xf32>
    %165 = vector.broadcast %26 : vector<1x128xf32> to vector<32x128xf32>
    %166 = arith.mulf %164, %165 : vector<32x128xf32>
    %167 = arith.addf %162, %166 : vector<32x128xf32>
    %168 = vector.extract_strided_slice %161 {offsets = [32, 0], sizes = [32, 128], strides = [1, 1]} : vector<160x128xf32> to vector<32x128xf32>
    %c1_i32_70 = arith.constant 1 : i32
    %169 = tpu.dynamic_rotate %168 by %c1_i32_70 dim 1 : vector<32x128xf32>, i32 -> vector<32x128xf32>
    %170 = vector.broadcast %27 : vector<1x128xf32> to vector<32x128xf32>
    %171 = arith.mulf %169, %170 : vector<32x128xf32>
    %172 = arith.addf %167, %171 : vector<32x128xf32>
    %173 = vector.extract_strided_slice %161 {offsets = [96, 0], sizes = [32, 128], strides = [1, 1]} : vector<160x128xf32> to vector<32x128xf32>
    %c127_i32_71 = arith.constant 127 : i32
    %174 = tpu.dynamic_rotate %173 by %c127_i32_71 dim 1 : vector<32x128xf32>, i32 -> vector<32x128xf32>
    %175 = vector.broadcast %28 : vector<1x128xf32> to vector<32x128xf32>
    %176 = arith.mulf %174, %175 : vector<32x128xf32>
    %177 = arith.addf %172, %176 : vector<32x128xf32>
    %178 = vector.extract_strided_slice %161 {offsets = [128, 0], sizes = [32, 128], strides = [1, 1]} : vector<160x128xf32> to vector<32x128xf32>
    %c126_i32_72 = arith.constant 126 : i32
    %179 = tpu.dynamic_rotate %178 by %c126_i32_72 dim 1 : vector<32x128xf32>, i32 -> vector<32x128xf32>
    %180 = vector.broadcast %29 : vector<1x128xf32> to vector<32x128xf32>
    %181 = arith.mulf %179, %180 : vector<32x128xf32>
    %182 = arith.addf %177, %181 : vector<32x128xf32>
    %c4_73 = arith.constant 4 : index
    %c0_74 = arith.constant 0 : index
    %c0_75 = arith.constant 0 : index
    %183 = vector.load %arg6[%c4_73, %c0_74, %c0_75] : memref<10x32x1xf32, #tpu.memory_space<vmem>>, vector<1x32x1xf32>
    %184 = vector.shape_cast %183 : vector<1x32x1xf32> to vector<32x1xf32>
    %185 = vector.broadcast %184 : vector<32x1xf32> to vector<32x128xf32>
    %186 = arith.addf %182, %185 : vector<32x128xf32>
    %cst_76 = arith.constant 0.000000e+00 : f32
    %187 = vector.broadcast %cst_76 : f32 to vector<32x128xf32>
    %188 = arith.maximumf %186, %187 : vector<32x128xf32>
    %c5 = arith.constant 5 : index
    %c0_77 = arith.constant 0 : index
    %c0_78 = arith.constant 0 : index
    %189 = vector.load %arg5[%c5, %c0_77, %c0_78] : memref<10x160x32xbf16, #tpu.memory_space<vmem>>, vector<1x160x32xbf16>
    %190 = vector.shape_cast %189 : vector<1x160x32xbf16> to vector<160x32xbf16>
    %191 = arith.truncf %188 : vector<32x128xf32> to vector<32x128xbf16>
    %cst_79 = arith.constant dense<0.000000e+00> : vector<160x128xf32>
    %192 = tpu.matmul %190, %191, %cst_79 {dimension_numbers = #tpu.dot_dimension_numbers<[1], [0], [0], [1], [0, 0, 1, 1], [], []>} : vector<160x32xbf16>, vector<32x128xbf16>, vector<160x128xf32> -> vector<160x128xf32>
    %193 = vector.extract_strided_slice %192 {offsets = [64, 0], sizes = [32, 128], strides = [1, 1]} : vector<160x128xf32> to vector<32x128xf32>
    %194 = vector.extract_strided_slice %192 {offsets = [0, 0], sizes = [32, 128], strides = [1, 1]} : vector<160x128xf32> to vector<32x128xf32>
    %c2_i32_80 = arith.constant 2 : i32
    %195 = tpu.dynamic_rotate %194 by %c2_i32_80 dim 1 : vector<32x128xf32>, i32 -> vector<32x128xf32>
    %196 = vector.broadcast %26 : vector<1x128xf32> to vector<32x128xf32>
    %197 = arith.mulf %195, %196 : vector<32x128xf32>
    %198 = arith.addf %193, %197 : vector<32x128xf32>
    %199 = vector.extract_strided_slice %192 {offsets = [32, 0], sizes = [32, 128], strides = [1, 1]} : vector<160x128xf32> to vector<32x128xf32>
    %c1_i32_81 = arith.constant 1 : i32
    %200 = tpu.dynamic_rotate %199 by %c1_i32_81 dim 1 : vector<32x128xf32>, i32 -> vector<32x128xf32>
    %201 = vector.broadcast %27 : vector<1x128xf32> to vector<32x128xf32>
    %202 = arith.mulf %200, %201 : vector<32x128xf32>
    %203 = arith.addf %198, %202 : vector<32x128xf32>
    %204 = vector.extract_strided_slice %192 {offsets = [96, 0], sizes = [32, 128], strides = [1, 1]} : vector<160x128xf32> to vector<32x128xf32>
    %c127_i32_82 = arith.constant 127 : i32
    %205 = tpu.dynamic_rotate %204 by %c127_i32_82 dim 1 : vector<32x128xf32>, i32 -> vector<32x128xf32>
    %206 = vector.broadcast %28 : vector<1x128xf32> to vector<32x128xf32>
    %207 = arith.mulf %205, %206 : vector<32x128xf32>
    %208 = arith.addf %203, %207 : vector<32x128xf32>
    %209 = vector.extract_strided_slice %192 {offsets = [128, 0], sizes = [32, 128], strides = [1, 1]} : vector<160x128xf32> to vector<32x128xf32>
    %c126_i32_83 = arith.constant 126 : i32
    %210 = tpu.dynamic_rotate %209 by %c126_i32_83 dim 1 : vector<32x128xf32>, i32 -> vector<32x128xf32>
    %211 = vector.broadcast %29 : vector<1x128xf32> to vector<32x128xf32>
    %212 = arith.mulf %210, %211 : vector<32x128xf32>
    %213 = arith.addf %208, %212 : vector<32x128xf32>
    %c5_84 = arith.constant 5 : index
    %c0_85 = arith.constant 0 : index
    %c0_86 = arith.constant 0 : index
    %214 = vector.load %arg6[%c5_84, %c0_85, %c0_86] : memref<10x32x1xf32, #tpu.memory_space<vmem>>, vector<1x32x1xf32>
    %215 = vector.shape_cast %214 : vector<1x32x1xf32> to vector<32x1xf32>
    %216 = vector.broadcast %215 : vector<32x1xf32> to vector<32x128xf32>
    %217 = arith.addf %213, %216 : vector<32x128xf32>
    %218 = arith.addf %155, %217 : vector<32x128xf32>
    %cst_87 = arith.constant 0.000000e+00 : f32
    %219 = vector.broadcast %cst_87 : f32 to vector<32x128xf32>
    %220 = arith.maximumf %218, %219 : vector<32x128xf32>
    %c6 = arith.constant 6 : index
    %c0_88 = arith.constant 0 : index
    %c0_89 = arith.constant 0 : index
    %221 = vector.load %arg5[%c6, %c0_88, %c0_89] : memref<10x160x32xbf16, #tpu.memory_space<vmem>>, vector<1x160x32xbf16>
    %222 = vector.shape_cast %221 : vector<1x160x32xbf16> to vector<160x32xbf16>
    %223 = arith.truncf %220 : vector<32x128xf32> to vector<32x128xbf16>
    %cst_90 = arith.constant dense<0.000000e+00> : vector<160x128xf32>
    %224 = tpu.matmul %222, %223, %cst_90 {dimension_numbers = #tpu.dot_dimension_numbers<[1], [0], [0], [1], [0, 0, 1, 1], [], []>} : vector<160x32xbf16>, vector<32x128xbf16>, vector<160x128xf32> -> vector<160x128xf32>
    %225 = vector.extract_strided_slice %224 {offsets = [64, 0], sizes = [32, 128], strides = [1, 1]} : vector<160x128xf32> to vector<32x128xf32>
    %226 = vector.extract_strided_slice %224 {offsets = [0, 0], sizes = [32, 128], strides = [1, 1]} : vector<160x128xf32> to vector<32x128xf32>
    %c2_i32_91 = arith.constant 2 : i32
    %227 = tpu.dynamic_rotate %226 by %c2_i32_91 dim 1 : vector<32x128xf32>, i32 -> vector<32x128xf32>
    %228 = vector.broadcast %26 : vector<1x128xf32> to vector<32x128xf32>
    %229 = arith.mulf %227, %228 : vector<32x128xf32>
    %230 = arith.addf %225, %229 : vector<32x128xf32>
    %231 = vector.extract_strided_slice %224 {offsets = [32, 0], sizes = [32, 128], strides = [1, 1]} : vector<160x128xf32> to vector<32x128xf32>
    %c1_i32_92 = arith.constant 1 : i32
    %232 = tpu.dynamic_rotate %231 by %c1_i32_92 dim 1 : vector<32x128xf32>, i32 -> vector<32x128xf32>
    %233 = vector.broadcast %27 : vector<1x128xf32> to vector<32x128xf32>
    %234 = arith.mulf %232, %233 : vector<32x128xf32>
    %235 = arith.addf %230, %234 : vector<32x128xf32>
    %236 = vector.extract_strided_slice %224 {offsets = [96, 0], sizes = [32, 128], strides = [1, 1]} : vector<160x128xf32> to vector<32x128xf32>
    %c127_i32_93 = arith.constant 127 : i32
    %237 = tpu.dynamic_rotate %236 by %c127_i32_93 dim 1 : vector<32x128xf32>, i32 -> vector<32x128xf32>
    %238 = vector.broadcast %28 : vector<1x128xf32> to vector<32x128xf32>
    %239 = arith.mulf %237, %238 : vector<32x128xf32>
    %240 = arith.addf %235, %239 : vector<32x128xf32>
    %241 = vector.extract_strided_slice %224 {offsets = [128, 0], sizes = [32, 128], strides = [1, 1]} : vector<160x128xf32> to vector<32x128xf32>
    %c126_i32_94 = arith.constant 126 : i32
    %242 = tpu.dynamic_rotate %241 by %c126_i32_94 dim 1 : vector<32x128xf32>, i32 -> vector<32x128xf32>
    %243 = vector.broadcast %29 : vector<1x128xf32> to vector<32x128xf32>
    %244 = arith.mulf %242, %243 : vector<32x128xf32>
    %245 = arith.addf %240, %244 : vector<32x128xf32>
    %c6_95 = arith.constant 6 : index
    %c0_96 = arith.constant 0 : index
    %c0_97 = arith.constant 0 : index
    %246 = vector.load %arg6[%c6_95, %c0_96, %c0_97] : memref<10x32x1xf32, #tpu.memory_space<vmem>>, vector<1x32x1xf32>
    %247 = vector.shape_cast %246 : vector<1x32x1xf32> to vector<32x1xf32>
    %248 = vector.broadcast %247 : vector<32x1xf32> to vector<32x128xf32>
    %249 = arith.addf %245, %248 : vector<32x128xf32>
    %cst_98 = arith.constant 0.000000e+00 : f32
    %250 = vector.broadcast %cst_98 : f32 to vector<32x128xf32>
    %251 = arith.maximumf %249, %250 : vector<32x128xf32>
    %c7 = arith.constant 7 : index
    %c0_99 = arith.constant 0 : index
    %c0_100 = arith.constant 0 : index
    %252 = vector.load %arg5[%c7, %c0_99, %c0_100] : memref<10x160x32xbf16, #tpu.memory_space<vmem>>, vector<1x160x32xbf16>
    %253 = vector.shape_cast %252 : vector<1x160x32xbf16> to vector<160x32xbf16>
    %254 = arith.truncf %251 : vector<32x128xf32> to vector<32x128xbf16>
    %cst_101 = arith.constant dense<0.000000e+00> : vector<160x128xf32>
    %255 = tpu.matmul %253, %254, %cst_101 {dimension_numbers = #tpu.dot_dimension_numbers<[1], [0], [0], [1], [0, 0, 1, 1], [], []>} : vector<160x32xbf16>, vector<32x128xbf16>, vector<160x128xf32> -> vector<160x128xf32>
    %256 = vector.extract_strided_slice %255 {offsets = [64, 0], sizes = [32, 128], strides = [1, 1]} : vector<160x128xf32> to vector<32x128xf32>
    %257 = vector.extract_strided_slice %255 {offsets = [0, 0], sizes = [32, 128], strides = [1, 1]} : vector<160x128xf32> to vector<32x128xf32>
    %c2_i32_102 = arith.constant 2 : i32
    %258 = tpu.dynamic_rotate %257 by %c2_i32_102 dim 1 : vector<32x128xf32>, i32 -> vector<32x128xf32>
    %259 = vector.broadcast %26 : vector<1x128xf32> to vector<32x128xf32>
    %260 = arith.mulf %258, %259 : vector<32x128xf32>
    %261 = arith.addf %256, %260 : vector<32x128xf32>
    %262 = vector.extract_strided_slice %255 {offsets = [32, 0], sizes = [32, 128], strides = [1, 1]} : vector<160x128xf32> to vector<32x128xf32>
    %c1_i32_103 = arith.constant 1 : i32
    %263 = tpu.dynamic_rotate %262 by %c1_i32_103 dim 1 : vector<32x128xf32>, i32 -> vector<32x128xf32>
    %264 = vector.broadcast %27 : vector<1x128xf32> to vector<32x128xf32>
    %265 = arith.mulf %263, %264 : vector<32x128xf32>
    %266 = arith.addf %261, %265 : vector<32x128xf32>
    %267 = vector.extract_strided_slice %255 {offsets = [96, 0], sizes = [32, 128], strides = [1, 1]} : vector<160x128xf32> to vector<32x128xf32>
    %c127_i32_104 = arith.constant 127 : i32
    %268 = tpu.dynamic_rotate %267 by %c127_i32_104 dim 1 : vector<32x128xf32>, i32 -> vector<32x128xf32>
    %269 = vector.broadcast %28 : vector<1x128xf32> to vector<32x128xf32>
    %270 = arith.mulf %268, %269 : vector<32x128xf32>
    %271 = arith.addf %266, %270 : vector<32x128xf32>
    %272 = vector.extract_strided_slice %255 {offsets = [128, 0], sizes = [32, 128], strides = [1, 1]} : vector<160x128xf32> to vector<32x128xf32>
    %c126_i32_105 = arith.constant 126 : i32
    %273 = tpu.dynamic_rotate %272 by %c126_i32_105 dim 1 : vector<32x128xf32>, i32 -> vector<32x128xf32>
    %274 = vector.broadcast %29 : vector<1x128xf32> to vector<32x128xf32>
    %275 = arith.mulf %273, %274 : vector<32x128xf32>
    %276 = arith.addf %271, %275 : vector<32x128xf32>
    %c7_106 = arith.constant 7 : index
    %c0_107 = arith.constant 0 : index
    %c0_108 = arith.constant 0 : index
    %277 = vector.load %arg6[%c7_106, %c0_107, %c0_108] : memref<10x32x1xf32, #tpu.memory_space<vmem>>, vector<1x32x1xf32>
    %278 = vector.shape_cast %277 : vector<1x32x1xf32> to vector<32x1xf32>
    %279 = vector.broadcast %278 : vector<32x1xf32> to vector<32x128xf32>
    %280 = arith.addf %276, %279 : vector<32x128xf32>
    %281 = arith.addf %218, %280 : vector<32x128xf32>
    %cst_109 = arith.constant 0.000000e+00 : f32
    %282 = vector.broadcast %cst_109 : f32 to vector<32x128xf32>
    %283 = arith.maximumf %281, %282 : vector<32x128xf32>
    %c8 = arith.constant 8 : index
    %c0_110 = arith.constant 0 : index
    %c0_111 = arith.constant 0 : index
    %284 = vector.load %arg5[%c8, %c0_110, %c0_111] : memref<10x160x32xbf16, #tpu.memory_space<vmem>>, vector<1x160x32xbf16>
    %285 = vector.shape_cast %284 : vector<1x160x32xbf16> to vector<160x32xbf16>
    %286 = arith.truncf %283 : vector<32x128xf32> to vector<32x128xbf16>
    %cst_112 = arith.constant dense<0.000000e+00> : vector<160x128xf32>
    %287 = tpu.matmul %285, %286, %cst_112 {dimension_numbers = #tpu.dot_dimension_numbers<[1], [0], [0], [1], [0, 0, 1, 1], [], []>} : vector<160x32xbf16>, vector<32x128xbf16>, vector<160x128xf32> -> vector<160x128xf32>
    %288 = vector.extract_strided_slice %287 {offsets = [64, 0], sizes = [32, 128], strides = [1, 1]} : vector<160x128xf32> to vector<32x128xf32>
    %289 = vector.extract_strided_slice %287 {offsets = [0, 0], sizes = [32, 128], strides = [1, 1]} : vector<160x128xf32> to vector<32x128xf32>
    %c2_i32_113 = arith.constant 2 : i32
    %290 = tpu.dynamic_rotate %289 by %c2_i32_113 dim 1 : vector<32x128xf32>, i32 -> vector<32x128xf32>
    %291 = vector.broadcast %26 : vector<1x128xf32> to vector<32x128xf32>
    %292 = arith.mulf %290, %291 : vector<32x128xf32>
    %293 = arith.addf %288, %292 : vector<32x128xf32>
    %294 = vector.extract_strided_slice %287 {offsets = [32, 0], sizes = [32, 128], strides = [1, 1]} : vector<160x128xf32> to vector<32x128xf32>
    %c1_i32_114 = arith.constant 1 : i32
    %295 = tpu.dynamic_rotate %294 by %c1_i32_114 dim 1 : vector<32x128xf32>, i32 -> vector<32x128xf32>
    %296 = vector.broadcast %27 : vector<1x128xf32> to vector<32x128xf32>
    %297 = arith.mulf %295, %296 : vector<32x128xf32>
    %298 = arith.addf %293, %297 : vector<32x128xf32>
    %299 = vector.extract_strided_slice %287 {offsets = [96, 0], sizes = [32, 128], strides = [1, 1]} : vector<160x128xf32> to vector<32x128xf32>
    %c127_i32_115 = arith.constant 127 : i32
    %300 = tpu.dynamic_rotate %299 by %c127_i32_115 dim 1 : vector<32x128xf32>, i32 -> vector<32x128xf32>
    %301 = vector.broadcast %28 : vector<1x128xf32> to vector<32x128xf32>
    %302 = arith.mulf %300, %301 : vector<32x128xf32>
    %303 = arith.addf %298, %302 : vector<32x128xf32>
    %304 = vector.extract_strided_slice %287 {offsets = [128, 0], sizes = [32, 128], strides = [1, 1]} : vector<160x128xf32> to vector<32x128xf32>
    %c126_i32_116 = arith.constant 126 : i32
    %305 = tpu.dynamic_rotate %304 by %c126_i32_116 dim 1 : vector<32x128xf32>, i32 -> vector<32x128xf32>
    %306 = vector.broadcast %29 : vector<1x128xf32> to vector<32x128xf32>
    %307 = arith.mulf %305, %306 : vector<32x128xf32>
    %308 = arith.addf %303, %307 : vector<32x128xf32>
    %c8_117 = arith.constant 8 : index
    %c0_118 = arith.constant 0 : index
    %c0_119 = arith.constant 0 : index
    %309 = vector.load %arg6[%c8_117, %c0_118, %c0_119] : memref<10x32x1xf32, #tpu.memory_space<vmem>>, vector<1x32x1xf32>
    %310 = vector.shape_cast %309 : vector<1x32x1xf32> to vector<32x1xf32>
    %311 = vector.broadcast %310 : vector<32x1xf32> to vector<32x128xf32>
    %312 = arith.addf %308, %311 : vector<32x128xf32>
    %cst_120 = arith.constant 0.000000e+00 : f32
    %313 = vector.broadcast %cst_120 : f32 to vector<32x128xf32>
    %314 = arith.maximumf %312, %313 : vector<32x128xf32>
    %c9 = arith.constant 9 : index
    %c0_121 = arith.constant 0 : index
    %c0_122 = arith.constant 0 : index
    %315 = vector.load %arg5[%c9, %c0_121, %c0_122] : memref<10x160x32xbf16, #tpu.memory_space<vmem>>, vector<1x160x32xbf16>
    %316 = vector.shape_cast %315 : vector<1x160x32xbf16> to vector<160x32xbf16>
    %317 = arith.truncf %314 : vector<32x128xf32> to vector<32x128xbf16>
    %cst_123 = arith.constant dense<0.000000e+00> : vector<160x128xf32>
    %318 = tpu.matmul %316, %317, %cst_123 {dimension_numbers = #tpu.dot_dimension_numbers<[1], [0], [0], [1], [0, 0, 1, 1], [], []>} : vector<160x32xbf16>, vector<32x128xbf16>, vector<160x128xf32> -> vector<160x128xf32>
    %319 = vector.extract_strided_slice %318 {offsets = [64, 0], sizes = [32, 128], strides = [1, 1]} : vector<160x128xf32> to vector<32x128xf32>
    %320 = vector.extract_strided_slice %318 {offsets = [0, 0], sizes = [32, 128], strides = [1, 1]} : vector<160x128xf32> to vector<32x128xf32>
    %c2_i32_124 = arith.constant 2 : i32
    %321 = tpu.dynamic_rotate %320 by %c2_i32_124 dim 1 : vector<32x128xf32>, i32 -> vector<32x128xf32>
    %322 = vector.broadcast %26 : vector<1x128xf32> to vector<32x128xf32>
    %323 = arith.mulf %321, %322 : vector<32x128xf32>
    %324 = arith.addf %319, %323 : vector<32x128xf32>
    %325 = vector.extract_strided_slice %318 {offsets = [32, 0], sizes = [32, 128], strides = [1, 1]} : vector<160x128xf32> to vector<32x128xf32>
    %c1_i32_125 = arith.constant 1 : i32
    %326 = tpu.dynamic_rotate %325 by %c1_i32_125 dim 1 : vector<32x128xf32>, i32 -> vector<32x128xf32>
    %327 = vector.broadcast %27 : vector<1x128xf32> to vector<32x128xf32>
    %328 = arith.mulf %326, %327 : vector<32x128xf32>
    %329 = arith.addf %324, %328 : vector<32x128xf32>
    %330 = vector.extract_strided_slice %318 {offsets = [96, 0], sizes = [32, 128], strides = [1, 1]} : vector<160x128xf32> to vector<32x128xf32>
    %c127_i32_126 = arith.constant 127 : i32
    %331 = tpu.dynamic_rotate %330 by %c127_i32_126 dim 1 : vector<32x128xf32>, i32 -> vector<32x128xf32>
    %332 = vector.broadcast %28 : vector<1x128xf32> to vector<32x128xf32>
    %333 = arith.mulf %331, %332 : vector<32x128xf32>
    %334 = arith.addf %329, %333 : vector<32x128xf32>
    %335 = vector.extract_strided_slice %318 {offsets = [128, 0], sizes = [32, 128], strides = [1, 1]} : vector<160x128xf32> to vector<32x128xf32>
    %c126_i32_127 = arith.constant 126 : i32
    %336 = tpu.dynamic_rotate %335 by %c126_i32_127 dim 1 : vector<32x128xf32>, i32 -> vector<32x128xf32>
    %337 = vector.broadcast %29 : vector<1x128xf32> to vector<32x128xf32>
    %338 = arith.mulf %336, %337 : vector<32x128xf32>
    %339 = arith.addf %334, %338 : vector<32x128xf32>
    %c9_128 = arith.constant 9 : index
    %c0_129 = arith.constant 0 : index
    %c0_130 = arith.constant 0 : index
    %340 = vector.load %arg6[%c9_128, %c0_129, %c0_130] : memref<10x32x1xf32, #tpu.memory_space<vmem>>, vector<1x32x1xf32>
    %341 = vector.shape_cast %340 : vector<1x32x1xf32> to vector<32x1xf32>
    %342 = vector.broadcast %341 : vector<32x1xf32> to vector<32x128xf32>
    %343 = arith.addf %339, %342 : vector<32x128xf32>
    %344 = arith.addf %281, %343 : vector<32x128xf32>
    %c0_131 = arith.constant 0 : index
    %c0_132 = arith.constant 0 : index
    %345 = vector.load %arg7[%c0_131, %c0_132] : memref<32x128xf32, #tpu.memory_space<vmem>>, vector<32x128xf32>
    %346 = arith.mulf %344, %345 : vector<32x128xf32>
    %c0_133 = arith.constant 0 : index
    %c0_134 = arith.constant 0 : index
    %347 = vector.load %arg8[%c0_133, %c0_134] : memref<128x128xf32, #tpu.memory_space<vmem>>, vector<128x128xf32>
    %cst_135 = arith.constant dense<0.000000e+00> : vector<32x128xf32>
    %348 = tpu.matmul %346, %347, %cst_135 {dimension_numbers = #tpu.dot_dimension_numbers<[1], [0], [0], [1], [0, 0, 1, 1], [], []>} : vector<32x128xf32>, vector<128x128xf32>, vector<32x128xf32> -> vector<32x128xf32>
    %cst_136 = arith.constant dense<0.000000e+00> : vector<128xf32>
    %349 = vector.multi_reduction <add>, %348, %cst_136 [0] : vector<32x128xf32> to vector<128xf32>
    %350 = vector.shape_cast %349 : vector<128xf32> to vector<1x128xf32>
    %c0_137 = arith.constant 0 : index
    %c0_138 = arith.constant 0 : index
    %351 = memref.load %arg9[%c0_137, %c0_138] : memref<1x1xf32, #tpu.memory_space<smem>>
    %352 = vector.broadcast %351 : f32 to vector<1x128xf32>
    %353 = arith.addf %350, %352 : vector<1x128xf32>
    %c0_139 = arith.constant 0 : index
    %c0_140 = arith.constant 0 : index
    %354 = vector.load %arg10[%c0_139, %c0_140] : memref<1x128xf32, #tpu.memory_space<vmem>>, vector<1x128xf32>
    tpu.vector_store %arg10[%c0_139, %c0_140], %353 {strides = array<i32>} : memref<1x128xf32, #tpu.memory_space<vmem>>, vector<1x128xf32>,
    return
  }
  func.func @transform_0(%arg0: i32) -> (i32, i32) {
    %c0_i32 = arith.constant 0 : i32
    %c0_i32_0 = arith.constant 0 : i32
    %c0_i32_1 = arith.constant 0 : i32
    return %c0_i32, %c0_i32_0 : i32, i32
  }
  func.func @transform_1(%arg0: i32) -> (i32, i32) {
    %c0_i32 = arith.constant 0 : i32
    %c0_i32_0 = arith.constant 0 : i32
    %c0_i32_1 = arith.constant 0 : i32
    return %c0_i32, %c0_i32_0 : i32, i32
  }
  func.func @transform_2(%arg0: i32) -> (i32, i32) {
    %c0_i32 = arith.constant 0 : i32
    %c0_i32_0 = arith.constant 0 : i32
    %c0_i32_1 = arith.constant 0 : i32
    return %c0_i32, %c0_i32_0 : i32, i32
  }
  func.func @transform_3(%arg0: i32) -> (i32, i32) {
    %c0_i32 = arith.constant 0 : i32
    %c0_i32_0 = arith.constant 0 : i32
    %c0_i32_1 = arith.constant 0 : i32
    return %c0_i32, %c0_i32_0 : i32, i32
  }
  func.func @transform_4(%arg0: i32) -> (i32, i32, i32) {
    %c0_i32 = arith.constant 0 : i32
    %c0_i32_0 = arith.constant 0 : i32
    %c0_i32_1 = arith.constant 0 : i32
    %c0_i32_2 = arith.constant 0 : i32
    return %c0_i32, %c0_i32_0, %c0_i32_1 : i32, i32, i32
  }
  func.func @transform_5(%arg0: i32) -> (i32, i32, i32) {
    %c0_i32 = arith.constant 0 : i32
    %c0_i32_0 = arith.constant 0 : i32
    %c0_i32_1 = arith.constant 0 : i32
    %c0_i32_2 = arith.constant 0 : i32
    return %c0_i32, %c0_i32_0, %c0_i32_1 : i32, i32, i32
  }
  func.func @transform_6(%arg0: i32) -> (i32, i32) {
    %c0_i32 = arith.constant 0 : i32
    %c0_i32_0 = arith.constant 0 : i32
    %c0_i32_1 = arith.constant 0 : i32
    return %c0_i32, %c0_i32_0 : i32, i32
  }
  func.func @transform_7(%arg0: i32) -> (i32, i32) {
    %c0_i32 = arith.constant 0 : i32
    %c0_i32_0 = arith.constant 0 : i32
    %c0_i32_1 = arith.constant 0 : i32
    return %c0_i32, %c0_i32_0 : i32, i32
  }
  func.func @transform_8(%arg0: i32) -> (i32, i32) {
    %c0_i32 = arith.constant 0 : i32
    %c0_i32_0 = arith.constant 0 : i32
    %c0_i32_1 = arith.constant 0 : i32
    return %c0_i32, %c0_i32_0 : i32, i32
  }
  func.func @transform_9(%arg0: i32) -> (i32, i32) {
    %c0_i32 = arith.constant 0 : i32
    %c0_i32_0 = arith.constant 0 : i32
    %c0_i32_1 = arith.constant 0 : i32
    return %c0_i32, %c0_i32_0 : i32, i32
  }
}

</mosaic_0001>

<llo_original>
// kernel: _lambda_.1
$region0: #{_lambda_.1}
  #allocation0 [shape = 'u32[]', space=smem, size = 0x4, offset = 0x4, fixed_abs, tag = 'smem constant byte address 0x4 - core index']
  #allocation1 [shape = 'u32[144,128]{1,0:T(1,128)}', space=vmem, size = 0x12000, scoped, tag = 'internal scratch']
  #allocation2 [shape = 'f32[1,1]{1,0:T(1,128)S(6)}', space=smem, size = 0x200, scoped, tag = 'scoped memory for _lambda_.1']
  %s0 = inlined_call_operand.vmem [shape: f32[8,128], index: 0, kind: input, shape index: {}]
  %s1 = inlined_call_operand.vmem [shape: f32[4,128], index: 1, kind: input, shape index: {}]
  %s2 = inlined_call_operand.hbm [shape: f32[32,4], index: 2, kind: input, shape index: {}]
  %s3 = inlined_call_operand.hbm [shape: f32[32,1], index: 3, kind: input, shape index: {}]
  %s4 = inlined_call_operand.hbm [shape: bf16[10,160,32], index: 4, kind: input, shape index: {}]
  %s5 = inlined_call_operand.hbm [shape: f32[10,32,1], index: 5, kind: input, shape index: {}]
  %s6 = inlined_call_operand.vmem [shape: f32[32,128], index: 6, kind: input, shape index: {}]
  %s7 = inlined_call_operand.hbm [shape: f32[128,128], index: 7, kind: input, shape index: {}]
  %s8 = inlined_call_operand.<no memory space> [shape: f32[1,1], index: 8, kind: input, shape index: {}]
  %s9 = inlined_call_operand.vmem [shape: f32[1,128], index: 9, kind: output, shape index: {}]
  %s10 = sld [smem:[#allocation0]]
  $region66: #{_lambda_.1} parent=0
    _
  %s12 = ssub.s32 1, %s10
  %s13 = scalar_select 0, %s12, %s10
  %14 = sst [smem:[#allocation2]] %s8
  $region1: #{_lambda_.1} parent=0
    #allocation3 [shape = 'u8[16384]{0}', space=vmem, size = 0x4000, scoped, tag = 'input window, operand 2, single buffered']
    #allocation4 [shape = 's32[1]{0}', space=sflag, size = 0x4, scoped, tag = 'scoped memory for _lambda_.1']
    #allocation5 [shape = 'u8[16384]{0}', space=vmem, size = 0x4000, scoped, tag = 'input window, operand 3, single buffered']
    #allocation6 [shape = 's32[1]{0}', space=sflag, size = 0x4, scoped, tag = 'scoped memory for _lambda_.1']
    #allocation7 [shape = 'u8[409600]{0}', space=vmem, size = 0x64000, scoped, tag = 'input window, operand 4, single buffered']
    #allocation8 [shape = 'u8[163840]{0}', space=vmem, size = 0x28000, scoped, tag = 'input window, operand 5, single buffered']
    #allocation9 [shape = 's32[1]{0}', space=sflag, size = 0x4, scoped, tag = 'scoped memory for _lambda_.1']
    #allocation10 [shape = 'u8[65536]{0}', space=vmem, size = 0x10000, scoped, tag = 'input window, operand 7, single buffered']
    %15 = vsyncpa [#allocation4], 0
    %16 = vsyncpa [#allocation6], 0
    %17 = vsyncpa [#allocation9], 0
    // Predicated region
    $region2: #{_lambda_.1} parent=1 // pred_check
      _
    $region3: #{_lambda_.1} parent=1 // pred_check_branch
      %19 = sbr.rel (0) target = $region5
    $region4: #{_lambda_.1} parent=1 // pred_region
      _
    $region5: #{_lambda_.1} parent=1 // pred_fallthru
      _
    // Predicated region
    $region6: #{_lambda_.1} parent=1 // pred_check
      _
    $region7: #{_lambda_.1} parent=1 // pred_check_branch
      %21 = sbr.rel (0) target = $region9
    $region8: #{_lambda_.1} parent=1 // pred_region
      _
    $region9: #{_lambda_.1} parent=1 // pred_fallthru
      _
    // Predicated region
    $region10: #{_lambda_.1} parent=1 // pred_check
      _
    $region11: #{_lambda_.1} parent=1 // pred_check_branch
      %23 = sbr.rel (0) target = $region13
    $region12: #{_lambda_.1} parent=1 // pred_region
      %s25 = ssub.s32 512, 512
      %26 = vsyncadd [#allocation4], %s25
      %s27 = sshll.u32 [#allocation3], 4
      %s28 = int_to_ptr.vmem [resolvable:$true] %s27
      %33 = dma.hbm_to_vmem [thread:$0]  %s2, 512, %s28, [#allocation4], 128, 128, 8
    $region13: #{_lambda_.1} parent=1 // pred_fallthru
      _
    // Predicated region
    $region14: #{_lambda_.1} parent=1 // pred_check
      _
    $region15: #{_lambda_.1} parent=1 // pred_check_branch
      %35 = sbr.rel (0) target = $region17
    $region16: #{_lambda_.1} parent=1 // pred_region
      %s37 = ssub.s32 512, 512
      %38 = vsyncadd [#allocation6], %s37
      %s39 = sshll.u32 [#allocation5], 4
      %s40 = int_to_ptr.vmem [resolvable:$true] %s39
      %45 = dma.hbm_to_vmem [thread:$0]  %s3, 512, %s40, [#allocation6], 128, 128, 8
    $region17: #{_lambda_.1} parent=1 // pred_fallthru
      _
    // Predicated region
    $region18: #{_lambda_.1} parent=1 // pred_check
      _
    $region19: #{_lambda_.1} parent=1 // pred_check_branch
      %47 = sbr.rel (0) target = $region21
    $region20: #{_lambda_.1} parent=1 // pred_region
      %s49 = ssub.s32 12800, 12800
      %50 = vsyncadd [#allocation6], %s49
      %s51 = sshll.u32 [#allocation7], 4
      %s52 = int_to_ptr.vmem [resolvable:$true] %s51
      %57 = dma.hbm_to_vmem [thread:$0]  %s4, 12800, %s52, [#allocation6], 64, 64, 4
    $region21: #{_lambda_.1} parent=1 // pred_fallthru
      _
    // Predicated region
    $region22: #{_lambda_.1} parent=1 // pred_check
      _
    $region23: #{_lambda_.1} parent=1 // pred_check_branch
      %59 = sbr.rel (0) target = $region25
    $region24: #{_lambda_.1} parent=1 // pred_region
      %s61 = ssub.s32 5120, 5120
      %62 = vsyncadd [#allocation9], %s61
      %s63 = sshll.u32 [#allocation8], 4
      %s64 = int_to_ptr.vmem [resolvable:$true] %s63
      %69 = dma.hbm_to_vmem [thread:$0]  %s5, 5120, %s64, [#allocation9], 128, 128, 8
    $region25: #{_lambda_.1} parent=1 // pred_fallthru
      _
    // Predicated region
    $region26: #{_lambda_.1} parent=1 // pred_check
      _
    $region27: #{_lambda_.1} parent=1 // pred_check_branch
      %71 = sbr.rel (0) target = $region29
    $region28: #{_lambda_.1} parent=1 // pred_region
      _
    $region29: #{_lambda_.1} parent=1 // pred_fallthru
      _
    // Predicated region
    $region30: #{_lambda_.1} parent=1 // pred_check
      _
    $region31: #{_lambda_.1} parent=1 // pred_check_branch
      %73 = sbr.rel (0) target = $region33
    $region32: #{_lambda_.1} parent=1 // pred_region
      %s75 = ssub.s32 2048, 2048
      %76 = vsyncadd [#allocation9], %s75
      %s77 = sshll.u32 [#allocation10], 4
      %s78 = int_to_ptr.vmem [resolvable:$true] %s77
      %83 = dma.hbm_to_vmem [thread:$0]  %s7, 2048, %s78, [#allocation9], 128, 128, 8
    $region33: #{_lambda_.1} parent=1 // pred_fallthru
      _
    // Predicated region
    $region34: #{_lambda_.1} parent=1 // pred_check
      _
    $region35: #{_lambda_.1} parent=1 // pred_check_branch
      %85 = sbr.rel (0) target = $region37
    $region36: #{_lambda_.1} parent=1 // pred_region
      _
    $region37: #{_lambda_.1} parent=1 // pred_fallthru
      _
    // Predicated region
    $region38: #{_lambda_.1} parent=1 // pred_check
      _
    $region39: #{_lambda_.1} parent=1 // pred_check_branch
      %87 = sbr.rel (0) target = $region41
    $region40: #{_lambda_.1} parent=1 // pred_region
      %88 = dma.done [#allocation4], 512
    $region41: #{_lambda_.1} parent=1 // pred_fallthru
      _
    // Predicated region
    $region42: #{_lambda_.1} parent=1 // pred_check
      _
    $region43: #{_lambda_.1} parent=1 // pred_check_branch
      %90 = sbr.rel (0) target = $region45
    $region44: #{_lambda_.1} parent=1 // pred_region
      %91 = dma.done [#allocation6], 512
    $region45: #{_lambda_.1} parent=1 // pred_fallthru
      _
    // Predicated region
    $region46: #{_lambda_.1} parent=1 // pred_check
      _
    $region47: #{_lambda_.1} parent=1 // pred_check_branch
      %93 = sbr.rel (0) target = $region49
    $region48: #{_lambda_.1} parent=1 // pred_region
      %94 = dma.done [#allocation6], 12800
    $region49: #{_lambda_.1} parent=1 // pred_fallthru
      _
    // Predicated region
    $region50: #{_lambda_.1} parent=1 // pred_check
      _
    $region51: #{_lambda_.1} parent=1 // pred_check_branch
      %96 = sbr.rel (0) target = $region53
    $region52: #{_lambda_.1} parent=1 // pred_region
      %97 = dma.done [#allocation9], 5120
    $region53: #{_lambda_.1} parent=1 // pred_fallthru
      _
    // Predicated region
    $region54: #{_lambda_.1} parent=1 // pred_check
      _
    $region55: #{_lambda_.1} parent=1 // pred_check_branch
      %99 = sbr.rel (0) target = $region57
    $region56: #{_lambda_.1} parent=1 // pred_region
      %100 = dma.done [#allocation9], 2048
    $region57: #{_lambda_.1} parent=1 // pred_fallthru
      _
    %v102 = vld [vmem:[#allocation3] sm:$0xff]
    %v103 = vld [vmem:[#allocation3 + $0x8] sm:$0xff]
    %v104 = vld [vmem:[#allocation3 + $0x10] sm:$0xff]
    %v105 = vld [vmem:[#allocation3 + $0x18] sm:$0xff]
    %v106 = vld [vmem:[%s1] sm:$0x1]
    %108 = vset.pattern.permute.xlu0 0
    %109 = vperm.xlu0 %108, %v102
    %v110 = vpop.permute.xlu0 %109
    %113 = vset.pattern.permute.xlu0 0
    %114 = vperm.xlu0 %113, %v103
    %v115 = vpop.permute.xlu0 %114
    %118 = vset.pattern.permute.xlu0 0
    %119 = vperm.xlu0 %118, %v104
    %v120 = vpop.permute.xlu0 %119
    %123 = vset.pattern.permute.xlu0 0
    %124 = vperm.xlu0 %123, %v105
    %v125 = vpop.permute.xlu0 %124
    %v127 = vlaneseq
    %v128 = vshrl.u32 %v127, 7
    %v129 = vsub.s32 0, %v128
    %v130 = vrot.slane %v106, %v129
    %v131 = vmul.f32 %v110, %v130
    %v132 = vmul.f32 %v115, %v130
    %v133 = vmul.f32 %v120, %v130
    %v134 = vmul.f32 %v125, %v130
    %v135 = vld [vmem:[%s1 + $0x1] sm:$0x1]
    %136 = vset.pattern.permute.xlu0 1
    %137 = vperm.xlu0 %136, %v102
    %v138 = vpop.permute.xlu0 %137
    %140 = vset.pattern.permute.xlu0 1
    %141 = vperm.xlu0 %140, %v103
    %v142 = vpop.permute.xlu0 %141
    %144 = vset.pattern.permute.xlu0 1
    %145 = vperm.xlu0 %144, %v104
    %v146 = vpop.permute.xlu0 %145
    %148 = vset.pattern.permute.xlu0 1
    %149 = vperm.xlu0 %148, %v105
    %v150 = vpop.permute.xlu0 %149
    %v152 = vlaneseq
    %v153 = vshrl.u32 %v152, 7
    %v154 = vsub.s32 0, %v153
    %v155 = vrot.slane %v135, %v154
    %v156 = vmul.f32 %v138, %v155
    %v157 = vmul.f32 %v142, %v155
    %v158 = vmul.f32 %v146, %v155
    %v159 = vmul.f32 %v150, %v155
    %v160 = vadd.f32 %v131, %v156
    %v161 = vadd.f32 %v132, %v157
    %v162 = vadd.f32 %v133, %v158
    %v163 = vadd.f32 %v134, %v159
    %v164 = vld [vmem:[%s1 + $0x2] sm:$0x1]
    %165 = vset.pattern.permute.xlu0 2
    %166 = vperm.xlu0 %165, %v102
    %v167 = vpop.permute.xlu0 %166
    %169 = vset.pattern.permute.xlu0 2
    %170 = vperm.xlu0 %169, %v103
    %v171 = vpop.permute.xlu0 %170
    %173 = vset.pattern.permute.xlu0 2
    %174 = vperm.xlu0 %173, %v104
    %v175 = vpop.permute.xlu0 %174
    %177 = vset.pattern.permute.xlu0 2
    %178 = vperm.xlu0 %177, %v105
    %v179 = vpop.permute.xlu0 %178
    %v181 = vlaneseq
    %v182 = vshrl.u32 %v181, 7
    %v183 = vsub.s32 0, %v182
    %v184 = vrot.slane %v164, %v183
    %v185 = vmul.f32 %v167, %v184
    %v186 = vmul.f32 %v171, %v184
    %v187 = vmul.f32 %v175, %v184
    %v188 = vmul.f32 %v179, %v184
    %v189 = vadd.f32 %v160, %v185
    %v190 = vadd.f32 %v161, %v186
    %v191 = vadd.f32 %v162, %v187
    %v192 = vadd.f32 %v163, %v188
    %v193 = vld [vmem:[%s1 + $0x3] sm:$0x1]
    %194 = vset.pattern.permute.xlu0 3
    %195 = vperm.xlu0 %194, %v102
    %v196 = vpop.permute.xlu0 %195
    %198 = vset.pattern.permute.xlu0 3
    %199 = vperm.xlu0 %198, %v103
    %v200 = vpop.permute.xlu0 %199
    %202 = vset.pattern.permute.xlu0 3
    %203 = vperm.xlu0 %202, %v104
    %v204 = vpop.permute.xlu0 %203
    %206 = vset.pattern.permute.xlu0 3
    %207 = vperm.xlu0 %206, %v105
    %v208 = vpop.permute.xlu0 %207
    %v210 = vlaneseq
    %v211 = vshrl.u32 %v210, 7
    %v212 = vsub.s32 0, %v211
    %v213 = vrot.slane %v193, %v212
    %v214 = vmul.f32 %v196, %v213
    %v215 = vmul.f32 %v200, %v213
    %v216 = vmul.f32 %v204, %v213
    %v217 = vmul.f32 %v208, %v213
    %v218 = vadd.f32 %v189, %v214
    %v219 = vadd.f32 %v190, %v215
    %v220 = vadd.f32 %v191, %v216
    %v221 = vadd.f32 %v192, %v217
    %v222 = vld [vmem:[#allocation5] sm:$0xff]
    %v223 = vld [vmem:[#allocation5 + $0x8] sm:$0xff]
    %v224 = vld [vmem:[#allocation5 + $0x10] sm:$0xff]
    %v225 = vld [vmem:[#allocation5 + $0x18] sm:$0xff]
    %227 = vset.pattern.permute.xlu0 0
    %228 = vperm.xlu0 %227, %v222
    %v229 = vpop.permute.xlu0 %228
    %232 = vset.pattern.permute.xlu0 0
    %233 = vperm.xlu0 %232, %v223
    %v234 = vpop.permute.xlu0 %233
    %237 = vset.pattern.permute.xlu0 0
    %238 = vperm.xlu0 %237, %v224
    %v239 = vpop.permute.xlu0 %238
    %242 = vset.pattern.permute.xlu0 0
    %243 = vperm.xlu0 %242, %v225
    %v244 = vpop.permute.xlu0 %243
    %v246 = vadd.f32 %v218, %v229
    %v247 = vadd.f32 %v219, %v234
    %v248 = vadd.f32 %v220, %v239
    %v249 = vadd.f32 %v221, %v244
    %v250 = vld [vmem:[%s0] sm:$0x1]
    %v251 = vld [vmem:[%s0 + $0x1] sm:$0x1]
    %v252 = vld [vmem:[%s0 + $0x3] sm:$0x1]
    %v253 = vld [vmem:[%s0 + $0x4] sm:$0x1]
    %v254 = vmax.f32 %v246, 0.0
    %v255 = vmax.f32 %v247, 0.0
    %v256 = vmax.f32 %v248, 0.0
    %v257 = vmax.f32 %v249, 0.0
    %v258 = vld [vmem:[#allocation7] sm:$0xf]
    %v259 = vld [vmem:[#allocation7 + $0x4] sm:$0xf]
    %v260 = vld [vmem:[#allocation7 + $0x8] sm:$0xf]
    %v261 = vld [vmem:[#allocation7 + $0xc] sm:$0xf]
    %v262 = vld [vmem:[#allocation7 + $0x10] sm:$0xf]
    %v263 = vld [vmem:[#allocation7 + $0x14] sm:$0xf]
    %v264 = vld [vmem:[#allocation7 + $0x18] sm:$0xf]
    %v265 = vld [vmem:[#allocation7 + $0x1c] sm:$0xf]
    %v266 = vld [vmem:[#allocation7 + $0x20] sm:$0xf]
    %v267 = vld [vmem:[#allocation7 + $0x24] sm:$0xf]
    %v268 = vld [vmem:[#allocation7 + $0x28] sm:$0xf]
    %v269 = vld [vmem:[#allocation7 + $0x2c] sm:$0xf]
    %v270 = vld [vmem:[#allocation7 + $0x30] sm:$0xf]
    %v271 = vld [vmem:[#allocation7 + $0x34] sm:$0xf]
    %v272 = vld [vmem:[#allocation7 + $0x38] sm:$0xf]
    %v273 = vld [vmem:[#allocation7 + $0x3c] sm:$0xf]
    %v274 = vld [vmem:[#allocation7 + $0x40] sm:$0xf]
    %v275 = vld [vmem:[#allocation7 + $0x44] sm:$0xf]
    %v276 = vld [vmem:[#allocation7 + $0x48] sm:$0xf]
    %v277 = vld [vmem:[#allocation7 + $0x4c] sm:$0xf]
    %v278 = vpack.c.bf16 %v255, %v254
    %v279 = vpack.c.bf16 %v257, %v256
    %v300 = vunpack.c.l.b16 %v258
    %v301 = vunpack.c.l.b16 %v259
    %v302 = vunpack.c.l.b16 %v260
    %v303 = vunpack.c.l.b16 %v261
    %v304 = vunpack.c.l.b16 %v262
    %v305 = vunpack.c.l.b16 %v263
    %v306 = vunpack.c.l.b16 %v264
    %v307 = vunpack.c.l.b16 %v265
    %v308 = vunpack.c.l.b16 %v266
    %v309 = vunpack.c.l.b16 %v267
    %v310 = vunpack.c.l.b16 %v268
    %v311 = vunpack.c.l.b16 %v269
    %v312 = vunpack.c.l.b16 %v270
    %v313 = vunpack.c.l.b16 %v271
    %v314 = vunpack.c.l.b16 %v272
    %v315 = vunpack.c.l.b16 %v273
    %v316 = vunpack.c.l.b16 %v274
    %v317 = vunpack.c.l.b16 %v275
    %v318 = vunpack.c.l.b16 %v276
    %v319 = vunpack.c.l.b16 %v277
    %v320 = vpack.c.b16 %v301, %v300
    %v321 = vpack.c.b16 %v303, %v302
    %v322 = vpack.c.b16 %v305, %v304
    %v323 = vpack.c.b16 %v307, %v306
    %v324 = vpack.c.b16 %v309, %v308
    %v325 = vpack.c.b16 %v311, %v310
    %v326 = vpack.c.b16 %v313, %v312
    %v327 = vpack.c.b16 %v315, %v314
    %v328 = vpack.c.b16 %v317, %v316
    %v329 = vpack.c.b16 %v319, %v318
    %vm330 = vcmask 261120
    %v332 = vsel %vm330, %v320, 0
    %v335 = vsel %vm330, %v321, 0
    %v338 = vsel %vm330, %v322, 0
    %v341 = vsel %vm330, %v323, 0
    %v344 = vsel %vm330, %v324, 0
    %v347 = vsel %vm330, %v325, 0
    %v350 = vsel %vm330, %v326, 0
    %v353 = vsel %vm330, %v327, 0
    %v356 = vsel %vm330, %v328, 0
    %v359 = vsel %vm330, %v329, 0
    %361 = vmatprep.subr.bf16.mxu0 0
    %362 = vmatpush1.bf16.msra.mxu0 %v278
    %363 = vmatprep.subr.bf16.mxu0 0
    %364 = vmatpush1.bf16.msra.mxu0 %v279
    %365 = vmatprep.subr.bf16.mxu0 0
    %366 = vmatpush1.bf16.msra.mxu0 0
    %367 = vmatprep.subr.bf16.mxu0 0
    %368 = vmatpush1.bf16.msra.mxu0 0
    %369 = vmatprep.subr.bf16.mxu0 0
    %370 = vmatpush1.bf16.msra.mxu0 0
    %371 = vmatprep.subr.bf16.mxu0 0
    %372 = vmatpush1.bf16.msra.mxu0 0
    %373 = vmatprep.subr.bf16.mxu0 0
    %374 = vmatpush1.bf16.msra.mxu0 0
    %375 = vmatprep.subr.bf16.mxu0 0
    %376 = vmatpush1.bf16.msra.mxu0 0
    %377 = vmatprep.subr.bf16.mxu0 0
    %378 = vmatpush1.bf16.msra.mxu0 0
    %379 = vmatprep.subr.bf16.mxu0 0
    %380 = vmatpush1.bf16.msra.mxu0 0
    %381 = vmatprep.subr.bf16.mxu0 0
    %382 = vmatpush1.bf16.msra.mxu0 0
    %383 = vmatprep.subr.bf16.mxu0 0
    %384 = vmatpush1.bf16.msra.mxu0 0
    %385 = vmatprep.subr.bf16.mxu0 0
    %386 = vmatpush1.bf16.msra.mxu0 0
    %387 = vmatprep.subr.bf16.mxu0 0
    %388 = vmatpush1.bf16.msra.mxu0 0
    %389 = vmatprep.subr.bf16.mxu0 0
    %390 = vmatpush1.bf16.msra.mxu0 0
    %391 = vmatprep.subr.bf16.mxu0 0
    %392 = vmatpush1.bf16.msra.mxu0 0
    %393 = vmatprep.mubr.bf16.mxu0 0
    %394 = vmatmul.mubr.bf16.gmra.mrb[0].mxu0 %v332
    %v395 = vpop.f32.mrb[0].mxu0
    %v396 = vadd.f32 0.0, %v395
    %v397 = vpop.f32.mrb[0].mxu0
    %v398 = vpop.f32.mrb[0].mxu0
    %v399 = vadd.f32 0.0, %v398
    %v400 = vpop.f32.mrb[0].mxu0
    %401 = vmatprep.mubr.bf16.mxu0 0
    %402 = vmatmul.mubr.bf16.gmra.mrb[0].mxu0 %v335
    %v403 = vpop.f32.mrb[0].mxu0
    %v404 = vadd.f32 0.0, %v403
    %v405 = vpop.f32.mrb[0].mxu0
    %v406 = vpop.f32.mrb[0].mxu0
    %v407 = vadd.f32 0.0, %v406
    %v408 = vpop.f32.mrb[0].mxu0
    %409 = vmatprep.mubr.bf16.mxu0 0
    %410 = vmatmul.mubr.bf16.gmra.mrb[0].mxu0 %v338
    %v411 = vpop.f32.mrb[0].mxu0
    %v412 = vadd.f32 0.0, %v411
    %v413 = vpop.f32.mrb[0].mxu0
    %v414 = vpop.f32.mrb[0].mxu0
    %v415 = vadd.f32 0.0, %v414
    %v416 = vpop.f32.mrb[0].mxu0
    %417 = vmatprep.mubr.bf16.mxu0 0
    %418 = vmatmul.mubr.bf16.gmra.mrb[0].mxu0 %v341
    %v419 = vpop.f32.mrb[0].mxu0
    %v420 = vadd.f32 0.0, %v419
    %v421 = vpop.f32.mrb[0].mxu0
    %v422 = vpop.f32.mrb[0].mxu0
    %v423 = vadd.f32 0.0, %v422
    %v424 = vpop.f32.mrb[0].mxu0
    %425 = vmatprep.mubr.bf16.mxu0 0
    %426 = vmatmul.mubr.bf16.gmra.mrb[0].mxu0 %v344
    %v427 = vpop.f32.mrb[0].mxu0
    %v428 = vadd.f32 0.0, %v427
    %v429 = vpop.f32.mrb[0].mxu0
    %v430 = vpop.f32.mrb[0].mxu0
    %v431 = vadd.f32 0.0, %v430
    %v432 = vpop.f32.mrb[0].mxu0
    %433 = vmatprep.mubr.bf16.mxu0 0
    %434 = vmatmul.mubr.bf16.gmra.mrb[0].mxu0 %v347
    %v435 = vpop.f32.mrb[0].mxu0
    %v436 = vadd.f32 0.0, %v435
    %v437 = vpop.f32.mrb[0].mxu0
    %v438 = vpop.f32.mrb[0].mxu0
    %v439 = vadd.f32 0.0, %v438
    %v440 = vpop.f32.mrb[0].mxu0
    %441 = vmatprep.mubr.bf16.mxu0 0
    %442 = vmatmul.mubr.bf16.gmra.mrb[0].mxu0 %v350
    %v443 = vpop.f32.mrb[0].mxu0
    %v444 = vadd.f32 0.0, %v443
    %v445 = vpop.f32.mrb[0].mxu0
    %v446 = vpop.f32.mrb[0].mxu0
    %v447 = vadd.f32 0.0, %v446
    %v448 = vpop.f32.mrb[0].mxu0
    %449 = vmatprep.mubr.bf16.mxu0 0
    %450 = vmatmul.mubr.bf16.gmra.mrb[0].mxu0 %v353
    %v451 = vpop.f32.mrb[0].mxu0
    %v452 = vadd.f32 0.0, %v451
    %v453 = vpop.f32.mrb[0].mxu0
    %v454 = vpop.f32.mrb[0].mxu0
    %v455 = vadd.f32 0.0, %v454
    %v456 = vpop.f32.mrb[0].mxu0
    %457 = vmatprep.mubr.bf16.mxu0 0
    %458 = vmatmul.mubr.bf16.gmra.mrb[0].mxu0 %v356
    %v459 = vpop.f32.mrb[0].mxu0
    %v460 = vadd.f32 0.0, %v459
    %v461 = vpop.f32.mrb[0].mxu0
    %v462 = vpop.f32.mrb[0].mxu0
    %v463 = vadd.f32 0.0, %v462
    %v464 = vpop.f32.mrb[0].mxu0
    %465 = vmatprep.mubr.bf16.mxu0 0
    %466 = vmatmul.mubr.bf16.gmra.mrb[0].mxu0 %v359
    %v467 = vpop.f32.mrb[0].mxu0
    %v468 = vadd.f32 0.0, %v467
    %v469 = vpop.f32.mrb[0].mxu0
    %v470 = vpop.f32.mrb[0].mxu0
    %v471 = vadd.f32 0.0, %v470
    %v472 = vpop.f32.mrb[0].mxu0
    %473 = vdwg.mxu0
    %474 = vrot.lane.b32.xlu0 %v396, 2
    %v475 = vpop.permute.xlu0 %474
    %476 = vrot.lane.b32.xlu0 %v399, 2
    %v477 = vpop.permute.xlu0 %476
    %478 = vrot.lane.b32.xlu0 %v404, 2
    %v479 = vpop.permute.xlu0 %478
    %480 = vrot.lane.b32.xlu0 %v407, 2
    %v481 = vpop.permute.xlu0 %480
    %v482 = vlaneseq
    %v483 = vshrl.u32 %v482, 7
    %v484 = vsub.s32 0, %v483
    %v485 = vrot.slane %v250, %v484
    %v486 = vmul.f32 %v475, %v485
    %v487 = vmul.f32 %v477, %v485
    %v488 = vmul.f32 %v479, %v485
    %v489 = vmul.f32 %v481, %v485
    %v490 = vadd.f32 %v428, %v486
    %v491 = vadd.f32 %v431, %v487
    %v492 = vadd.f32 %v436, %v488
    %v493 = vadd.f32 %v439, %v489
    %494 = vrot.lane.b32.xlu0 %v412, 1
    %v495 = vpop.permute.xlu0 %494
    %496 = vrot.lane.b32.xlu0 %v415, 1
    %v497 = vpop.permute.xlu0 %496
    %498 = vrot.lane.b32.xlu0 %v420, 1
    %v499 = vpop.permute.xlu0 %498
    %500 = vrot.lane.b32.xlu0 %v423, 1
    %v501 = vpop.permute.xlu0 %500
    %v502 = vlaneseq
    %v503 = vshrl.u32 %v502, 7
    %v504 = vsub.s32 0, %v503
    %v505 = vrot.slane %v251, %v504
    %v506 = vmul.f32 %v495, %v505
    %v507 = vmul.f32 %v497, %v505
    %v508 = vmul.f32 %v499, %v505
    %v509 = vmul.f32 %v501, %v505
    %v510 = vadd.f32 %v490, %v506
    %v511 = vadd.f32 %v491, %v507
    %v512 = vadd.f32 %v492, %v508
    %v513 = vadd.f32 %v493, %v509
    %514 = vrot.lane.b32.xlu0 %v444, 127
    %v515 = vpop.permute.xlu0 %514
    %516 = vrot.lane.b32.xlu0 %v447, 127
    %v517 = vpop.permute.xlu0 %516
    %518 = vrot.lane.b32.xlu0 %v452, 127
    %v519 = vpop.permute.xlu0 %518
    %520 = vrot.lane.b32.xlu0 %v455, 127
    %v521 = vpop.permute.xlu0 %520
    %v522 = vlaneseq
    %v523 = vshrl.u32 %v522, 7
    %v524 = vsub.s32 0, %v523
    %v525 = vrot.slane %v252, %v524
    %v526 = vmul.f32 %v515, %v525
    %v527 = vmul.f32 %v517, %v525
    %v528 = vmul.f32 %v519, %v525
    %v529 = vmul.f32 %v521, %v525
    %v530 = vadd.f32 %v510, %v526
    %v531 = vadd.f32 %v511, %v527
    %v532 = vadd.f32 %v512, %v528
    %v533 = vadd.f32 %v513, %v529
    %534 = vrot.lane.b32.xlu0 %v460, 126
    %v535 = vpop.permute.xlu0 %534
    %536 = vrot.lane.b32.xlu0 %v463, 126
    %v537 = vpop.permute.xlu0 %536
    %538 = vrot.lane.b32.xlu0 %v468, 126
    %v539 = vpop.permute.xlu0 %538
    %540 = vrot.lane.b32.xlu0 %v471, 126
    %v541 = vpop.permute.xlu0 %540
    %v542 = vlaneseq
    %v543 = vshrl.u32 %v542, 7
    %v544 = vsub.s32 0, %v543
    %v545 = vrot.slane %v253, %v544
    %v546 = vmul.f32 %v535, %v545
    %v547 = vmul.f32 %v537, %v545
    %v548 = vmul.f32 %v539, %v545
    %v549 = vmul.f32 %v541, %v545
    %v550 = vadd.f32 %v530, %v546
    %v551 = vadd.f32 %v531, %v547
    %v552 = vadd.f32 %v532, %v548
    %v553 = vadd.f32 %v533, %v549
    %v554 = vld [vmem:[#allocation8] sm:$0xff]
    %v555 = vld [vmem:[#allocation8 + $0x8] sm:$0xff]
    %v556 = vld [vmem:[#allocation8 + $0x10] sm:$0xff]
    %v557 = vld [vmem:[#allocation8 + $0x18] sm:$0xff]
    %559 = vset.pattern.permute.xlu0 0
    %560 = vperm.xlu0 %559, %v554
    %v561 = vpop.permute.xlu0 %560
    %564 = vset.pattern.permute.xlu0 0
    %565 = vperm.xlu0 %564, %v555
    %v566 = vpop.permute.xlu0 %565
    %569 = vset.pattern.permute.xlu0 0
    %570 = vperm.xlu0 %569, %v556
    %v571 = vpop.permute.xlu0 %570
    %574 = vset.pattern.permute.xlu0 0
    %575 = vperm.xlu0 %574, %v557
    %v576 = vpop.permute.xlu0 %575
    %v578 = vadd.f32 %v550, %v561
    %v579 = vadd.f32 %v551, %v566
    %v580 = vadd.f32 %v552, %v571
    %v581 = vadd.f32 %v553, %v576
    %v582 = vmax.f32 %v578, 0.0
    %v583 = vmax.f32 %v579, 0.0
    %v584 = vmax.f32 %v580, 0.0
    %v585 = vmax.f32 %v581, 0.0
    %s586 = scalar_lea.vmem [#allocation7], 80
    %v587 = vld [vmem:[%s586] sm:$0xf]
    %v588 = vld [vmem:[%s586 + $0x4] sm:$0xf]
    %v589 = vld [vmem:[%s586 + $0x8] sm:$0xf]
    %v590 = vld [vmem:[%s586 + $0xc] sm:$0xf]
    %v591 = vld [vmem:[%s586 + $0x10] sm:$0xf]
    %v592 = vld [vmem:[%s586 + $0x14] sm:$0xf]
    %v593 = vld [vmem:[%s586 + $0x18] sm:$0xf]
    %v594 = vld [vmem:[%s586 + $0x1c] sm:$0xf]
    %v595 = vld [vmem:[%s586 + $0x20] sm:$0xf]
    %v596 = vld [vmem:[%s586 + $0x24] sm:$0xf]
    %v597 = vld [vmem:[%s586 + $0x28] sm:$0xf]
    %v598 = vld [vmem:[%s586 + $0x2c] sm:$0xf]
    %v599 = vld [vmem:[%s586 + $0x30] sm:$0xf]
    %v600 = vld [vmem:[%s586 + $0x34] sm:$0xf]
    %v601 = vld [vmem:[%s586 + $0x38] sm:$0xf]
    %v602 = vld [vmem:[%s586 + $0x3c] sm:$0xf]
    %v603 = vld [vmem:[%s586 + $0x40] sm:$0xf]
    %v604 = vld [vmem:[%s586 + $0x44] sm:$0xf]
    %v605 = vld [vmem:[%s586 + $0x48] sm:$0xf]
    %v606 = vld [vmem:[%s586 + $0x4c] sm:$0xf]
    %v607 = vpack.c.bf16 %v583, %v582
    %v608 = vpack.c.bf16 %v585, %v584
    %v629 = vunpack.c.l.b16 %v587
    %v630 = vunpack.c.l.b16 %v588
    %v631 = vunpack.c.l.b16 %v589
    %v632 = vunpack.c.l.b16 %v590
    %v633 = vunpack.c.l.b16 %v591
    %v634 = vunpack.c.l.b16 %v592
    %v635 = vunpack.c.l.b16 %v593
    %v636 = vunpack.c.l.b16 %v594
    %v637 = vunpack.c.l.b16 %v595
    %v638 = vunpack.c.l.b16 %v596
    %v639 = vunpack.c.l.b16 %v597
    %v640 = vunpack.c.l.b16 %v598
    %v641 = vunpack.c.l.b16 %v599
    %v642 = vunpack.c.l.b16 %v600
    %v643 = vunpack.c.l.b16 %v601
    %v644 = vunpack.c.l.b16 %v602
    %v645 = vunpack.c.l.b16 %v603
    %v646 = vunpack.c.l.b16 %v604
    %v647 = vunpack.c.l.b16 %v605
    %v648 = vunpack.c.l.b16 %v606
    %v649 = vpack.c.b16 %v630, %v629
    %v650 = vpack.c.b16 %v632, %v631
    %v651 = vpack.c.b16 %v634, %v633
    %v652 = vpack.c.b16 %v636, %v635
    %v653 = vpack.c.b16 %v638, %v637
    %v654 = vpack.c.b16 %v640, %v639
    %v655 = vpack.c.b16 %v642, %v641
    %v656 = vpack.c.b16 %v644, %v643
    %v657 = vpack.c.b16 %v646, %v645
    %v658 = vpack.c.b16 %v648, %v647
    %v660 = vsel %vm330, %v649, 0
    %v663 = vsel %vm330, %v650, 0
    %v666 = vsel %vm330, %v651, 0
    %v669 = vsel %vm330, %v652, 0
    %v672 = vsel %vm330, %v653, 0
    %v675 = vsel %vm330, %v654, 0
    %v678 = vsel %vm330, %v655, 0
    %v681 = vsel %vm330, %v656, 0
    %v684 = vsel %vm330, %v657, 0
    %v687 = vsel %vm330, %v658, 0
    %689 = vmatprep.subr.bf16.mxu0 0
    %690 = vmatpush1.bf16.msra.mxu0 %v607
    %691 = vmatprep.subr.bf16.mxu0 0
    %692 = vmatpush1.bf16.msra.mxu0 %v608
    %693 = vmatprep.subr.bf16.mxu0 0
    %694 = vmatpush1.bf16.msra.mxu0 0
    %695 = vmatprep.subr.bf16.mxu0 0
    %696 = vmatpush1.bf16.msra.mxu0 0
    %697 = vmatprep.subr.bf16.mxu0 0
    %698 = vmatpush1.bf16.msra.mxu0 0
    %699 = vmatprep.subr.bf16.mxu0 0
    %700 = vmatpush1.bf16.msra.mxu0 0
    %701 = vmatprep.subr.bf16.mxu0 0
    %702 = vmatpush1.bf16.msra.mxu0 0
    %703 = vmatprep.subr.bf16.mxu0 0
    %704 = vmatpush1.bf16.msra.mxu0 0
    %705 = vmatprep.subr.bf16.mxu0 0
    %706 = vmatpush1.bf16.msra.mxu0 0
    %707 = vmatprep.subr.bf16.mxu0 0
    %708 = vmatpush1.bf16.msra.mxu0 0
    %709 = vmatprep.subr.bf16.mxu0 0
    %710 = vmatpush1.bf16.msra.mxu0 0
    %711 = vmatprep.subr.bf16.mxu0 0
    %712 = vmatpush1.bf16.msra.mxu0 0
    %713 = vmatprep.subr.bf16.mxu0 0
    %714 = vmatpush1.bf16.msra.mxu0 0
    %715 = vmatprep.subr.bf16.mxu0 0
    %716 = vmatpush1.bf16.msra.mxu0 0
    %717 = vmatprep.subr.bf16.mxu0 0
    %718 = vmatpush1.bf16.msra.mxu0 0
    %719 = vmatprep.subr.bf16.mxu0 0
    %720 = vmatpush1.bf16.msra.mxu0 0
    %721 = vmatprep.mubr.bf16.mxu0 0
    %722 = vmatmul.mubr.bf16.gmra.mrb[0].mxu0 %v660
    %v723 = vpop.f32.mrb[0].mxu0
    %v724 = vadd.f32 0.0, %v723
    %v725 = vpop.f32.mrb[0].mxu0
    %v726 = vpop.f32.mrb[0].mxu0
    %v727 = vadd.f32 0.0, %v726
    %v728 = vpop.f32.mrb[0].mxu0
    %729 = vmatprep.mubr.bf16.mxu0 0
    %730 = vmatmul.mubr.bf16.gmra.mrb[0].mxu0 %v663
    %v731 = vpop.f32.mrb[0].mxu0
    %v732 = vadd.f32 0.0, %v731
    %v733 = vpop.f32.mrb[0].mxu0
    %v734 = vpop.f32.mrb[0].mxu0
    %v735 = vadd.f32 0.0, %v734
    %v736 = vpop.f32.mrb[0].mxu0
    %737 = vmatprep.mubr.bf16.mxu0 0
    %738 = vmatmul.mubr.bf16.gmra.mrb[0].mxu0 %v666
    %v739 = vpop.f32.mrb[0].mxu0
    %v740 = vadd.f32 0.0, %v739
    %v741 = vpop.f32.mrb[0].mxu0
    %v742 = vpop.f32.mrb[0].mxu0
    %v743 = vadd.f32 0.0, %v742
    %v744 = vpop.f32.mrb[0].mxu0
    %745 = vmatprep.mubr.bf16.mxu0 0
    %746 = vmatmul.mubr.bf16.gmra.mrb[0].mxu0 %v669
    %v747 = vpop.f32.mrb[0].mxu0
    %v748 = vadd.f32 0.0, %v747
    %v749 = vpop.f32.mrb[0].mxu0
    %v750 = vpop.f32.mrb[0].mxu0
    %v751 = vadd.f32 0.0, %v750
    %v752 = vpop.f32.mrb[0].mxu0
    %753 = vmatprep.mubr.bf16.mxu0 0
    %754 = vmatmul.mubr.bf16.gmra.mrb[0].mxu0 %v672
    %v755 = vpop.f32.mrb[0].mxu0
    %v756 = vadd.f32 0.0, %v755
    %v757 = vpop.f32.mrb[0].mxu0
    %v758 = vpop.f32.mrb[0].mxu0
    %v759 = vadd.f32 0.0, %v758
    %v760 = vpop.f32.mrb[0].mxu0
    %761 = vmatprep.mubr.bf16.mxu0 0
    %762 = vmatmul.mubr.bf16.gmra.mrb[0].mxu0 %v675
    %v763 = vpop.f32.mrb[0].mxu0
    %v764 = vadd.f32 0.0, %v763
    %v765 = vpop.f32.mrb[0].mxu0
    %v766 = vpop.f32.mrb[0].mxu0
    %v767 = vadd.f32 0.0, %v766
    %v768 = vpop.f32.mrb[0].mxu0
    %769 = vmatprep.mubr.bf16.mxu0 0
    %770 = vmatmul.mubr.bf16.gmra.mrb[0].mxu0 %v678
    %v771 = vpop.f32.mrb[0].mxu0
    %v772 = vadd.f32 0.0, %v771
    %v773 = vpop.f32.mrb[0].mxu0
    %v774 = vpop.f32.mrb[0].mxu0
    %v775 = vadd.f32 0.0, %v774
    %v776 = vpop.f32.mrb[0].mxu0
    %777 = vmatprep.mubr.bf16.mxu0 0
    %778 = vmatmul.mubr.bf16.gmra.mrb[0].mxu0 %v681
    %v779 = vpop.f32.mrb[0].mxu0
    %v780 = vadd.f32 0.0, %v779
    %v781 = vpop.f32.mrb[0].mxu0
    %v782 = vpop.f32.mrb[0].mxu0
    %v783 = vadd.f32 0.0, %v782
    %v784 = vpop.f32.mrb[0].mxu0
    %785 = vmatprep.mubr.bf16.mxu0 0
    %786 = vmatmul.mubr.bf16.gmra.mrb[0].mxu0 %v684
    %v787 = vpop.f32.mrb[0].mxu0
    %v788 = vadd.f32 0.0, %v787
    %v789 = vpop.f32.mrb[0].mxu0
    %v790 = vpop.f32.mrb[0].mxu0
    %v791 = vadd.f32 0.0, %v790
    %v792 = vpop.f32.mrb[0].mxu0
    %793 = vmatprep.mubr.bf16.mxu0 0
    %794 = vmatmul.mubr.bf16.gmra.mrb[0].mxu0 %v687
    %v795 = vpop.f32.mrb[0].mxu0
    %v796 = vadd.f32 0.0, %v795
    %v797 = vpop.f32.mrb[0].mxu0
    %v798 = vpop.f32.mrb[0].mxu0
    %v799 = vadd.f32 0.0, %v798
    %v800 = vpop.f32.mrb[0].mxu0
    %801 = vdwg.mxu0
    %802 = vrot.lane.b32.xlu0 %v724, 2
    %v803 = vpop.permute.xlu0 %802
    %804 = vrot.lane.b32.xlu0 %v727, 2
    %v805 = vpop.permute.xlu0 %804
    %806 = vrot.lane.b32.xlu0 %v732, 2
    %v807 = vpop.permute.xlu0 %806
    %808 = vrot.lane.b32.xlu0 %v735, 2
    %v809 = vpop.permute.xlu0 %808
    %v810 = vmul.f32 %v803, %v485
    %v811 = vmul.f32 %v805, %v485
    %v812 = vmul.f32 %v807, %v485
    %v813 = vmul.f32 %v809, %v485
    %v814 = vadd.f32 %v756, %v810
    %v815 = vadd.f32 %v759, %v811
    %v816 = vadd.f32 %v764, %v812
    %v817 = vadd.f32 %v767, %v813
    %818 = vrot.lane.b32.xlu0 %v740, 1
    %v819 = vpop.permute.xlu0 %818
    %820 = vrot.lane.b32.xlu0 %v743, 1
    %v821 = vpop.permute.xlu0 %820
    %822 = vrot.lane.b32.xlu0 %v748, 1
    %v823 = vpop.permute.xlu0 %822
    %824 = vrot.lane.b32.xlu0 %v751, 1
    %v825 = vpop.permute.xlu0 %824
    %v826 = vmul.f32 %v819, %v505
    %v827 = vmul.f32 %v821, %v505
    %v828 = vmul.f32 %v823, %v505
    %v829 = vmul.f32 %v825, %v505
    %v830 = vadd.f32 %v814, %v826
    %v831 = vadd.f32 %v815, %v827
    %v832 = vadd.f32 %v816, %v828
    %v833 = vadd.f32 %v817, %v829
    %834 = vrot.lane.b32.xlu0 %v772, 127
    %v835 = vpop.permute.xlu0 %834
    %836 = vrot.lane.b32.xlu0 %v775, 127
    %v837 = vpop.permute.xlu0 %836
    %838 = vrot.lane.b32.xlu0 %v780, 127
    %v839 = vpop.permute.xlu0 %838
    %840 = vrot.lane.b32.xlu0 %v783, 127
    %v841 = vpop.permute.xlu0 %840
    %v842 = vmul.f32 %v835, %v525
    %v843 = vmul.f32 %v837, %v525
    %v844 = vmul.f32 %v839, %v525
    %v845 = vmul.f32 %v841, %v525
    %v846 = vadd.f32 %v830, %v842
    %v847 = vadd.f32 %v831, %v843
    %v848 = vadd.f32 %v832, %v844
    %v849 = vadd.f32 %v833, %v845
    %850 = vrot.lane.b32.xlu0 %v788, 126
    %v851 = vpop.permute.xlu0 %850
    %852 = vrot.lane.b32.xlu0 %v791, 126
    %v853 = vpop.permute.xlu0 %852
    %854 = vrot.lane.b32.xlu0 %v796, 126
    %v855 = vpop.permute.xlu0 %854
    %856 = vrot.lane.b32.xlu0 %v799, 126
    %v857 = vpop.permute.xlu0 %856
    %v858 = vmul.f32 %v851, %v545
    %v859 = vmul.f32 %v853, %v545
    %v860 = vmul.f32 %v855, %v545
    %v861 = vmul.f32 %v857, %v545
    %v862 = vadd.f32 %v846, %v858
    %v863 = vadd.f32 %v847, %v859
    %v864 = vadd.f32 %v848, %v860
    %v865 = vadd.f32 %v849, %v861
    %s866 = scalar_lea.vmem [#allocation8], 32
    %v867 = vld [vmem:[%s866] sm:$0xff]
    %v868 = vld [vmem:[%s866 + $0x8] sm:$0xff]
    %v869 = vld [vmem:[%s866 + $0x10] sm:$0xff]
    %v870 = vld [vmem:[%s866 + $0x18] sm:$0xff]
    %872 = vset.pattern.permute.xlu0 0
    %873 = vperm.xlu0 %872, %v867
    %v874 = vpop.permute.xlu0 %873
    %877 = vset.pattern.permute.xlu0 0
    %878 = vperm.xlu0 %877, %v868
    %v879 = vpop.permute.xlu0 %878
    %882 = vset.pattern.permute.xlu0 0
    %883 = vperm.xlu0 %882, %v869
    %v884 = vpop.permute.xlu0 %883
    %887 = vset.pattern.permute.xlu0 0
    %888 = vperm.xlu0 %887, %v870
    %v889 = vpop.permute.xlu0 %888
    %v891 = vadd.f32 %v862, %v874
    %v892 = vadd.f32 %v863, %v879
    %v893 = vadd.f32 %v864, %v884
    %v894 = vadd.f32 %v865, %v889
    %v895 = vadd.f32 %v246, %v891
    %v896 = vadd.f32 %v247, %v892
    %v897 = vadd.f32 %v248, %v893
    %v898 = vadd.f32 %v249, %v894
    %v899 = vmax.f32 %v895, 0.0
    %v900 = vmax.f32 %v896, 0.0
    %v901 = vmax.f32 %v897, 0.0
    %v902 = vmax.f32 %v898, 0.0
    %s903 = scalar_lea.vmem [#allocation7], 160
    %v904 = vld [vmem:[%s903] sm:$0xf]
    %v905 = vld [vmem:[%s903 + $0x4] sm:$0xf]
    %v906 = vld [vmem:[%s903 + $0x8] sm:$0xf]
    %v907 = vld [vmem:[%s903 + $0xc] sm:$0xf]
    %v908 = vld [vmem:[%s903 + $0x10] sm:$0xf]
    %v909 = vld [vmem:[%s903 + $0x14] sm:$0xf]
    %v910 = vld [vmem:[%s903 + $0x18] sm:$0xf]
    %v911 = vld [vmem:[%s903 + $0x1c] sm:$0xf]
    %v912 = vld [vmem:[%s903 + $0x20] sm:$0xf]
    %v913 = vld [vmem:[%s903 + $0x24] sm:$0xf]
    %v914 = vld [vmem:[%s903 + $0x28] sm:$0xf]
    %v915 = vld [vmem:[%s903 + $0x2c] sm:$0xf]
    %v916 = vld [vmem:[%s903 + $0x30] sm:$0xf]
    %v917 = vld [vmem:[%s903 + $0x34] sm:$0xf]
    %v918 = vld [vmem:[%s903 + $0x38] sm:$0xf]
    %v919 = vld [vmem:[%s903 + $0x3c] sm:$0xf]
    %v920 = vld [vmem:[%s903 + $0x40] sm:$0xf]
    %v921 = vld [vmem:[%s903 + $0x44] sm:$0xf]
    %v922 = vld [vmem:[%s903 + $0x48] sm:$0xf]
    %v923 = vld [vmem:[%s903 + $0x4c] sm:$0xf]
    %v924 = vpack.c.bf16 %v900, %v899
    %v925 = vpack.c.bf16 %v902, %v901
    %v946 = vunpack.c.l.b16 %v904
    %v947 = vunpack.c.l.b16 %v905
    %v948 = vunpack.c.l.b16 %v906
    %v949 = vunpack.c.l.b16 %v907
    %v950 = vunpack.c.l.b16 %v908
    %v951 = vunpack.c.l.b16 %v909
    %v952 = vunpack.c.l.b16 %v910
    %v953 = vunpack.c.l.b16 %v911
    %v954 = vunpack.c.l.b16 %v912
    %v955 = vunpack.c.l.b16 %v913
    %v956 = vunpack.c.l.b16 %v914
    %v957 = vunpack.c.l.b16 %v915
    %v958 = vunpack.c.l.b16 %v916
    %v959 = vunpack.c.l.b16 %v917
    %v960 = vunpack.c.l.b16 %v918
    %v961 = vunpack.c.l.b16 %v919
    %v962 = vunpack.c.l.b16 %v920
    %v963 = vunpack.c.l.b16 %v921
    %v964 = vunpack.c.l.b16 %v922
    %v965 = vunpack.c.l.b16 %v923
    %v966 = vpack.c.b16 %v947, %v946
    %v967 = vpack.c.b16 %v949, %v948
    %v968 = vpack.c.b16 %v951, %v950
    %v969 = vpack.c.b16 %v953, %v952
    %v970 = vpack.c.b16 %v955, %v954
    %v971 = vpack.c.b16 %v957, %v956
    %v972 = vpack.c.b16 %v959, %v958
    %v973 = vpack.c.b16 %v961, %v960
    %v974 = vpack.c.b16 %v963, %v962
    %v975 = vpack.c.b16 %v965, %v964
    %v977 = vsel %vm330, %v966, 0
    %v980 = vsel %vm330, %v967, 0
    %v983 = vsel %vm330, %v968, 0
    %v986 = vsel %vm330, %v969, 0
    %v989 = vsel %vm330, %v970, 0
    %v992 = vsel %vm330, %v971, 0
    %v995 = vsel %vm330, %v972, 0
    %v998 = vsel %vm330, %v973, 0
    %v1001 = vsel %vm330, %v974, 0
    %v1004 = vsel %vm330, %v975, 0
    %1006 = vmatprep.subr.bf16.mxu0 0
    %1007 = vmatpush1.bf16.msra.mxu0 %v924
    %1008 = vmatprep.subr.bf16.mxu0 0
    %1009 = vmatpush1.bf16.msra.mxu0 %v925
    %1010 = vmatprep.subr.bf16.mxu0 0
    %1011 = vmatpush1.bf16.msra.mxu0 0
    %1012 = vmatprep.subr.bf16.mxu0 0
    %1013 = vmatpush1.bf16.msra.mxu0 0
    %1014 = vmatprep.subr.bf16.mxu0 0
    %1015 = vmatpush1.bf16.msra.mxu0 0
    %1016 = vmatprep.subr.bf16.mxu0 0
    %1017 = vmatpush1.bf16.msra.mxu0 0
    %1018 = vmatprep.subr.bf16.mxu0 0
    %1019 = vmatpush1.bf16.msra.mxu0 0
    %1020 = vmatprep.subr.bf16.mxu0 0
    %1021 = vmatpush1.bf16.msra.mxu0 0
    %1022 = vmatprep.subr.bf16.mxu0 0
    %1023 = vmatpush1.bf16.msra.mxu0 0
    %1024 = vmatprep.subr.bf16.mxu0 0
    %1025 = vmatpush1.bf16.msra.mxu0 0
    %1026 = vmatprep.subr.bf16.mxu0 0
    %1027 = vmatpush1.bf16.msra.mxu0 0
    %1028 = vmatprep.subr.bf16.mxu0 0
    %1029 = vmatpush1.bf16.msra.mxu0 0
    %1030 = vmatprep.subr.bf16.mxu0 0
    %1031 = vmatpush1.bf16.msra.mxu0 0
    %1032 = vmatprep.subr.bf16.mxu0 0
    %1033 = vmatpush1.bf16.msra.mxu0 0
    %1034 = vmatprep.subr.bf16.mxu0 0
    %1035 = vmatpush1.bf16.msra.mxu0 0
    %1036 = vmatprep.subr.bf16.mxu0 0
    %1037 = vmatpush1.bf16.msra.mxu0 0
    %1038 = vmatprep.mubr.bf16.mxu0 0
    %1039 = vmatmul.mubr.bf16.gmra.mrb[0].mxu0 %v977
    %v1040 = vpop.f32.mrb[0].mxu0
    %v1041 = vadd.f32 0.0, %v1040
    %v1042 = vpop.f32.mrb[0].mxu0
    %v1043 = vpop.f32.mrb[0].mxu0
    %v1044 = vadd.f32 0.0, %v1043
    %v1045 = vpop.f32.mrb[0].mxu0
    %1046 = vmatprep.mubr.bf16.mxu0 0
    %1047 = vmatmul.mubr.bf16.gmra.mrb[0].mxu0 %v980
    %v1048 = vpop.f32.mrb[0].mxu0
    %v1049 = vadd.f32 0.0, %v1048
    %v1050 = vpop.f32.mrb[0].mxu0
    %v1051 = vpop.f32.mrb[0].mxu0
    %v1052 = vadd.f32 0.0, %v1051
    %v1053 = vpop.f32.mrb[0].mxu0
    %1054 = vmatprep.mubr.bf16.mxu0 0
    %1055 = vmatmul.mubr.bf16.gmra.mrb[0].mxu0 %v983
    %v1056 = vpop.f32.mrb[0].mxu0
    %v1057 = vadd.f32 0.0, %v1056
    %v1058 = vpop.f32.mrb[0].mxu0
    %v1059 = vpop.f32.mrb[0].mxu0
    %v1060 = vadd.f32 0.0, %v1059
    %v1061 = vpop.f32.mrb[0].mxu0
    %1062 = vmatprep.mubr.bf16.mxu0 0
    %1063 = vmatmul.mubr.bf16.gmra.mrb[0].mxu0 %v986
    %v1064 = vpop.f32.mrb[0].mxu0
    %v1065 = vadd.f32 0.0, %v1064
    %v1066 = vpop.f32.mrb[0].mxu0
    %v1067 = vpop.f32.mrb[0].mxu0
    %v1068 = vadd.f32 0.0, %v1067
    %v1069 = vpop.f32.mrb[0].mxu0
    %1070 = vmatprep.mubr.bf16.mxu0 0
    %1071 = vmatmul.mubr.bf16.gmra.mrb[0].mxu0 %v989
    %v1072 = vpop.f32.mrb[0].mxu0
    %v1073 = vadd.f32 0.0, %v1072
    %v1074 = vpop.f32.mrb[0].mxu0
    %v1075 = vpop.f32.mrb[0].mxu0
    %v1076 = vadd.f32 0.0, %v1075
    %v1077 = vpop.f32.mrb[0].mxu0
    %1078 = vmatprep.mubr.bf16.mxu0 0
    %1079 = vmatmul.mubr.bf16.gmra.mrb[0].mxu0 %v992
    %v1080 = vpop.f32.mrb[0].mxu0
    %v1081 = vadd.f32 0.0, %v1080
    %v1082 = vpop.f32.mrb[0].mxu0
    %v1083 = vpop.f32.mrb[0].mxu0
    %v1084 = vadd.f32 0.0, %v1083
    %v1085 = vpop.f32.mrb[0].mxu0
    %1086 = vmatprep.mubr.bf16.mxu0 0
    %1087 = vmatmul.mubr.bf16.gmra.mrb[0].mxu0 %v995
    %v1088 = vpop.f32.mrb[0].mxu0
    %v1089 = vadd.f32 0.0, %v1088
    %v1090 = vpop.f32.mrb[0].mxu0
    %v1091 = vpop.f32.mrb[0].mxu0
    %v1092 = vadd.f32 0.0, %v1091
    %v1093 = vpop.f32.mrb[0].mxu0
    %1094 = vmatprep.mubr.bf16.mxu0 0
    %1095 = vmatmul.mubr.bf16.gmra.mrb[0].mxu0 %v998
    %v1096 = vpop.f32.mrb[0].mxu0
    %v1097 = vadd.f32 0.0, %v1096
    %v1098 = vpop.f32.mrb[0].mxu0
    %v1099 = vpop.f32.mrb[0].mxu0
    %v1100 = vadd.f32 0.0, %v1099
    %v1101 = vpop.f32.mrb[0].mxu0
    %1102 = vmatprep.mubr.bf16.mxu0 0
    %1103 = vmatmul.mubr.bf16.gmra.mrb[0].mxu0 %v1001
    %v1104 = vpop.f32.mrb[0].mxu0
    %v1105 = vadd.f32 0.0, %v1104
    %v1106 = vpop.f32.mrb[0].mxu0
    %v1107 = vpop.f32.mrb[0].mxu0
    %v1108 = vadd.f32 0.0, %v1107
    %v1109 = vpop.f32.mrb[0].mxu0
    %1110 = vmatprep.mubr.bf16.mxu0 0
    %1111 = vmatmul.mubr.bf16.gmra.mrb[0].mxu0 %v1004
    %v1112 = vpop.f32.mrb[0].mxu0
    %v1113 = vadd.f32 0.0, %v1112
    %v1114 = vpop.f32.mrb[0].mxu0
    %v1115 = vpop.f32.mrb[0].mxu0
    %v1116 = vadd.f32 0.0, %v1115
    %v1117 = vpop.f32.mrb[0].mxu0
    %1118 = vdwg.mxu0
    %1119 = vrot.lane.b32.xlu0 %v1041, 2
    %v1120 = vpop.permute.xlu0 %1119
    %1121 = vrot.lane.b32.xlu0 %v1044, 2
    %v1122 = vpop.permute.xlu0 %1121
    %1123 = vrot.lane.b32.xlu0 %v1049, 2
    %v1124 = vpop.permute.xlu0 %1123
    %1125 = vrot.lane.b32.xlu0 %v1052, 2
    %v1126 = vpop.permute.xlu0 %1125
    %v1127 = vmul.f32 %v1120, %v485
    %v1128 = vmul.f32 %v1122, %v485
    %v1129 = vmul.f32 %v1124, %v485
    %v1130 = vmul.f32 %v1126, %v485
    %v1131 = vadd.f32 %v1073, %v1127
    %v1132 = vadd.f32 %v1076, %v1128
    %v1133 = vadd.f32 %v1081, %v1129
    %v1134 = vadd.f32 %v1084, %v1130
    %1135 = vrot.lane.b32.xlu0 %v1057, 1
    %v1136 = vpop.permute.xlu0 %1135
    %1137 = vrot.lane.b32.xlu0 %v1060, 1
    %v1138 = vpop.permute.xlu0 %1137
    %1139 = vrot.lane.b32.xlu0 %v1065, 1
    %v1140 = vpop.permute.xlu0 %1139
    %1141 = vrot.lane.b32.xlu0 %v1068, 1
    %v1142 = vpop.permute.xlu0 %1141
    %v1143 = vmul.f32 %v1136, %v505
    %v1144 = vmul.f32 %v1138, %v505
    %v1145 = vmul.f32 %v1140, %v505
    %v1146 = vmul.f32 %v1142, %v505
    %v1147 = vadd.f32 %v1131, %v1143
    %v1148 = vadd.f32 %v1132, %v1144
    %v1149 = vadd.f32 %v1133, %v1145
    %v1150 = vadd.f32 %v1134, %v1146
    %1151 = vrot.lane.b32.xlu0 %v1089, 127
    %v1152 = vpop.permute.xlu0 %1151
    %1153 = vrot.lane.b32.xlu0 %v1092, 127
    %v1154 = vpop.permute.xlu0 %1153
    %1155 = vrot.lane.b32.xlu0 %v1097, 127
    %v1156 = vpop.permute.xlu0 %1155
    %1157 = vrot.lane.b32.xlu0 %v1100, 127
    %v1158 = vpop.permute.xlu0 %1157
    %v1159 = vmul.f32 %v1152, %v525
    %v1160 = vmul.f32 %v1154, %v525
    %v1161 = vmul.f32 %v1156, %v525
    %v1162 = vmul.f32 %v1158, %v525
    %v1163 = vadd.f32 %v1147, %v1159
    %v1164 = vadd.f32 %v1148, %v1160
    %v1165 = vadd.f32 %v1149, %v1161
    %v1166 = vadd.f32 %v1150, %v1162
    %1167 = vrot.lane.b32.xlu0 %v1105, 126
    %v1168 = vpop.permute.xlu0 %1167
    %1169 = vrot.lane.b32.xlu0 %v1108, 126
    %v1170 = vpop.permute.xlu0 %1169
    %1171 = vrot.lane.b32.xlu0 %v1113, 126
    %v1172 = vpop.permute.xlu0 %1171
    %1173 = vrot.lane.b32.xlu0 %v1116, 126
    %v1174 = vpop.permute.xlu0 %1173
    %v1175 = vmul.f32 %v1168, %v545
    %v1176 = vmul.f32 %v1170, %v545
    %v1177 = vmul.f32 %v1172, %v545
    %v1178 = vmul.f32 %v1174, %v545
    %v1179 = vadd.f32 %v1163, %v1175
    %v1180 = vadd.f32 %v1164, %v1176
    %v1181 = vadd.f32 %v1165, %v1177
    %v1182 = vadd.f32 %v1166, %v1178
    %s1183 = scalar_lea.vmem [#allocation8], 64
    %v1184 = vld [vmem:[%s1183] sm:$0xff]
    %v1185 = vld [vmem:[%s1183 + $0x8] sm:$0xff]
    %v1186 = vld [vmem:[%s1183 + $0x10] sm:$0xff]
    %v1187 = vld [vmem:[%s1183 + $0x18] sm:$0xff]
    %1189 = vset.pattern.permute.xlu0 0
    %1190 = vperm.xlu0 %1189, %v1184
    %v1191 = vpop.permute.xlu0 %1190
    %1194 = vset.pattern.permute.xlu0 0
    %1195 = vperm.xlu0 %1194, %v1185
    %v1196 = vpop.permute.xlu0 %1195
    %1199 = vset.pattern.permute.xlu0 0
    %1200 = vperm.xlu0 %1199, %v1186
    %v1201 = vpop.permute.xlu0 %1200
    %1204 = vset.pattern.permute.xlu0 0
    %1205 = vperm.xlu0 %1204, %v1187
    %v1206 = vpop.permute.xlu0 %1205
    %v1208 = vadd.f32 %v1179, %v1191
    %v1209 = vadd.f32 %v1180, %v1196
    %v1210 = vadd.f32 %v1181, %v1201
    %v1211 = vadd.f32 %v1182, %v1206
    %v1212 = vmax.f32 %v1208, 0.0
    %v1213 = vmax.f32 %v1209, 0.0
    %v1214 = vmax.f32 %v1210, 0.0
    %v1215 = vmax.f32 %v1211, 0.0
    %s1216 = scalar_lea.vmem [#allocation7], 240
    %v1217 = vld [vmem:[%s1216] sm:$0xf]
    %v1218 = vld [vmem:[%s1216 + $0x4] sm:$0xf]
    %v1219 = vld [vmem:[%s1216 + $0x8] sm:$0xf]
    %v1220 = vld [vmem:[%s1216 + $0xc] sm:$0xf]
    %v1221 = vld [vmem:[%s1216 + $0x10] sm:$0xf]
    %v1222 = vld [vmem:[%s1216 + $0x14] sm:$0xf]
    %v1223 = vld [vmem:[%s1216 + $0x18] sm:$0xf]
    %v1224 = vld [vmem:[%s1216 + $0x1c] sm:$0xf]
    %v1225 = vld [vmem:[%s1216 + $0x20] sm:$0xf]
    %v1226 = vld [vmem:[%s1216 + $0x24] sm:$0xf]
    %v1227 = vld [vmem:[%s1216 + $0x28] sm:$0xf]
    %v1228 = vld [vmem:[%s1216 + $0x2c] sm:$0xf]
    %v1229 = vld [vmem:[%s1216 + $0x30] sm:$0xf]
    %v1230 = vld [vmem:[%s1216 + $0x34] sm:$0xf]
    %v1231 = vld [vmem:[%s1216 + $0x38] sm:$0xf]
    %v1232 = vld [vmem:[%s1216 + $0x3c] sm:$0xf]
    %v1233 = vld [vmem:[%s1216 + $0x40] sm:$0xf]
    %v1234 = vld [vmem:[%s1216 + $0x44] sm:$0xf]
    %v1235 = vld [vmem:[%s1216 + $0x48] sm:$0xf]
    %v1236 = vld [vmem:[%s1216 + $0x4c] sm:$0xf]
    %v1237 = vpack.c.bf16 %v1213, %v1212
    %v1238 = vpack.c.bf16 %v1215, %v1214
    %v1259 = vunpack.c.l.b16 %v1217
    %v1260 = vunpack.c.l.b16 %v1218
    %v1261 = vunpack.c.l.b16 %v1219
    %v1262 = vunpack.c.l.b16 %v1220
    %v1263 = vunpack.c.l.b16 %v1221
    %v1264 = vunpack.c.l.b16 %v1222
    %v1265 = vunpack.c.l.b16 %v1223
    %v1266 = vunpack.c.l.b16 %v1224
    %v1267 = vunpack.c.l.b16 %v1225
    %v1268 = vunpack.c.l.b16 %v1226
    %v1269 = vunpack.c.l.b16 %v1227
    %v1270 = vunpack.c.l.b16 %v1228
    %v1271 = vunpack.c.l.b16 %v1229
    %v1272 = vunpack.c.l.b16 %v1230
    %v1273 = vunpack.c.l.b16 %v1231
    %v1274 = vunpack.c.l.b16 %v1232
    %v1275 = vunpack.c.l.b16 %v1233
    %v1276 = vunpack.c.l.b16 %v1234
    %v1277 = vunpack.c.l.b16 %v1235
    %v1278 = vunpack.c.l.b16 %v1236
    %v1279 = vpack.c.b16 %v1260, %v1259
    %v1280 = vpack.c.b16 %v1262, %v1261
    %v1281 = vpack.c.b16 %v1264, %v1263
    %v1282 = vpack.c.b16 %v1266, %v1265
    %v1283 = vpack.c.b16 %v1268, %v1267
    %v1284 = vpack.c.b16 %v1270, %v1269
    %v1285 = vpack.c.b16 %v1272, %v1271
    %v1286 = vpack.c.b16 %v1274, %v1273
    %v1287 = vpack.c.b16 %v1276, %v1275
    %v1288 = vpack.c.b16 %v1278, %v1277
    %v1290 = vsel %vm330, %v1279, 0
    %v1293 = vsel %vm330, %v1280, 0
    %v1296 = vsel %vm330, %v1281, 0
    %v1299 = vsel %vm330, %v1282, 0
    %v1302 = vsel %vm330, %v1283, 0
    %v1305 = vsel %vm330, %v1284, 0
    %v1308 = vsel %vm330, %v1285, 0
    %v1311 = vsel %vm330, %v1286, 0
    %v1314 = vsel %vm330, %v1287, 0
    %v1317 = vsel %vm330, %v1288, 0
    %1319 = vmatprep.subr.bf16.mxu0 0
    %1320 = vmatpush1.bf16.msra.mxu0 %v1237
    %1321 = vmatprep.subr.bf16.mxu0 0
    %1322 = vmatpush1.bf16.msra.mxu0 %v1238
    %1323 = vmatprep.subr.bf16.mxu0 0
    %1324 = vmatpush1.bf16.msra.mxu0 0
    %1325 = vmatprep.subr.bf16.mxu0 0
    %1326 = vmatpush1.bf16.msra.mxu0 0
    %1327 = vmatprep.subr.bf16.mxu0 0
    %1328 = vmatpush1.bf16.msra.mxu0 0
    %1329 = vmatprep.subr.bf16.mxu0 0
    %1330 = vmatpush1.bf16.msra.mxu0 0
    %1331 = vmatprep.subr.bf16.mxu0 0
    %1332 = vmatpush1.bf16.msra.mxu0 0
    %1333 = vmatprep.subr.bf16.mxu0 0
    %1334 = vmatpush1.bf16.msra.mxu0 0
    %1335 = vmatprep.subr.bf16.mxu0 0
    %1336 = vmatpush1.bf16.msra.mxu0 0
    %1337 = vmatprep.subr.bf16.mxu0 0
    %1338 = vmatpush1.bf16.msra.mxu0 0
    %1339 = vmatprep.subr.bf16.mxu0 0
    %1340 = vmatpush1.bf16.msra.mxu0 0
    %1341 = vmatprep.subr.bf16.mxu0 0
    %1342 = vmatpush1.bf16.msra.mxu0 0
    %1343 = vmatprep.subr.bf16.mxu0 0
    %1344 = vmatpush1.bf16.msra.mxu0 0
    %1345 = vmatprep.subr.bf16.mxu0 0
    %1346 = vmatpush1.bf16.msra.mxu0 0
    %1347 = vmatprep.subr.bf16.mxu0 0
    %1348 = vmatpush1.bf16.msra.mxu0 0
    %1349 = vmatprep.subr.bf16.mxu0 0
    %1350 = vmatpush1.bf16.msra.mxu0 0
    %1351 = vmatprep.mubr.bf16.mxu0 0
    %1352 = vmatmul.mubr.bf16.gmra.mrb[0].mxu0 %v1290
    %v1353 = vpop.f32.mrb[0].mxu0
    %v1354 = vadd.f32 0.0, %v1353
    %v1355 = vpop.f32.mrb[0].mxu0
    %v1356 = vpop.f32.mrb[0].mxu0
    %v1357 = vadd.f32 0.0, %v1356
    %v1358 = vpop.f32.mrb[0].mxu0
    %1359 = vmatprep.mubr.bf16.mxu0 0
    %1360 = vmatmul.mubr.bf16.gmra.mrb[0].mxu0 %v1293
    %v1361 = vpop.f32.mrb[0].mxu0
    %v1362 = vadd.f32 0.0, %v1361
    %v1363 = vpop.f32.mrb[0].mxu0
    %v1364 = vpop.f32.mrb[0].mxu0
    %v1365 = vadd.f32 0.0, %v1364
    %v1366 = vpop.f32.mrb[0].mxu0
    %1367 = vmatprep.mubr.bf16.mxu0 0
    %1368 = vmatmul.mubr.bf16.gmra.mrb[0].mxu0 %v1296
    %v1369 = vpop.f32.mrb[0].mxu0
    %v1370 = vadd.f32 0.0, %v1369
    %v1371 = vpop.f32.mrb[0].mxu0
    %v1372 = vpop.f32.mrb[0].mxu0
    %v1373 = vadd.f32 0.0, %v1372
    %v1374 = vpop.f32.mrb[0].mxu0
    %1375 = vmatprep.mubr.bf16.mxu0 0
    %1376 = vmatmul.mubr.bf16.gmra.mrb[0].mxu0 %v1299
    %v1377 = vpop.f32.mrb[0].mxu0
    %v1378 = vadd.f32 0.0, %v1377
    %v1379 = vpop.f32.mrb[0].mxu0
    %v1380 = vpop.f32.mrb[0].mxu0
    %v1381 = vadd.f32 0.0, %v1380
    %v1382 = vpop.f32.mrb[0].mxu0
    %1383 = vmatprep.mubr.bf16.mxu0 0
    %1384 = vmatmul.mubr.bf16.gmra.mrb[0].mxu0 %v1302
    %v1385 = vpop.f32.mrb[0].mxu0
    %v1386 = vadd.f32 0.0, %v1385
    %v1387 = vpop.f32.mrb[0].mxu0
    %v1388 = vpop.f32.mrb[0].mxu0
    %v1389 = vadd.f32 0.0, %v1388
    %v1390 = vpop.f32.mrb[0].mxu0
    %1391 = vmatprep.mubr.bf16.mxu0 0
    %1392 = vmatmul.mubr.bf16.gmra.mrb[0].mxu0 %v1305
    %v1393 = vpop.f32.mrb[0].mxu0
    %v1394 = vadd.f32 0.0, %v1393
    %v1395 = vpop.f32.mrb[0].mxu0
    %v1396 = vpop.f32.mrb[0].mxu0
    %v1397 = vadd.f32 0.0, %v1396
    %v1398 = vpop.f32.mrb[0].mxu0
    %1399 = vmatprep.mubr.bf16.mxu0 0
    %1400 = vmatmul.mubr.bf16.gmra.mrb[0].mxu0 %v1308
    %v1401 = vpop.f32.mrb[0].mxu0
    %v1402 = vadd.f32 0.0, %v1401
    %v1403 = vpop.f32.mrb[0].mxu0
    %v1404 = vpop.f32.mrb[0].mxu0
    %v1405 = vadd.f32 0.0, %v1404
    %v1406 = vpop.f32.mrb[0].mxu0
    %1407 = vmatprep.mubr.bf16.mxu0 0
    %1408 = vmatmul.mubr.bf16.gmra.mrb[0].mxu0 %v1311
    %v1409 = vpop.f32.mrb[0].mxu0
    %v1410 = vadd.f32 0.0, %v1409
    %v1411 = vpop.f32.mrb[0].mxu0
    %v1412 = vpop.f32.mrb[0].mxu0
    %v1413 = vadd.f32 0.0, %v1412
    %v1414 = vpop.f32.mrb[0].mxu0
    %1415 = vmatprep.mubr.bf16.mxu0 0
    %1416 = vmatmul.mubr.bf16.gmra.mrb[0].mxu0 %v1314
    %v1417 = vpop.f32.mrb[0].mxu0
    %v1418 = vadd.f32 0.0, %v1417
    %v1419 = vpop.f32.mrb[0].mxu0
    %v1420 = vpop.f32.mrb[0].mxu0
    %v1421 = vadd.f32 0.0, %v1420
    %v1422 = vpop.f32.mrb[0].mxu0
    %1423 = vmatprep.mubr.bf16.mxu0 0
    %1424 = vmatmul.mubr.bf16.gmra.mrb[0].mxu0 %v1317
    %v1425 = vpop.f32.mrb[0].mxu0
    %v1426 = vadd.f32 0.0, %v1425
    %v1427 = vpop.f32.mrb[0].mxu0
    %v1428 = vpop.f32.mrb[0].mxu0
    %v1429 = vadd.f32 0.0, %v1428
    %v1430 = vpop.f32.mrb[0].mxu0
    %1431 = vdwg.mxu0
    %1432 = vrot.lane.b32.xlu0 %v1354, 2
    %v1433 = vpop.permute.xlu0 %1432
    %1434 = vrot.lane.b32.xlu0 %v1357, 2
    %v1435 = vpop.permute.xlu0 %1434
    %1436 = vrot.lane.b32.xlu0 %v1362, 2
    %v1437 = vpop.permute.xlu0 %1436
    %1438 = vrot.lane.b32.xlu0 %v1365, 2
    %v1439 = vpop.permute.xlu0 %1438
    %v1440 = vmul.f32 %v1433, %v485
    %v1441 = vmul.f32 %v1435, %v485
    %v1442 = vmul.f32 %v1437, %v485
    %v1443 = vmul.f32 %v1439, %v485
    %v1444 = vadd.f32 %v1386, %v1440
    %v1445 = vadd.f32 %v1389, %v1441
    %v1446 = vadd.f32 %v1394, %v1442
    %v1447 = vadd.f32 %v1397, %v1443
    %1448 = vrot.lane.b32.xlu0 %v1370, 1
    %v1449 = vpop.permute.xlu0 %1448
    %1450 = vrot.lane.b32.xlu0 %v1373, 1
    %v1451 = vpop.permute.xlu0 %1450
    %1452 = vrot.lane.b32.xlu0 %v1378, 1
    %v1453 = vpop.permute.xlu0 %1452
    %1454 = vrot.lane.b32.xlu0 %v1381, 1
    %v1455 = vpop.permute.xlu0 %1454
    %v1456 = vmul.f32 %v1449, %v505
    %v1457 = vmul.f32 %v1451, %v505
    %v1458 = vmul.f32 %v1453, %v505
    %v1459 = vmul.f32 %v1455, %v505
    %v1460 = vadd.f32 %v1444, %v1456
    %v1461 = vadd.f32 %v1445, %v1457
    %v1462 = vadd.f32 %v1446, %v1458
    %v1463 = vadd.f32 %v1447, %v1459
    %1464 = vrot.lane.b32.xlu0 %v1402, 127
    %v1465 = vpop.permute.xlu0 %1464
    %1466 = vrot.lane.b32.xlu0 %v1405, 127
    %v1467 = vpop.permute.xlu0 %1466
    %1468 = vrot.lane.b32.xlu0 %v1410, 127
    %v1469 = vpop.permute.xlu0 %1468
    %1470 = vrot.lane.b32.xlu0 %v1413, 127
    %v1471 = vpop.permute.xlu0 %1470
    %v1472 = vmul.f32 %v1465, %v525
    %v1473 = vmul.f32 %v1467, %v525
    %v1474 = vmul.f32 %v1469, %v525
    %v1475 = vmul.f32 %v1471, %v525
    %v1476 = vadd.f32 %v1460, %v1472
    %v1477 = vadd.f32 %v1461, %v1473
    %v1478 = vadd.f32 %v1462, %v1474
    %v1479 = vadd.f32 %v1463, %v1475
    %1480 = vrot.lane.b32.xlu0 %v1418, 126
    %v1481 = vpop.permute.xlu0 %1480
    %1482 = vrot.lane.b32.xlu0 %v1421, 126
    %v1483 = vpop.permute.xlu0 %1482
    %1484 = vrot.lane.b32.xlu0 %v1426, 126
    %v1485 = vpop.permute.xlu0 %1484
    %1486 = vrot.lane.b32.xlu0 %v1429, 126
    %v1487 = vpop.permute.xlu0 %1486
    %v1488 = vmul.f32 %v1481, %v545
    %v1489 = vmul.f32 %v1483, %v545
    %v1490 = vmul.f32 %v1485, %v545
    %v1491 = vmul.f32 %v1487, %v545
    %v1492 = vadd.f32 %v1476, %v1488
    %v1493 = vadd.f32 %v1477, %v1489
    %v1494 = vadd.f32 %v1478, %v1490
    %v1495 = vadd.f32 %v1479, %v1491
    %s1496 = scalar_lea.vmem [#allocation8], 96
    %v1497 = vld [vmem:[%s1496] sm:$0xff]
    %v1498 = vld [vmem:[%s1496 + $0x8] sm:$0xff]
    %v1499 = vld [vmem:[%s1496 + $0x10] sm:$0xff]
    %v1500 = vld [vmem:[%s1496 + $0x18] sm:$0xff]
    %1502 = vset.pattern.permute.xlu0 0
    %1503 = vperm.xlu0 %1502, %v1497
    %v1504 = vpop.permute.xlu0 %1503
    %1507 = vset.pattern.permute.xlu0 0
    %1508 = vperm.xlu0 %1507, %v1498
    %v1509 = vpop.permute.xlu0 %1508
    %1512 = vset.pattern.permute.xlu0 0
    %1513 = vperm.xlu0 %1512, %v1499
    %v1514 = vpop.permute.xlu0 %1513
    %1517 = vset.pattern.permute.xlu0 0
    %1518 = vperm.xlu0 %1517, %v1500
    %v1519 = vpop.permute.xlu0 %1518
    %v1521 = vadd.f32 %v1492, %v1504
    %v1522 = vadd.f32 %v1493, %v1509
    %v1523 = vadd.f32 %v1494, %v1514
    %v1524 = vadd.f32 %v1495, %v1519
    %v1525 = vadd.f32 %v895, %v1521
    %v1526 = vadd.f32 %v896, %v1522
    %v1527 = vadd.f32 %v897, %v1523
    %v1528 = vadd.f32 %v898, %v1524
    %v1529 = vmax.f32 %v1525, 0.0
    %v1530 = vmax.f32 %v1526, 0.0
    %v1531 = vmax.f32 %v1527, 0.0
    %v1532 = vmax.f32 %v1528, 0.0
    %s1533 = scalar_lea.vmem [#allocation7], 320
    %v1534 = vld [vmem:[%s1533] sm:$0xf]
    %v1535 = vld [vmem:[%s1533 + $0x4] sm:$0xf]
    %v1536 = vld [vmem:[%s1533 + $0x8] sm:$0xf]
    %v1537 = vld [vmem:[%s1533 + $0xc] sm:$0xf]
    %v1538 = vld [vmem:[%s1533 + $0x10] sm:$0xf]
    %v1539 = vld [vmem:[%s1533 + $0x14] sm:$0xf]
    %v1540 = vld [vmem:[%s1533 + $0x18] sm:$0xf]
    %v1541 = vld [vmem:[%s1533 + $0x1c] sm:$0xf]
    %v1542 = vld [vmem:[%s1533 + $0x20] sm:$0xf]
    %v1543 = vld [vmem:[%s1533 + $0x24] sm:$0xf]
    %v1544 = vld [vmem:[%s1533 + $0x28] sm:$0xf]
    %v1545 = vld [vmem:[%s1533 + $0x2c] sm:$0xf]
    %v1546 = vld [vmem:[%s1533 + $0x30] sm:$0xf]
    %v1547 = vld [vmem:[%s1533 + $0x34] sm:$0xf]
    %v1548 = vld [vmem:[%s1533 + $0x38] sm:$0xf]
    %v1549 = vld [vmem:[%s1533 + $0x3c] sm:$0xf]
    %v1550 = vld [vmem:[%s1533 + $0x40] sm:$0xf]
    %v1551 = vld [vmem:[%s1533 + $0x44] sm:$0xf]
    %v1552 = vld [vmem:[%s1533 + $0x48] sm:$0xf]
    %v1553 = vld [vmem:[%s1533 + $0x4c] sm:$0xf]
    %v1554 = vpack.c.bf16 %v1530, %v1529
    %v1555 = vpack.c.bf16 %v1532, %v1531
    %v1576 = vunpack.c.l.b16 %v1534
    %v1577 = vunpack.c.l.b16 %v1535
    %v1578 = vunpack.c.l.b16 %v1536
    %v1579 = vunpack.c.l.b16 %v1537
    %v1580 = vunpack.c.l.b16 %v1538
    %v1581 = vunpack.c.l.b16 %v1539
    %v1582 = vunpack.c.l.b16 %v1540
    %v1583 = vunpack.c.l.b16 %v1541
    %v1584 = vunpack.c.l.b16 %v1542
    %v1585 = vunpack.c.l.b16 %v1543
    %v1586 = vunpack.c.l.b16 %v1544
    %v1587 = vunpack.c.l.b16 %v1545
    %v1588 = vunpack.c.l.b16 %v1546
    %v1589 = vunpack.c.l.b16 %v1547
    %v1590 = vunpack.c.l.b16 %v1548
    %v1591 = vunpack.c.l.b16 %v1549
    %v1592 = vunpack.c.l.b16 %v1550
    %v1593 = vunpack.c.l.b16 %v1551
    %v1594 = vunpack.c.l.b16 %v1552
    %v1595 = vunpack.c.l.b16 %v1553
    %v1596 = vpack.c.b16 %v1577, %v1576
    %v1597 = vpack.c.b16 %v1579, %v1578
    %v1598 = vpack.c.b16 %v1581, %v1580
    %v1599 = vpack.c.b16 %v1583, %v1582
    %v1600 = vpack.c.b16 %v1585, %v1584
    %v1601 = vpack.c.b16 %v1587, %v1586
    %v1602 = vpack.c.b16 %v1589, %v1588
    %v1603 = vpack.c.b16 %v1591, %v1590
    %v1604 = vpack.c.b16 %v1593, %v1592
    %v1605 = vpack.c.b16 %v1595, %v1594
    %v1607 = vsel %vm330, %v1596, 0
    %v1610 = vsel %vm330, %v1597, 0
    %v1613 = vsel %vm330, %v1598, 0
    %v1616 = vsel %vm330, %v1599, 0
    %v1619 = vsel %vm330, %v1600, 0
    %v1622 = vsel %vm330, %v1601, 0
    %v1625 = vsel %vm330, %v1602, 0
    %v1628 = vsel %vm330, %v1603, 0
    %v1631 = vsel %vm330, %v1604, 0
    %v1634 = vsel %vm330, %v1605, 0
    %1636 = vmatprep.subr.bf16.mxu0 0
    %1637 = vmatpush1.bf16.msra.mxu0 %v1554
    %1638 = vmatprep.subr.bf16.mxu0 0
    %1639 = vmatpush1.bf16.msra.mxu0 %v1555
    %1640 = vmatprep.subr.bf16.mxu0 0
    %1641 = vmatpush1.bf16.msra.mxu0 0
    %1642 = vmatprep.subr.bf16.mxu0 0
    %1643 = vmatpush1.bf16.msra.mxu0 0
    %1644 = vmatprep.subr.bf16.mxu0 0
    %1645 = vmatpush1.bf16.msra.mxu0 0
    %1646 = vmatprep.subr.bf16.mxu0 0
    %1647 = vmatpush1.bf16.msra.mxu0 0
    %1648 = vmatprep.subr.bf16.mxu0 0
    %1649 = vmatpush1.bf16.msra.mxu0 0
    %1650 = vmatprep.subr.bf16.mxu0 0
    %1651 = vmatpush1.bf16.msra.mxu0 0
    %1652 = vmatprep.subr.bf16.mxu0 0
    %1653 = vmatpush1.bf16.msra.mxu0 0
    %1654 = vmatprep.subr.bf16.mxu0 0
    %1655 = vmatpush1.bf16.msra.mxu0 0
    %1656 = vmatprep.subr.bf16.mxu0 0
    %1657 = vmatpush1.bf16.msra.mxu0 0
    %1658 = vmatprep.subr.bf16.mxu0 0
    %1659 = vmatpush1.bf16.msra.mxu0 0
    %1660 = vmatprep.subr.bf16.mxu0 0
    %1661 = vmatpush1.bf16.msra.mxu0 0
    %1662 = vmatprep.subr.bf16.mxu0 0
    %1663 = vmatpush1.bf16.msra.mxu0 0
    %1664 = vmatprep.subr.bf16.mxu0 0
    %1665 = vmatpush1.bf16.msra.mxu0 0
    %1666 = vmatprep.subr.bf16.mxu0 0
    %1667 = vmatpush1.bf16.msra.mxu0 0
    %1668 = vmatprep.mubr.bf16.mxu0 0
    %1669 = vmatmul.mubr.bf16.gmra.mrb[0].mxu0 %v1607
    %v1670 = vpop.f32.mrb[0].mxu0
    %v1671 = vadd.f32 0.0, %v1670
    %v1672 = vpop.f32.mrb[0].mxu0
    %v1673 = vpop.f32.mrb[0].mxu0
    %v1674 = vadd.f32 0.0, %v1673
    %v1675 = vpop.f32.mrb[0].mxu0
    %1676 = vmatprep.mubr.bf16.mxu0 0
    %1677 = vmatmul.mubr.bf16.gmra.mrb[0].mxu0 %v1610
    %v1678 = vpop.f32.mrb[0].mxu0
    %v1679 = vadd.f32 0.0, %v1678
    %v1680 = vpop.f32.mrb[0].mxu0
    %v1681 = vpop.f32.mrb[0].mxu0
    %v1682 = vadd.f32 0.0, %v1681
    %v1683 = vpop.f32.mrb[0].mxu0
    %1684 = vmatprep.mubr.bf16.mxu0 0
    %1685 = vmatmul.mubr.bf16.gmra.mrb[0].mxu0 %v1613
    %v1686 = vpop.f32.mrb[0].mxu0
    %v1687 = vadd.f32 0.0, %v1686
    %v1688 = vpop.f32.mrb[0].mxu0
    %v1689 = vpop.f32.mrb[0].mxu0
    %v1690 = vadd.f32 0.0, %v1689
    %v1691 = vpop.f32.mrb[0].mxu0
    %1692 = vmatprep.mubr.bf16.mxu0 0
    %1693 = vmatmul.mubr.bf16.gmra.mrb[0].mxu0 %v1616
    %v1694 = vpop.f32.mrb[0].mxu0
    %v1695 = vadd.f32 0.0, %v1694
    %v1696 = vpop.f32.mrb[0].mxu0
    %v1697 = vpop.f32.mrb[0].mxu0
    %v1698 = vadd.f32 0.0, %v1697
    %v1699 = vpop.f32.mrb[0].mxu0
    %1700 = vmatprep.mubr.bf16.mxu0 0
    %1701 = vmatmul.mubr.bf16.gmra.mrb[0].mxu0 %v1619
    %v1702 = vpop.f32.mrb[0].mxu0
    %v1703 = vadd.f32 0.0, %v1702
    %v1704 = vpop.f32.mrb[0].mxu0
    %v1705 = vpop.f32.mrb[0].mxu0
    %v1706 = vadd.f32 0.0, %v1705
    %v1707 = vpop.f32.mrb[0].mxu0
    %1708 = vmatprep.mubr.bf16.mxu0 0
    %1709 = vmatmul.mubr.bf16.gmra.mrb[0].mxu0 %v1622
    %v1710 = vpop.f32.mrb[0].mxu0
    %v1711 = vadd.f32 0.0, %v1710
    %v1712 = vpop.f32.mrb[0].mxu0
    %v1713 = vpop.f32.mrb[0].mxu0
    %v1714 = vadd.f32 0.0, %v1713
    %v1715 = vpop.f32.mrb[0].mxu0
    %1716 = vmatprep.mubr.bf16.mxu0 0
    %1717 = vmatmul.mubr.bf16.gmra.mrb[0].mxu0 %v1625
    %v1718 = vpop.f32.mrb[0].mxu0
    %v1719 = vadd.f32 0.0, %v1718
    %v1720 = vpop.f32.mrb[0].mxu0
    %v1721 = vpop.f32.mrb[0].mxu0
    %v1722 = vadd.f32 0.0, %v1721
    %v1723 = vpop.f32.mrb[0].mxu0
    %1724 = vmatprep.mubr.bf16.mxu0 0
    %1725 = vmatmul.mubr.bf16.gmra.mrb[0].mxu0 %v1628
    %v1726 = vpop.f32.mrb[0].mxu0
    %v1727 = vadd.f32 0.0, %v1726
    %v1728 = vpop.f32.mrb[0].mxu0
    %v1729 = vpop.f32.mrb[0].mxu0
    %v1730 = vadd.f32 0.0, %v1729
    %v1731 = vpop.f32.mrb[0].mxu0
    %1732 = vmatprep.mubr.bf16.mxu0 0
    %1733 = vmatmul.mubr.bf16.gmra.mrb[0].mxu0 %v1631
    %v1734 = vpop.f32.mrb[0].mxu0
    %v1735 = vadd.f32 0.0, %v1734
    %v1736 = vpop.f32.mrb[0].mxu0
    %v1737 = vpop.f32.mrb[0].mxu0
    %v1738 = vadd.f32 0.0, %v1737
    %v1739 = vpop.f32.mrb[0].mxu0
    %1740 = vmatprep.mubr.bf16.mxu0 0
    %1741 = vmatmul.mubr.bf16.gmra.mrb[0].mxu0 %v1634
    %v1742 = vpop.f32.mrb[0].mxu0
    %v1743 = vadd.f32 0.0, %v1742
    %v1744 = vpop.f32.mrb[0].mxu0
    %v1745 = vpop.f32.mrb[0].mxu0
    %v1746 = vadd.f32 0.0, %v1745
    %v1747 = vpop.f32.mrb[0].mxu0
    %1748 = vdwg.mxu0
    %1749 = vrot.lane.b32.xlu0 %v1671, 2
    %v1750 = vpop.permute.xlu0 %1749
    %1751 = vrot.lane.b32.xlu0 %v1674, 2
    %v1752 = vpop.permute.xlu0 %1751
    %1753 = vrot.lane.b32.xlu0 %v1679, 2
    %v1754 = vpop.permute.xlu0 %1753
    %1755 = vrot.lane.b32.xlu0 %v1682, 2
    %v1756 = vpop.permute.xlu0 %1755
    %v1757 = vmul.f32 %v1750, %v485
    %v1758 = vmul.f32 %v1752, %v485
    %v1759 = vmul.f32 %v1754, %v485
    %v1760 = vmul.f32 %v1756, %v485
    %v1761 = vadd.f32 %v1703, %v1757
    %v1762 = vadd.f32 %v1706, %v1758
    %v1763 = vadd.f32 %v1711, %v1759
    %v1764 = vadd.f32 %v1714, %v1760
    %1765 = vrot.lane.b32.xlu0 %v1687, 1
    %v1766 = vpop.permute.xlu0 %1765
    %1767 = vrot.lane.b32.xlu0 %v1690, 1
    %v1768 = vpop.permute.xlu0 %1767
    %1769 = vrot.lane.b32.xlu0 %v1695, 1
    %v1770 = vpop.permute.xlu0 %1769
    %1771 = vrot.lane.b32.xlu0 %v1698, 1
    %v1772 = vpop.permute.xlu0 %1771
    %v1773 = vmul.f32 %v1766, %v505
    %v1774 = vmul.f32 %v1768, %v505
    %v1775 = vmul.f32 %v1770, %v505
    %v1776 = vmul.f32 %v1772, %v505
    %v1777 = vadd.f32 %v1761, %v1773
    %v1778 = vadd.f32 %v1762, %v1774
    %v1779 = vadd.f32 %v1763, %v1775
    %v1780 = vadd.f32 %v1764, %v1776
    %1781 = vrot.lane.b32.xlu0 %v1719, 127
    %v1782 = vpop.permute.xlu0 %1781
    %1783 = vrot.lane.b32.xlu0 %v1722, 127
    %v1784 = vpop.permute.xlu0 %1783
    %1785 = vrot.lane.b32.xlu0 %v1727, 127
    %v1786 = vpop.permute.xlu0 %1785
    %1787 = vrot.lane.b32.xlu0 %v1730, 127
    %v1788 = vpop.permute.xlu0 %1787
    %v1789 = vmul.f32 %v1782, %v525
    %v1790 = vmul.f32 %v1784, %v525
    %v1791 = vmul.f32 %v1786, %v525
    %v1792 = vmul.f32 %v1788, %v525
    %v1793 = vadd.f32 %v1777, %v1789
    %v1794 = vadd.f32 %v1778, %v1790
    %v1795 = vadd.f32 %v1779, %v1791
    %v1796 = vadd.f32 %v1780, %v1792
    %1797 = vrot.lane.b32.xlu0 %v1735, 126
    %v1798 = vpop.permute.xlu0 %1797
    %1799 = vrot.lane.b32.xlu0 %v1738, 126
    %v1800 = vpop.permute.xlu0 %1799
    %1801 = vrot.lane.b32.xlu0 %v1743, 126
    %v1802 = vpop.permute.xlu0 %1801
    %1803 = vrot.lane.b32.xlu0 %v1746, 126
    %v1804 = vpop.permute.xlu0 %1803
    %v1805 = vmul.f32 %v1798, %v545
    %v1806 = vmul.f32 %v1800, %v545
    %v1807 = vmul.f32 %v1802, %v545
    %v1808 = vmul.f32 %v1804, %v545
    %v1809 = vadd.f32 %v1793, %v1805
    %v1810 = vadd.f32 %v1794, %v1806
    %v1811 = vadd.f32 %v1795, %v1807
    %v1812 = vadd.f32 %v1796, %v1808
    %s1813 = scalar_lea.vmem [#allocation8], 128
    %v1814 = vld [vmem:[%s1813] sm:$0xff]
    %v1815 = vld [vmem:[%s1813 + $0x8] sm:$0xff]
    %v1816 = vld [vmem:[%s1813 + $0x10] sm:$0xff]
    %v1817 = vld [vmem:[%s1813 + $0x18] sm:$0xff]
    %1819 = vset.pattern.permute.xlu0 0
    %1820 = vperm.xlu0 %1819, %v1814
    %v1821 = vpop.permute.xlu0 %1820
    %1824 = vset.pattern.permute.xlu0 0
    %1825 = vperm.xlu0 %1824, %v1815
    %v1826 = vpop.permute.xlu0 %1825
    %1829 = vset.pattern.permute.xlu0 0
    %1830 = vperm.xlu0 %1829, %v1816
    %v1831 = vpop.permute.xlu0 %1830
    %1834 = vset.pattern.permute.xlu0 0
    %1835 = vperm.xlu0 %1834, %v1817
    %v1836 = vpop.permute.xlu0 %1835
    %v1838 = vadd.f32 %v1809, %v1821
    %v1839 = vadd.f32 %v1810, %v1826
    %v1840 = vadd.f32 %v1811, %v1831
    %v1841 = vadd.f32 %v1812, %v1836
    %v1842 = vmax.f32 %v1838, 0.0
    %v1843 = vmax.f32 %v1839, 0.0
    %v1844 = vmax.f32 %v1840, 0.0
    %v1845 = vmax.f32 %v1841, 0.0
    %s1846 = scalar_lea.vmem [#allocation7], 400
    %v1847 = vld [vmem:[%s1846] sm:$0xf]
    %v1848 = vld [vmem:[%s1846 + $0x4] sm:$0xf]
    %v1849 = vld [vmem:[%s1846 + $0x8] sm:$0xf]
    %v1850 = vld [vmem:[%s1846 + $0xc] sm:$0xf]
    %v1851 = vld [vmem:[%s1846 + $0x10] sm:$0xf]
    %v1852 = vld [vmem:[%s1846 + $0x14] sm:$0xf]
    %v1853 = vld [vmem:[%s1846 + $0x18] sm:$0xf]
    %v1854 = vld [vmem:[%s1846 + $0x1c] sm:$0xf]
    %v1855 = vld [vmem:[%s1846 + $0x20] sm:$0xf]
    %v1856 = vld [vmem:[%s1846 + $0x24] sm:$0xf]
    %v1857 = vld [vmem:[%s1846 + $0x28] sm:$0xf]
    %v1858 = vld [vmem:[%s1846 + $0x2c] sm:$0xf]
    %v1859 = vld [vmem:[%s1846 + $0x30] sm:$0xf]
    %v1860 = vld [vmem:[%s1846 + $0x34] sm:$0xf]
    %v1861 = vld [vmem:[%s1846 + $0x38] sm:$0xf]
    %v1862 = vld [vmem:[%s1846 + $0x3c] sm:$0xf]
    %v1863 = vld [vmem:[%s1846 + $0x40] sm:$0xf]
    %v1864 = vld [vmem:[%s1846 + $0x44] sm:$0xf]
    %v1865 = vld [vmem:[%s1846 + $0x48] sm:$0xf]
    %v1866 = vld [vmem:[%s1846 + $0x4c] sm:$0xf]
    %v1867 = vpack.c.bf16 %v1843, %v1842
    %v1868 = vpack.c.bf16 %v1845, %v1844
    %v1889 = vunpack.c.l.b16 %v1847
    %v1890 = vunpack.c.l.b16 %v1848
    %v1891 = vunpack.c.l.b16 %v1849
    %v1892 = vunpack.c.l.b16 %v1850
    %v1893 = vunpack.c.l.b16 %v1851
    %v1894 = vunpack.c.l.b16 %v1852
    %v1895 = vunpack.c.l.b16 %v1853
    %v1896 = vunpack.c.l.b16 %v1854
    %v1897 = vunpack.c.l.b16 %v1855
    %v1898 = vunpack.c.l.b16 %v1856
    %v1899 = vunpack.c.l.b16 %v1857
    %v1900 = vunpack.c.l.b16 %v1858
    %v1901 = vunpack.c.l.b16 %v1859
    %v1902 = vunpack.c.l.b16 %v1860
    %v1903 = vunpack.c.l.b16 %v1861
    %v1904 = vunpack.c.l.b16 %v1862
    %v1905 = vunpack.c.l.b16 %v1863
    %v1906 = vunpack.c.l.b16 %v1864
    %v1907 = vunpack.c.l.b16 %v1865
    %v1908 = vunpack.c.l.b16 %v1866
    %v1909 = vpack.c.b16 %v1890, %v1889
    %v1910 = vpack.c.b16 %v1892, %v1891
    %v1911 = vpack.c.b16 %v1894, %v1893
    %v1912 = vpack.c.b16 %v1896, %v1895
    %v1913 = vpack.c.b16 %v1898, %v1897
    %v1914 = vpack.c.b16 %v1900, %v1899
    %v1915 = vpack.c.b16 %v1902, %v1901
    %v1916 = vpack.c.b16 %v1904, %v1903
    %v1917 = vpack.c.b16 %v1906, %v1905
    %v1918 = vpack.c.b16 %v1908, %v1907
    %v1920 = vsel %vm330, %v1909, 0
    %v1923 = vsel %vm330, %v1910, 0
    %v1926 = vsel %vm330, %v1911, 0
    %v1929 = vsel %vm330, %v1912, 0
    %v1932 = vsel %vm330, %v1913, 0
    %v1935 = vsel %vm330, %v1914, 0
    %v1938 = vsel %vm330, %v1915, 0
    %v1941 = vsel %vm330, %v1916, 0
    %v1944 = vsel %vm330, %v1917, 0
    %v1947 = vsel %vm330, %v1918, 0
    %1949 = vmatprep.subr.bf16.mxu0 0
    %1950 = vmatpush1.bf16.msra.mxu0 %v1867
    %1951 = vmatprep.subr.bf16.mxu0 0
    %1952 = vmatpush1.bf16.msra.mxu0 %v1868
    %1953 = vmatprep.subr.bf16.mxu0 0
    %1954 = vmatpush1.bf16.msra.mxu0 0
    %1955 = vmatprep.subr.bf16.mxu0 0
    %1956 = vmatpush1.bf16.msra.mxu0 0
    %1957 = vmatprep.subr.bf16.mxu0 0
    %1958 = vmatpush1.bf16.msra.mxu0 0
    %1959 = vmatprep.subr.bf16.mxu0 0
    %1960 = vmatpush1.bf16.msra.mxu0 0
    %1961 = vmatprep.subr.bf16.mxu0 0
    %1962 = vmatpush1.bf16.msra.mxu0 0
    %1963 = vmatprep.subr.bf16.mxu0 0
    %1964 = vmatpush1.bf16.msra.mxu0 0
    %1965 = vmatprep.subr.bf16.mxu0 0
    %1966 = vmatpush1.bf16.msra.mxu0 0
    %1967 = vmatprep.subr.bf16.mxu0 0
    %1968 = vmatpush1.bf16.msra.mxu0 0
    %1969 = vmatprep.subr.bf16.mxu0 0
    %1970 = vmatpush1.bf16.msra.mxu0 0
    %1971 = vmatprep.subr.bf16.mxu0 0
    %1972 = vmatpush1.bf16.msra.mxu0 0
    %1973 = vmatprep.subr.bf16.mxu0 0
    %1974 = vmatpush1.bf16.msra.mxu0 0
    %1975 = vmatprep.subr.bf16.mxu0 0
    %1976 = vmatpush1.bf16.msra.mxu0 0
    %1977 = vmatprep.subr.bf16.mxu0 0
    %1978 = vmatpush1.bf16.msra.mxu0 0
    %1979 = vmatprep.subr.bf16.mxu0 0
    %1980 = vmatpush1.bf16.msra.mxu0 0
    %1981 = vmatprep.mubr.bf16.mxu0 0
    %1982 = vmatmul.mubr.bf16.gmra.mrb[0].mxu0 %v1920
    %v1983 = vpop.f32.mrb[0].mxu0
    %v1984 = vadd.f32 0.0, %v1983
    %v1985 = vpop.f32.mrb[0].mxu0
    %v1986 = vpop.f32.mrb[0].mxu0
    %v1987 = vadd.f32 0.0, %v1986
    %v1988 = vpop.f32.mrb[0].mxu0
    %1989 = vmatprep.mubr.bf16.mxu0 0
    %1990 = vmatmul.mubr.bf16.gmra.mrb[0].mxu0 %v1923
    %v1991 = vpop.f32.mrb[0].mxu0
    %v1992 = vadd.f32 0.0, %v1991
    %v1993 = vpop.f32.mrb[0].mxu0
    %v1994 = vpop.f32.mrb[0].mxu0
    %v1995 = vadd.f32 0.0, %v1994
    %v1996 = vpop.f32.mrb[0].mxu0
    %1997 = vmatprep.mubr.bf16.mxu0 0
    %1998 = vmatmul.mubr.bf16.gmra.mrb[0].mxu0 %v1926
    %v1999 = vpop.f32.mrb[0].mxu0
    %v2000 = vadd.f32 0.0, %v1999
    %v2001 = vpop.f32.mrb[0].mxu0
    %v2002 = vpop.f32.mrb[0].mxu0
    %v2003 = vadd.f32 0.0, %v2002
    %v2004 = vpop.f32.mrb[0].mxu0
    %2005 = vmatprep.mubr.bf16.mxu0 0
    %2006 = vmatmul.mubr.bf16.gmra.mrb[0].mxu0 %v1929
    %v2007 = vpop.f32.mrb[0].mxu0
    %v2008 = vadd.f32 0.0, %v2007
    %v2009 = vpop.f32.mrb[0].mxu0
    %v2010 = vpop.f32.mrb[0].mxu0
    %v2011 = vadd.f32 0.0, %v2010
    %v2012 = vpop.f32.mrb[0].mxu0
    %2013 = vmatprep.mubr.bf16.mxu0 0
    %2014 = vmatmul.mubr.bf16.gmra.mrb[0].mxu0 %v1932
    %v2015 = vpop.f32.mrb[0].mxu0
    %v2016 = vadd.f32 0.0, %v2015
    %v2017 = vpop.f32.mrb[0].mxu0
    %v2018 = vpop.f32.mrb[0].mxu0
    %v2019 = vadd.f32 0.0, %v2018
    %v2020 = vpop.f32.mrb[0].mxu0
    %2021 = vmatprep.mubr.bf16.mxu0 0
    %2022 = vmatmul.mubr.bf16.gmra.mrb[0].mxu0 %v1935
    %v2023 = vpop.f32.mrb[0].mxu0
    %v2024 = vadd.f32 0.0, %v2023
    %v2025 = vpop.f32.mrb[0].mxu0
    %v2026 = vpop.f32.mrb[0].mxu0
    %v2027 = vadd.f32 0.0, %v2026
    %v2028 = vpop.f32.mrb[0].mxu0
    %2029 = vmatprep.mubr.bf16.mxu0 0
    %2030 = vmatmul.mubr.bf16.gmra.mrb[0].mxu0 %v1938
    %v2031 = vpop.f32.mrb[0].mxu0
    %v2032 = vadd.f32 0.0, %v2031
    %v2033 = vpop.f32.mrb[0].mxu0
    %v2034 = vpop.f32.mrb[0].mxu0
    %v2035 = vadd.f32 0.0, %v2034
    %v2036 = vpop.f32.mrb[0].mxu0
    %2037 = vmatprep.mubr.bf16.mxu0 0
    %2038 = vmatmul.mubr.bf16.gmra.mrb[0].mxu0 %v1941
    %v2039 = vpop.f32.mrb[0].mxu0
    %v2040 = vadd.f32 0.0, %v2039
    %v2041 = vpop.f32.mrb[0].mxu0
    %v2042 = vpop.f32.mrb[0].mxu0
    %v2043 = vadd.f32 0.0, %v2042
    %v2044 = vpop.f32.mrb[0].mxu0
    %2045 = vmatprep.mubr.bf16.mxu0 0
    %2046 = vmatmul.mubr.bf16.gmra.mrb[0].mxu0 %v1944
    %v2047 = vpop.f32.mrb[0].mxu0
    %v2048 = vadd.f32 0.0, %v2047
    %v2049 = vpop.f32.mrb[0].mxu0
    %v2050 = vpop.f32.mrb[0].mxu0
    %v2051 = vadd.f32 0.0, %v2050
    %v2052 = vpop.f32.mrb[0].mxu0
    %2053 = vmatprep.mubr.bf16.mxu0 0
    %2054 = vmatmul.mubr.bf16.gmra.mrb[0].mxu0 %v1947
    %v2055 = vpop.f32.mrb[0].mxu0
    %v2056 = vadd.f32 0.0, %v2055
    %v2057 = vpop.f32.mrb[0].mxu0
    %v2058 = vpop.f32.mrb[0].mxu0
    %v2059 = vadd.f32 0.0, %v2058
    %v2060 = vpop.f32.mrb[0].mxu0
    %2061 = vdwg.mxu0
    %2062 = vrot.lane.b32.xlu0 %v1984, 2
    %v2063 = vpop.permute.xlu0 %2062
    %2064 = vrot.lane.b32.xlu0 %v1987, 2
    %v2065 = vpop.permute.xlu0 %2064
    %2066 = vrot.lane.b32.xlu0 %v1992, 2
    %v2067 = vpop.permute.xlu0 %2066
    %2068 = vrot.lane.b32.xlu0 %v1995, 2
    %v2069 = vpop.permute.xlu0 %2068
    %v2070 = vmul.f32 %v2063, %v485
    %v2071 = vmul.f32 %v2065, %v485
    %v2072 = vmul.f32 %v2067, %v485
    %v2073 = vmul.f32 %v2069, %v485
    %v2074 = vadd.f32 %v2016, %v2070
    %v2075 = vadd.f32 %v2019, %v2071
    %v2076 = vadd.f32 %v2024, %v2072
    %v2077 = vadd.f32 %v2027, %v2073
    %2078 = vrot.lane.b32.xlu0 %v2000, 1
    %v2079 = vpop.permute.xlu0 %2078
    %2080 = vrot.lane.b32.xlu0 %v2003, 1
    %v2081 = vpop.permute.xlu0 %2080
    %2082 = vrot.lane.b32.xlu0 %v2008, 1
    %v2083 = vpop.permute.xlu0 %2082
    %2084 = vrot.lane.b32.xlu0 %v2011, 1
    %v2085 = vpop.permute.xlu0 %2084
    %v2086 = vmul.f32 %v2079, %v505
    %v2087 = vmul.f32 %v2081, %v505
    %v2088 = vmul.f32 %v2083, %v505
    %v2089 = vmul.f32 %v2085, %v505
    %v2090 = vadd.f32 %v2074, %v2086
    %v2091 = vadd.f32 %v2075, %v2087
    %v2092 = vadd.f32 %v2076, %v2088
    %v2093 = vadd.f32 %v2077, %v2089
    %2094 = vrot.lane.b32.xlu0 %v2032, 127
    %v2095 = vpop.permute.xlu0 %2094
    %2096 = vrot.lane.b32.xlu0 %v2035, 127
    %v2097 = vpop.permute.xlu0 %2096
    %2098 = vrot.lane.b32.xlu0 %v2040, 127
    %v2099 = vpop.permute.xlu0 %2098
    %2100 = vrot.lane.b32.xlu0 %v2043, 127
    %v2101 = vpop.permute.xlu0 %2100
    %v2102 = vmul.f32 %v2095, %v525
    %v2103 = vmul.f32 %v2097, %v525
    %v2104 = vmul.f32 %v2099, %v525
    %v2105 = vmul.f32 %v2101, %v525
    %v2106 = vadd.f32 %v2090, %v2102
    %v2107 = vadd.f32 %v2091, %v2103
    %v2108 = vadd.f32 %v2092, %v2104
    %v2109 = vadd.f32 %v2093, %v2105
    %2110 = vrot.lane.b32.xlu0 %v2048, 126
    %v2111 = vpop.permute.xlu0 %2110
    %2112 = vrot.lane.b32.xlu0 %v2051, 126
    %v2113 = vpop.permute.xlu0 %2112
    %2114 = vrot.lane.b32.xlu0 %v2056, 126
    %v2115 = vpop.permute.xlu0 %2114
    %2116 = vrot.lane.b32.xlu0 %v2059, 126
    %v2117 = vpop.permute.xlu0 %2116
    %v2118 = vmul.f32 %v2111, %v545
    %v2119 = vmul.f32 %v2113, %v545
    %v2120 = vmul.f32 %v2115, %v545
    %v2121 = vmul.f32 %v2117, %v545
    %v2122 = vadd.f32 %v2106, %v2118
    %v2123 = vadd.f32 %v2107, %v2119
    %v2124 = vadd.f32 %v2108, %v2120
    %v2125 = vadd.f32 %v2109, %v2121
    %s2126 = scalar_lea.vmem [#allocation8], 160
    %v2127 = vld [vmem:[%s2126] sm:$0xff]
    %v2128 = vld [vmem:[%s2126 + $0x8] sm:$0xff]
    %v2129 = vld [vmem:[%s2126 + $0x10] sm:$0xff]
    %v2130 = vld [vmem:[%s2126 + $0x18] sm:$0xff]
    %2132 = vset.pattern.permute.xlu0 0
    %2133 = vperm.xlu0 %2132, %v2127
    %v2134 = vpop.permute.xlu0 %2133
    %2137 = vset.pattern.permute.xlu0 0
    %2138 = vperm.xlu0 %2137, %v2128
    %v2139 = vpop.permute.xlu0 %2138
    %2142 = vset.pattern.permute.xlu0 0
    %2143 = vperm.xlu0 %2142, %v2129
    %v2144 = vpop.permute.xlu0 %2143
    %2147 = vset.pattern.permute.xlu0 0
    %2148 = vperm.xlu0 %2147, %v2130
    %v2149 = vpop.permute.xlu0 %2148
    %v2151 = vadd.f32 %v2122, %v2134
    %v2152 = vadd.f32 %v2123, %v2139
    %v2153 = vadd.f32 %v2124, %v2144
    %v2154 = vadd.f32 %v2125, %v2149
    %v2155 = vadd.f32 %v1525, %v2151
    %v2156 = vadd.f32 %v1526, %v2152
    %v2157 = vadd.f32 %v1527, %v2153
    %v2158 = vadd.f32 %v1528, %v2154
    %v2159 = vmax.f32 %v2155, 0.0
    %v2160 = vmax.f32 %v2156, 0.0
    %v2161 = vmax.f32 %v2157, 0.0
    %v2162 = vmax.f32 %v2158, 0.0
    %s2163 = scalar_lea.vmem [#allocation7], 480
    %v2164 = vld [vmem:[%s2163] sm:$0xf]
    %v2165 = vld [vmem:[%s2163 + $0x4] sm:$0xf]
    %v2166 = vld [vmem:[%s2163 + $0x8] sm:$0xf]
    %v2167 = vld [vmem:[%s2163 + $0xc] sm:$0xf]
    %v2168 = vld [vmem:[%s2163 + $0x10] sm:$0xf]
    %v2169 = vld [vmem:[%s2163 + $0x14] sm:$0xf]
    %v2170 = vld [vmem:[%s2163 + $0x18] sm:$0xf]
    %v2171 = vld [vmem:[%s2163 + $0x1c] sm:$0xf]
    %v2172 = vld [vmem:[%s2163 + $0x20] sm:$0xf]
    %v2173 = vld [vmem:[%s2163 + $0x24] sm:$0xf]
    %v2174 = vld [vmem:[%s2163 + $0x28] sm:$0xf]
    %v2175 = vld [vmem:[%s2163 + $0x2c] sm:$0xf]
    %v2176 = vld [vmem:[%s2163 + $0x30] sm:$0xf]
    %v2177 = vld [vmem:[%s2163 + $0x34] sm:$0xf]
    %v2178 = vld [vmem:[%s2163 + $0x38] sm:$0xf]
    %v2179 = vld [vmem:[%s2163 + $0x3c] sm:$0xf]
    %v2180 = vld [vmem:[%s2163 + $0x40] sm:$0xf]
    %v2181 = vld [vmem:[%s2163 + $0x44] sm:$0xf]
    %v2182 = vld [vmem:[%s2163 + $0x48] sm:$0xf]
    %v2183 = vld [vmem:[%s2163 + $0x4c] sm:$0xf]
    %v2184 = vpack.c.bf16 %v2160, %v2159
    %v2185 = vpack.c.bf16 %v2162, %v2161
    %v2206 = vunpack.c.l.b16 %v2164
    %v2207 = vunpack.c.l.b16 %v2165
    %v2208 = vunpack.c.l.b16 %v2166
    %v2209 = vunpack.c.l.b16 %v2167
    %v2210 = vunpack.c.l.b16 %v2168
    %v2211 = vunpack.c.l.b16 %v2169
    %v2212 = vunpack.c.l.b16 %v2170
    %v2213 = vunpack.c.l.b16 %v2171
    %v2214 = vunpack.c.l.b16 %v2172
    %v2215 = vunpack.c.l.b16 %v2173
    %v2216 = vunpack.c.l.b16 %v2174
    %v2217 = vunpack.c.l.b16 %v2175
    %v2218 = vunpack.c.l.b16 %v2176
    %v2219 = vunpack.c.l.b16 %v2177
    %v2220 = vunpack.c.l.b16 %v2178
    %v2221 = vunpack.c.l.b16 %v2179
    %v2222 = vunpack.c.l.b16 %v2180
    %v2223 = vunpack.c.l.b16 %v2181
    %v2224 = vunpack.c.l.b16 %v2182
    %v2225 = vunpack.c.l.b16 %v2183
    %v2226 = vpack.c.b16 %v2207, %v2206
    %v2227 = vpack.c.b16 %v2209, %v2208
    %v2228 = vpack.c.b16 %v2211, %v2210
    %v2229 = vpack.c.b16 %v2213, %v2212
    %v2230 = vpack.c.b16 %v2215, %v2214
    %v2231 = vpack.c.b16 %v2217, %v2216
    %v2232 = vpack.c.b16 %v2219, %v2218
    %v2233 = vpack.c.b16 %v2221, %v2220
    %v2234 = vpack.c.b16 %v2223, %v2222
    %v2235 = vpack.c.b16 %v2225, %v2224
    %v2237 = vsel %vm330, %v2226, 0
    %v2240 = vsel %vm330, %v2227, 0
    %v2243 = vsel %vm330, %v2228, 0
    %v2246 = vsel %vm330, %v2229, 0
    %v2249 = vsel %vm330, %v2230, 0
    %v2252 = vsel %vm330, %v2231, 0
    %v2255 = vsel %vm330, %v2232, 0
    %v2258 = vsel %vm330, %v2233, 0
    %v2261 = vsel %vm330, %v2234, 0
    %v2264 = vsel %vm330, %v2235, 0
    %2266 = vmatprep.subr.bf16.mxu0 0
    %2267 = vmatpush1.bf16.msra.mxu0 %v2184
    %2268 = vmatprep.subr.bf16.mxu0 0
    %2269 = vmatpush1.bf16.msra.mxu0 %v2185
    %2270 = vmatprep.subr.bf16.mxu0 0
    %2271 = vmatpush1.bf16.msra.mxu0 0
    %2272 = vmatprep.subr.bf16.mxu0 0
    %2273 = vmatpush1.bf16.msra.mxu0 0
    %2274 = vmatprep.subr.bf16.mxu0 0
    %2275 = vmatpush1.bf16.msra.mxu0 0
    %2276 = vmatprep.subr.bf16.mxu0 0
    %2277 = vmatpush1.bf16.msra.mxu0 0
    %2278 = vmatprep.subr.bf16.mxu0 0
    %2279 = vmatpush1.bf16.msra.mxu0 0
    %2280 = vmatprep.subr.bf16.mxu0 0
    %2281 = vmatpush1.bf16.msra.mxu0 0
    %2282 = vmatprep.subr.bf16.mxu0 0
    %2283 = vmatpush1.bf16.msra.mxu0 0
    %2284 = vmatprep.subr.bf16.mxu0 0
    %2285 = vmatpush1.bf16.msra.mxu0 0
    %2286 = vmatprep.subr.bf16.mxu0 0
    %2287 = vmatpush1.bf16.msra.mxu0 0
    %2288 = vmatprep.subr.bf16.mxu0 0
    %2289 = vmatpush1.bf16.msra.mxu0 0
    %2290 = vmatprep.subr.bf16.mxu0 0
    %2291 = vmatpush1.bf16.msra.mxu0 0
    %2292 = vmatprep.subr.bf16.mxu0 0
    %2293 = vmatpush1.bf16.msra.mxu0 0
    %2294 = vmatprep.subr.bf16.mxu0 0
    %2295 = vmatpush1.bf16.msra.mxu0 0
    %2296 = vmatprep.subr.bf16.mxu0 0
    %2297 = vmatpush1.bf16.msra.mxu0 0
    %2298 = vmatprep.mubr.bf16.mxu0 0
    %2299 = vmatmul.mubr.bf16.gmra.mrb[0].mxu0 %v2237
    %v2300 = vpop.f32.mrb[0].mxu0
    %v2301 = vadd.f32 0.0, %v2300
    %v2302 = vpop.f32.mrb[0].mxu0
    %v2303 = vpop.f32.mrb[0].mxu0
    %v2304 = vadd.f32 0.0, %v2303
    %v2305 = vpop.f32.mrb[0].mxu0
    %2306 = vmatprep.mubr.bf16.mxu0 0
    %2307 = vmatmul.mubr.bf16.gmra.mrb[0].mxu0 %v2240
    %v2308 = vpop.f32.mrb[0].mxu0
    %v2309 = vadd.f32 0.0, %v2308
    %v2310 = vpop.f32.mrb[0].mxu0
    %v2311 = vpop.f32.mrb[0].mxu0
    %v2312 = vadd.f32 0.0, %v2311
    %v2313 = vpop.f32.mrb[0].mxu0
    %2314 = vmatprep.mubr.bf16.mxu0 0
    %2315 = vmatmul.mubr.bf16.gmra.mrb[0].mxu0 %v2243
    %v2316 = vpop.f32.mrb[0].mxu0
    %v2317 = vadd.f32 0.0, %v2316
    %v2318 = vpop.f32.mrb[0].mxu0
    %v2319 = vpop.f32.mrb[0].mxu0
    %v2320 = vadd.f32 0.0, %v2319
    %v2321 = vpop.f32.mrb[0].mxu0
    %2322 = vmatprep.mubr.bf16.mxu0 0
    %2323 = vmatmul.mubr.bf16.gmra.mrb[0].mxu0 %v2246
    %v2324 = vpop.f32.mrb[0].mxu0
    %v2325 = vadd.f32 0.0, %v2324
    %v2326 = vpop.f32.mrb[0].mxu0
    %v2327 = vpop.f32.mrb[0].mxu0
    %v2328 = vadd.f32 0.0, %v2327
    %v2329 = vpop.f32.mrb[0].mxu0
    %2330 = vmatprep.mubr.bf16.mxu0 0
    %2331 = vmatmul.mubr.bf16.gmra.mrb[0].mxu0 %v2249
    %v2332 = vpop.f32.mrb[0].mxu0
    %v2333 = vadd.f32 0.0, %v2332
    %v2334 = vpop.f32.mrb[0].mxu0
    %v2335 = vpop.f32.mrb[0].mxu0
    %v2336 = vadd.f32 0.0, %v2335
    %v2337 = vpop.f32.mrb[0].mxu0
    %2338 = vmatprep.mubr.bf16.mxu0 0
    %2339 = vmatmul.mubr.bf16.gmra.mrb[0].mxu0 %v2252
    %v2340 = vpop.f32.mrb[0].mxu0
    %v2341 = vadd.f32 0.0, %v2340
    %v2342 = vpop.f32.mrb[0].mxu0
    %v2343 = vpop.f32.mrb[0].mxu0
    %v2344 = vadd.f32 0.0, %v2343
    %v2345 = vpop.f32.mrb[0].mxu0
    %2346 = vmatprep.mubr.bf16.mxu0 0
    %2347 = vmatmul.mubr.bf16.gmra.mrb[0].mxu0 %v2255
    %v2348 = vpop.f32.mrb[0].mxu0
    %v2349 = vadd.f32 0.0, %v2348
    %v2350 = vpop.f32.mrb[0].mxu0
    %v2351 = vpop.f32.mrb[0].mxu0
    %v2352 = vadd.f32 0.0, %v2351
    %v2353 = vpop.f32.mrb[0].mxu0
    %2354 = vmatprep.mubr.bf16.mxu0 0
    %2355 = vmatmul.mubr.bf16.gmra.mrb[0].mxu0 %v2258
    %v2356 = vpop.f32.mrb[0].mxu0
    %v2357 = vadd.f32 0.0, %v2356
    %v2358 = vpop.f32.mrb[0].mxu0
    %v2359 = vpop.f32.mrb[0].mxu0
    %v2360 = vadd.f32 0.0, %v2359
    %v2361 = vpop.f32.mrb[0].mxu0
    %2362 = vmatprep.mubr.bf16.mxu0 0
    %2363 = vmatmul.mubr.bf16.gmra.mrb[0].mxu0 %v2261
    %v2364 = vpop.f32.mrb[0].mxu0
    %v2365 = vadd.f32 0.0, %v2364
    %v2366 = vpop.f32.mrb[0].mxu0
    %v2367 = vpop.f32.mrb[0].mxu0
    %v2368 = vadd.f32 0.0, %v2367
    %v2369 = vpop.f32.mrb[0].mxu0
    %2370 = vmatprep.mubr.bf16.mxu0 0
    %2371 = vmatmul.mubr.bf16.gmra.mrb[0].mxu0 %v2264
    %v2372 = vpop.f32.mrb[0].mxu0
    %v2373 = vadd.f32 0.0, %v2372
    %v2374 = vpop.f32.mrb[0].mxu0
    %v2375 = vpop.f32.mrb[0].mxu0
    %v2376 = vadd.f32 0.0, %v2375
    %v2377 = vpop.f32.mrb[0].mxu0
    %2378 = vdwg.mxu0
    %2379 = vrot.lane.b32.xlu0 %v2301, 2
    %v2380 = vpop.permute.xlu0 %2379
    %2381 = vrot.lane.b32.xlu0 %v2304, 2
    %v2382 = vpop.permute.xlu0 %2381
    %2383 = vrot.lane.b32.xlu0 %v2309, 2
    %v2384 = vpop.permute.xlu0 %2383
    %2385 = vrot.lane.b32.xlu0 %v2312, 2
    %v2386 = vpop.permute.xlu0 %2385
    %v2387 = vmul.f32 %v2380, %v485
    %v2388 = vmul.f32 %v2382, %v485
    %v2389 = vmul.f32 %v2384, %v485
    %v2390 = vmul.f32 %v2386, %v485
    %v2391 = vadd.f32 %v2333, %v2387
    %v2392 = vadd.f32 %v2336, %v2388
    %v2393 = vadd.f32 %v2341, %v2389
    %v2394 = vadd.f32 %v2344, %v2390
    %2395 = vrot.lane.b32.xlu0 %v2317, 1
    %v2396 = vpop.permute.xlu0 %2395
    %2397 = vrot.lane.b32.xlu0 %v2320, 1
    %v2398 = vpop.permute.xlu0 %2397
    %2399 = vrot.lane.b32.xlu0 %v2325, 1
    %v2400 = vpop.permute.xlu0 %2399
    %2401 = vrot.lane.b32.xlu0 %v2328, 1
    %v2402 = vpop.permute.xlu0 %2401
    %v2403 = vmul.f32 %v2396, %v505
    %v2404 = vmul.f32 %v2398, %v505
    %v2405 = vmul.f32 %v2400, %v505
    %v2406 = vmul.f32 %v2402, %v505
    %v2407 = vadd.f32 %v2391, %v2403
    %v2408 = vadd.f32 %v2392, %v2404
    %v2409 = vadd.f32 %v2393, %v2405
    %v2410 = vadd.f32 %v2394, %v2406
    %2411 = vrot.lane.b32.xlu0 %v2349, 127
    %v2412 = vpop.permute.xlu0 %2411
    %2413 = vrot.lane.b32.xlu0 %v2352, 127
    %v2414 = vpop.permute.xlu0 %2413
    %2415 = vrot.lane.b32.xlu0 %v2357, 127
    %v2416 = vpop.permute.xlu0 %2415
    %2417 = vrot.lane.b32.xlu0 %v2360, 127
    %v2418 = vpop.permute.xlu0 %2417
    %v2419 = vmul.f32 %v2412, %v525
    %v2420 = vmul.f32 %v2414, %v525
    %v2421 = vmul.f32 %v2416, %v525
    %v2422 = vmul.f32 %v2418, %v525
    %v2423 = vadd.f32 %v2407, %v2419
    %v2424 = vadd.f32 %v2408, %v2420
    %v2425 = vadd.f32 %v2409, %v2421
    %v2426 = vadd.f32 %v2410, %v2422
    %2427 = vrot.lane.b32.xlu0 %v2365, 126
    %v2428 = vpop.permute.xlu0 %2427
    %2429 = vrot.lane.b32.xlu0 %v2368, 126
    %v2430 = vpop.permute.xlu0 %2429
    %2431 = vrot.lane.b32.xlu0 %v2373, 126
    %v2432 = vpop.permute.xlu0 %2431
    %2433 = vrot.lane.b32.xlu0 %v2376, 126
    %v2434 = vpop.permute.xlu0 %2433
    %v2435 = vmul.f32 %v2428, %v545
    %v2436 = vmul.f32 %v2430, %v545
    %v2437 = vmul.f32 %v2432, %v545
    %v2438 = vmul.f32 %v2434, %v545
    %v2439 = vadd.f32 %v2423, %v2435
    %v2440 = vadd.f32 %v2424, %v2436
    %v2441 = vadd.f32 %v2425, %v2437
    %v2442 = vadd.f32 %v2426, %v2438
    %s2443 = scalar_lea.vmem [#allocation8], 192
    %v2444 = vld [vmem:[%s2443] sm:$0xff]
    %v2445 = vld [vmem:[%s2443 + $0x8] sm:$0xff]
    %v2446 = vld [vmem:[%s2443 + $0x10] sm:$0xff]
    %v2447 = vld [vmem:[%s2443 + $0x18] sm:$0xff]
    %2449 = vset.pattern.permute.xlu0 0
    %2450 = vperm.xlu0 %2449, %v2444
    %v2451 = vpop.permute.xlu0 %2450
    %2454 = vset.pattern.permute.xlu0 0
    %2455 = vperm.xlu0 %2454, %v2445
    %v2456 = vpop.permute.xlu0 %2455
    %2459 = vset.pattern.permute.xlu0 0
    %2460 = vperm.xlu0 %2459, %v2446
    %v2461 = vpop.permute.xlu0 %2460
    %2464 = vset.pattern.permute.xlu0 0
    %2465 = vperm.xlu0 %2464, %v2447
    %v2466 = vpop.permute.xlu0 %2465
    %v2468 = vadd.f32 %v2439, %v2451
    %v2469 = vadd.f32 %v2440, %v2456
    %v2470 = vadd.f32 %v2441, %v2461
    %v2471 = vadd.f32 %v2442, %v2466
    %v2472 = vmax.f32 %v2468, 0.0
    %v2473 = vmax.f32 %v2469, 0.0
    %v2474 = vmax.f32 %v2470, 0.0
    %v2475 = vmax.f32 %v2471, 0.0
    %s2476 = scalar_lea.vmem [#allocation7], 560
    %v2477 = vld [vmem:[%s2476] sm:$0xf]
    %v2478 = vld [vmem:[%s2476 + $0x4] sm:$0xf]
    %v2479 = vld [vmem:[%s2476 + $0x8] sm:$0xf]
    %v2480 = vld [vmem:[%s2476 + $0xc] sm:$0xf]
    %v2481 = vld [vmem:[%s2476 + $0x10] sm:$0xf]
    %v2482 = vld [vmem:[%s2476 + $0x14] sm:$0xf]
    %v2483 = vld [vmem:[%s2476 + $0x18] sm:$0xf]
    %v2484 = vld [vmem:[%s2476 + $0x1c] sm:$0xf]
    %v2485 = vld [vmem:[%s2476 + $0x20] sm:$0xf]
    %v2486 = vld [vmem:[%s2476 + $0x24] sm:$0xf]
    %v2487 = vld [vmem:[%s2476 + $0x28] sm:$0xf]
    %v2488 = vld [vmem:[%s2476 + $0x2c] sm:$0xf]
    %v2489 = vld [vmem:[%s2476 + $0x30] sm:$0xf]
    %v2490 = vld [vmem:[%s2476 + $0x34] sm:$0xf]
    %v2491 = vld [vmem:[%s2476 + $0x38] sm:$0xf]
    %v2492 = vld [vmem:[%s2476 + $0x3c] sm:$0xf]
    %v2493 = vld [vmem:[%s2476 + $0x40] sm:$0xf]
    %v2494 = vld [vmem:[%s2476 + $0x44] sm:$0xf]
    %v2495 = vld [vmem:[%s2476 + $0x48] sm:$0xf]
    %v2496 = vld [vmem:[%s2476 + $0x4c] sm:$0xf]
    %v2497 = vpack.c.bf16 %v2473, %v2472
    %v2498 = vpack.c.bf16 %v2475, %v2474
    %v2519 = vunpack.c.l.b16 %v2477
    %v2520 = vunpack.c.l.b16 %v2478
    %v2521 = vunpack.c.l.b16 %v2479
    %v2522 = vunpack.c.l.b16 %v2480
    %v2523 = vunpack.c.l.b16 %v2481
    %v2524 = vunpack.c.l.b16 %v2482
    %v2525 = vunpack.c.l.b16 %v2483
    %v2526 = vunpack.c.l.b16 %v2484
    %v2527 = vunpack.c.l.b16 %v2485
    %v2528 = vunpack.c.l.b16 %v2486
    %v2529 = vunpack.c.l.b16 %v2487
    %v2530 = vunpack.c.l.b16 %v2488
    %v2531 = vunpack.c.l.b16 %v2489
    %v2532 = vunpack.c.l.b16 %v2490
    %v2533 = vunpack.c.l.b16 %v2491
    %v2534 = vunpack.c.l.b16 %v2492
    %v2535 = vunpack.c.l.b16 %v2493
    %v2536 = vunpack.c.l.b16 %v2494
    %v2537 = vunpack.c.l.b16 %v2495
    %v2538 = vunpack.c.l.b16 %v2496
    %v2539 = vpack.c.b16 %v2520, %v2519
    %v2540 = vpack.c.b16 %v2522, %v2521
    %v2541 = vpack.c.b16 %v2524, %v2523
    %v2542 = vpack.c.b16 %v2526, %v2525
    %v2543 = vpack.c.b16 %v2528, %v2527
    %v2544 = vpack.c.b16 %v2530, %v2529
    %v2545 = vpack.c.b16 %v2532, %v2531
    %v2546 = vpack.c.b16 %v2534, %v2533
    %v2547 = vpack.c.b16 %v2536, %v2535
    %v2548 = vpack.c.b16 %v2538, %v2537
    %v2550 = vsel %vm330, %v2539, 0
    %v2553 = vsel %vm330, %v2540, 0
    %v2556 = vsel %vm330, %v2541, 0
    %v2559 = vsel %vm330, %v2542, 0
    %v2562 = vsel %vm330, %v2543, 0
    %v2565 = vsel %vm330, %v2544, 0
    %v2568 = vsel %vm330, %v2545, 0
    %v2571 = vsel %vm330, %v2546, 0
    %v2574 = vsel %vm330, %v2547, 0
    %v2577 = vsel %vm330, %v2548, 0
    %2579 = vmatprep.subr.bf16.mxu0 0
    %2580 = vmatpush1.bf16.msra.mxu0 %v2497
    %2581 = vmatprep.subr.bf16.mxu0 0
    %2582 = vmatpush1.bf16.msra.mxu0 %v2498
    %2583 = vmatprep.subr.bf16.mxu0 0
    %2584 = vmatpush1.bf16.msra.mxu0 0
    %2585 = vmatprep.subr.bf16.mxu0 0
    %2586 = vmatpush1.bf16.msra.mxu0 0
    %2587 = vmatprep.subr.bf16.mxu0 0
    %2588 = vmatpush1.bf16.msra.mxu0 0
    %2589 = vmatprep.subr.bf16.mxu0 0
    %2590 = vmatpush1.bf16.msra.mxu0 0
    %2591 = vmatprep.subr.bf16.mxu0 0
    %2592 = vmatpush1.bf16.msra.mxu0 0
    %2593 = vmatprep.subr.bf16.mxu0 0
    %2594 = vmatpush1.bf16.msra.mxu0 0
    %2595 = vmatprep.subr.bf16.mxu0 0
    %2596 = vmatpush1.bf16.msra.mxu0 0
    %2597 = vmatprep.subr.bf16.mxu0 0
    %2598 = vmatpush1.bf16.msra.mxu0 0
    %2599 = vmatprep.subr.bf16.mxu0 0
    %2600 = vmatpush1.bf16.msra.mxu0 0
    %2601 = vmatprep.subr.bf16.mxu0 0
    %2602 = vmatpush1.bf16.msra.mxu0 0
    %2603 = vmatprep.subr.bf16.mxu0 0
    %2604 = vmatpush1.bf16.msra.mxu0 0
    %2605 = vmatprep.subr.bf16.mxu0 0
    %2606 = vmatpush1.bf16.msra.mxu0 0
    %2607 = vmatprep.subr.bf16.mxu0 0
    %2608 = vmatpush1.bf16.msra.mxu0 0
    %2609 = vmatprep.subr.bf16.mxu0 0
    %2610 = vmatpush1.bf16.msra.mxu0 0
    %2611 = vmatprep.mubr.bf16.mxu0 0
    %2612 = vmatmul.mubr.bf16.gmra.mrb[0].mxu0 %v2550
    %v2613 = vpop.f32.mrb[0].mxu0
    %v2614 = vadd.f32 0.0, %v2613
    %v2615 = vpop.f32.mrb[0].mxu0
    %v2616 = vpop.f32.mrb[0].mxu0
    %v2617 = vadd.f32 0.0, %v2616
    %v2618 = vpop.f32.mrb[0].mxu0
    %2619 = vmatprep.mubr.bf16.mxu0 0
    %2620 = vmatmul.mubr.bf16.gmra.mrb[0].mxu0 %v2553
    %v2621 = vpop.f32.mrb[0].mxu0
    %v2622 = vadd.f32 0.0, %v2621
    %v2623 = vpop.f32.mrb[0].mxu0
    %v2624 = vpop.f32.mrb[0].mxu0
    %v2625 = vadd.f32 0.0, %v2624
    %v2626 = vpop.f32.mrb[0].mxu0
    %2627 = vmatprep.mubr.bf16.mxu0 0
    %2628 = vmatmul.mubr.bf16.gmra.mrb[0].mxu0 %v2556
    %v2629 = vpop.f32.mrb[0].mxu0
    %v2630 = vadd.f32 0.0, %v2629
    %v2631 = vpop.f32.mrb[0].mxu0
    %v2632 = vpop.f32.mrb[0].mxu0
    %v2633 = vadd.f32 0.0, %v2632
    %v2634 = vpop.f32.mrb[0].mxu0
    %2635 = vmatprep.mubr.bf16.mxu0 0
    %2636 = vmatmul.mubr.bf16.gmra.mrb[0].mxu0 %v2559
    %v2637 = vpop.f32.mrb[0].mxu0
    %v2638 = vadd.f32 0.0, %v2637
    %v2639 = vpop.f32.mrb[0].mxu0
    %v2640 = vpop.f32.mrb[0].mxu0
    %v2641 = vadd.f32 0.0, %v2640
    %v2642 = vpop.f32.mrb[0].mxu0
    %2643 = vmatprep.mubr.bf16.mxu0 0
    %2644 = vmatmul.mubr.bf16.gmra.mrb[0].mxu0 %v2562
    %v2645 = vpop.f32.mrb[0].mxu0
    %v2646 = vadd.f32 0.0, %v2645
    %v2647 = vpop.f32.mrb[0].mxu0
    %v2648 = vpop.f32.mrb[0].mxu0
    %v2649 = vadd.f32 0.0, %v2648
    %v2650 = vpop.f32.mrb[0].mxu0
    %2651 = vmatprep.mubr.bf16.mxu0 0
    %2652 = vmatmul.mubr.bf16.gmra.mrb[0].mxu0 %v2565
    %v2653 = vpop.f32.mrb[0].mxu0
    %v2654 = vadd.f32 0.0, %v2653
    %v2655 = vpop.f32.mrb[0].mxu0
    %v2656 = vpop.f32.mrb[0].mxu0
    %v2657 = vadd.f32 0.0, %v2656
    %v2658 = vpop.f32.mrb[0].mxu0
    %2659 = vmatprep.mubr.bf16.mxu0 0
    %2660 = vmatmul.mubr.bf16.gmra.mrb[0].mxu0 %v2568
    %v2661 = vpop.f32.mrb[0].mxu0
    %v2662 = vadd.f32 0.0, %v2661
    %v2663 = vpop.f32.mrb[0].mxu0
    %v2664 = vpop.f32.mrb[0].mxu0
    %v2665 = vadd.f32 0.0, %v2664
    %v2666 = vpop.f32.mrb[0].mxu0
    %2667 = vmatprep.mubr.bf16.mxu0 0
    %2668 = vmatmul.mubr.bf16.gmra.mrb[0].mxu0 %v2571
    %v2669 = vpop.f32.mrb[0].mxu0
    %v2670 = vadd.f32 0.0, %v2669
    %v2671 = vpop.f32.mrb[0].mxu0
    %v2672 = vpop.f32.mrb[0].mxu0
    %v2673 = vadd.f32 0.0, %v2672
    %v2674 = vpop.f32.mrb[0].mxu0
    %2675 = vmatprep.mubr.bf16.mxu0 0
    %2676 = vmatmul.mubr.bf16.gmra.mrb[0].mxu0 %v2574
    %v2677 = vpop.f32.mrb[0].mxu0
    %v2678 = vadd.f32 0.0, %v2677
    %v2679 = vpop.f32.mrb[0].mxu0
    %v2680 = vpop.f32.mrb[0].mxu0
    %v2681 = vadd.f32 0.0, %v2680
    %v2682 = vpop.f32.mrb[0].mxu0
    %2683 = vmatprep.mubr.bf16.mxu0 0
    %2684 = vmatmul.mubr.bf16.gmra.mrb[0].mxu0 %v2577
    %v2685 = vpop.f32.mrb[0].mxu0
    %v2686 = vadd.f32 0.0, %v2685
    %v2687 = vpop.f32.mrb[0].mxu0
    %v2688 = vpop.f32.mrb[0].mxu0
    %v2689 = vadd.f32 0.0, %v2688
    %v2690 = vpop.f32.mrb[0].mxu0
    %2691 = vdwg.mxu0
    %2692 = vrot.lane.b32.xlu0 %v2614, 2
    %v2693 = vpop.permute.xlu0 %2692
    %2694 = vrot.lane.b32.xlu0 %v2617, 2
    %v2695 = vpop.permute.xlu0 %2694
    %2696 = vrot.lane.b32.xlu0 %v2622, 2
    %v2697 = vpop.permute.xlu0 %2696
    %2698 = vrot.lane.b32.xlu0 %v2625, 2
    %v2699 = vpop.permute.xlu0 %2698
    %v2700 = vmul.f32 %v2693, %v485
    %v2701 = vmul.f32 %v2695, %v485
    %v2702 = vmul.f32 %v2697, %v485
    %v2703 = vmul.f32 %v2699, %v485
    %v2704 = vadd.f32 %v2646, %v2700
    %v2705 = vadd.f32 %v2649, %v2701
    %v2706 = vadd.f32 %v2654, %v2702
    %v2707 = vadd.f32 %v2657, %v2703
    %2708 = vrot.lane.b32.xlu0 %v2630, 1
    %v2709 = vpop.permute.xlu0 %2708
    %2710 = vrot.lane.b32.xlu0 %v2633, 1
    %v2711 = vpop.permute.xlu0 %2710
    %2712 = vrot.lane.b32.xlu0 %v2638, 1
    %v2713 = vpop.permute.xlu0 %2712
    %2714 = vrot.lane.b32.xlu0 %v2641, 1
    %v2715 = vpop.permute.xlu0 %2714
    %v2716 = vmul.f32 %v2709, %v505
    %v2717 = vmul.f32 %v2711, %v505
    %v2718 = vmul.f32 %v2713, %v505
    %v2719 = vmul.f32 %v2715, %v505
    %v2720 = vadd.f32 %v2704, %v2716
    %v2721 = vadd.f32 %v2705, %v2717
    %v2722 = vadd.f32 %v2706, %v2718
    %v2723 = vadd.f32 %v2707, %v2719
    %2724 = vrot.lane.b32.xlu0 %v2662, 127
    %v2725 = vpop.permute.xlu0 %2724
    %2726 = vrot.lane.b32.xlu0 %v2665, 127
    %v2727 = vpop.permute.xlu0 %2726
    %2728 = vrot.lane.b32.xlu0 %v2670, 127
    %v2729 = vpop.permute.xlu0 %2728
    %2730 = vrot.lane.b32.xlu0 %v2673, 127
    %v2731 = vpop.permute.xlu0 %2730
    %v2732 = vmul.f32 %v2725, %v525
    %v2733 = vmul.f32 %v2727, %v525
    %v2734 = vmul.f32 %v2729, %v525
    %v2735 = vmul.f32 %v2731, %v525
    %v2736 = vadd.f32 %v2720, %v2732
    %v2737 = vadd.f32 %v2721, %v2733
    %v2738 = vadd.f32 %v2722, %v2734
    %v2739 = vadd.f32 %v2723, %v2735
    %2740 = vrot.lane.b32.xlu0 %v2678, 126
    %v2741 = vpop.permute.xlu0 %2740
    %2742 = vrot.lane.b32.xlu0 %v2681, 126
    %v2743 = vpop.permute.xlu0 %2742
    %2744 = vrot.lane.b32.xlu0 %v2686, 126
    %v2745 = vpop.permute.xlu0 %2744
    %2746 = vrot.lane.b32.xlu0 %v2689, 126
    %v2747 = vpop.permute.xlu0 %2746
    %v2748 = vmul.f32 %v2741, %v545
    %v2749 = vmul.f32 %v2743, %v545
    %v2750 = vmul.f32 %v2745, %v545
    %v2751 = vmul.f32 %v2747, %v545
    %v2752 = vadd.f32 %v2736, %v2748
    %v2753 = vadd.f32 %v2737, %v2749
    %v2754 = vadd.f32 %v2738, %v2750
    %v2755 = vadd.f32 %v2739, %v2751
    %s2756 = scalar_lea.vmem [#allocation8], 224
    %v2757 = vld [vmem:[%s2756] sm:$0xff]
    %v2758 = vld [vmem:[%s2756 + $0x8] sm:$0xff]
    %v2759 = vld [vmem:[%s2756 + $0x10] sm:$0xff]
    %v2760 = vld [vmem:[%s2756 + $0x18] sm:$0xff]
    %2762 = vset.pattern.permute.xlu0 0
    %2763 = vperm.xlu0 %2762, %v2757
    %v2764 = vpop.permute.xlu0 %2763
    %2767 = vset.pattern.permute.xlu0 0
    %2768 = vperm.xlu0 %2767, %v2758
    %v2769 = vpop.permute.xlu0 %2768
    %2772 = vset.pattern.permute.xlu0 0
    %2773 = vperm.xlu0 %2772, %v2759
    %v2774 = vpop.permute.xlu0 %2773
    %2777 = vset.pattern.permute.xlu0 0
    %2778 = vperm.xlu0 %2777, %v2760
    %v2779 = vpop.permute.xlu0 %2778
    %v2781 = vadd.f32 %v2752, %v2764
    %v2782 = vadd.f32 %v2753, %v2769
    %v2783 = vadd.f32 %v2754, %v2774
    %v2784 = vadd.f32 %v2755, %v2779
    %v2785 = vadd.f32 %v2155, %v2781
    %v2786 = vadd.f32 %v2156, %v2782
    %v2787 = vadd.f32 %v2157, %v2783
    %v2788 = vadd.f32 %v2158, %v2784
    %v2789 = vmax.f32 %v2785, 0.0
    %v2790 = vmax.f32 %v2786, 0.0
    %v2791 = vmax.f32 %v2787, 0.0
    %v2792 = vmax.f32 %v2788, 0.0
    %s2793 = scalar_lea.vmem [#allocation7], 640
    %v2794 = vld [vmem:[%s2793] sm:$0xf]
    %v2795 = vld [vmem:[%s2793 + $0x4] sm:$0xf]
    %v2796 = vld [vmem:[%s2793 + $0x8] sm:$0xf]
    %v2797 = vld [vmem:[%s2793 + $0xc] sm:$0xf]
    %v2798 = vld [vmem:[%s2793 + $0x10] sm:$0xf]
    %v2799 = vld [vmem:[%s2793 + $0x14] sm:$0xf]
    %v2800 = vld [vmem:[%s2793 + $0x18] sm:$0xf]
    %v2801 = vld [vmem:[%s2793 + $0x1c] sm:$0xf]
    %v2802 = vld [vmem:[%s2793 + $0x20] sm:$0xf]
    %v2803 = vld [vmem:[%s2793 + $0x24] sm:$0xf]
    %v2804 = vld [vmem:[%s2793 + $0x28] sm:$0xf]
    %v2805 = vld [vmem:[%s2793 + $0x2c] sm:$0xf]
    %v2806 = vld [vmem:[%s2793 + $0x30] sm:$0xf]
    %v2807 = vld [vmem:[%s2793 + $0x34] sm:$0xf]
    %v2808 = vld [vmem:[%s2793 + $0x38] sm:$0xf]
    %v2809 = vld [vmem:[%s2793 + $0x3c] sm:$0xf]
    %v2810 = vld [vmem:[%s2793 + $0x40] sm:$0xf]
    %v2811 = vld [vmem:[%s2793 + $0x44] sm:$0xf]
    %v2812 = vld [vmem:[%s2793 + $0x48] sm:$0xf]
    %v2813 = vld [vmem:[%s2793 + $0x4c] sm:$0xf]
    %v2814 = vpack.c.bf16 %v2790, %v2789
    %v2815 = vpack.c.bf16 %v2792, %v2791
    %v2836 = vunpack.c.l.b16 %v2794
    %v2837 = vunpack.c.l.b16 %v2795
    %v2838 = vunpack.c.l.b16 %v2796
    %v2839 = vunpack.c.l.b16 %v2797
    %v2840 = vunpack.c.l.b16 %v2798
    %v2841 = vunpack.c.l.b16 %v2799
    %v2842 = vunpack.c.l.b16 %v2800
    %v2843 = vunpack.c.l.b16 %v2801
    %v2844 = vunpack.c.l.b16 %v2802
    %v2845 = vunpack.c.l.b16 %v2803
    %v2846 = vunpack.c.l.b16 %v2804
    %v2847 = vunpack.c.l.b16 %v2805
    %v2848 = vunpack.c.l.b16 %v2806
    %v2849 = vunpack.c.l.b16 %v2807
    %v2850 = vunpack.c.l.b16 %v2808
    %v2851 = vunpack.c.l.b16 %v2809
    %v2852 = vunpack.c.l.b16 %v2810
    %v2853 = vunpack.c.l.b16 %v2811
    %v2854 = vunpack.c.l.b16 %v2812
    %v2855 = vunpack.c.l.b16 %v2813
    %v2856 = vpack.c.b16 %v2837, %v2836
    %v2857 = vpack.c.b16 %v2839, %v2838
    %v2858 = vpack.c.b16 %v2841, %v2840
    %v2859 = vpack.c.b16 %v2843, %v2842
    %v2860 = vpack.c.b16 %v2845, %v2844
    %v2861 = vpack.c.b16 %v2847, %v2846
    %v2862 = vpack.c.b16 %v2849, %v2848
    %v2863 = vpack.c.b16 %v2851, %v2850
    %v2864 = vpack.c.b16 %v2853, %v2852
    %v2865 = vpack.c.b16 %v2855, %v2854
    %v2867 = vsel %vm330, %v2856, 0
    %v2870 = vsel %vm330, %v2857, 0
    %v2873 = vsel %vm330, %v2858, 0
    %v2876 = vsel %vm330, %v2859, 0
    %v2879 = vsel %vm330, %v2860, 0
    %v2882 = vsel %vm330, %v2861, 0
    %v2885 = vsel %vm330, %v2862, 0
    %v2888 = vsel %vm330, %v2863, 0
    %v2891 = vsel %vm330, %v2864, 0
    %v2894 = vsel %vm330, %v2865, 0
    %2896 = vmatprep.subr.bf16.mxu0 0
    %2897 = vmatpush1.bf16.msra.mxu0 %v2814
    %2898 = vmatprep.subr.bf16.mxu0 0
    %2899 = vmatpush1.bf16.msra.mxu0 %v2815
    %2900 = vmatprep.subr.bf16.mxu0 0
    %2901 = vmatpush1.bf16.msra.mxu0 0
    %2902 = vmatprep.subr.bf16.mxu0 0
    %2903 = vmatpush1.bf16.msra.mxu0 0
    %2904 = vmatprep.subr.bf16.mxu0 0
    %2905 = vmatpush1.bf16.msra.mxu0 0
    %2906 = vmatprep.subr.bf16.mxu0 0
    %2907 = vmatpush1.bf16.msra.mxu0 0
    %2908 = vmatprep.subr.bf16.mxu0 0
    %2909 = vmatpush1.bf16.msra.mxu0 0
    %2910 = vmatprep.subr.bf16.mxu0 0
    %2911 = vmatpush1.bf16.msra.mxu0 0
    %2912 = vmatprep.subr.bf16.mxu0 0
    %2913 = vmatpush1.bf16.msra.mxu0 0
    %2914 = vmatprep.subr.bf16.mxu0 0
    %2915 = vmatpush1.bf16.msra.mxu0 0
    %2916 = vmatprep.subr.bf16.mxu0 0
    %2917 = vmatpush1.bf16.msra.mxu0 0
    %2918 = vmatprep.subr.bf16.mxu0 0
    %2919 = vmatpush1.bf16.msra.mxu0 0
    %2920 = vmatprep.subr.bf16.mxu0 0
    %2921 = vmatpush1.bf16.msra.mxu0 0
    %2922 = vmatprep.subr.bf16.mxu0 0
    %2923 = vmatpush1.bf16.msra.mxu0 0
    %2924 = vmatprep.subr.bf16.mxu0 0
    %2925 = vmatpush1.bf16.msra.mxu0 0
    %2926 = vmatprep.subr.bf16.mxu0 0
    %2927 = vmatpush1.bf16.msra.mxu0 0
    %2928 = vmatprep.mubr.bf16.mxu0 0
    %2929 = vmatmul.mubr.bf16.gmra.mrb[0].mxu0 %v2867
    %v2930 = vpop.f32.mrb[0].mxu0
    %v2931 = vadd.f32 0.0, %v2930
    %v2932 = vpop.f32.mrb[0].mxu0
    %v2933 = vpop.f32.mrb[0].mxu0
    %v2934 = vadd.f32 0.0, %v2933
    %v2935 = vpop.f32.mrb[0].mxu0
    %2936 = vmatprep.mubr.bf16.mxu0 0
    %2937 = vmatmul.mubr.bf16.gmra.mrb[0].mxu0 %v2870
    %v2938 = vpop.f32.mrb[0].mxu0
    %v2939 = vadd.f32 0.0, %v2938
    %v2940 = vpop.f32.mrb[0].mxu0
    %v2941 = vpop.f32.mrb[0].mxu0
    %v2942 = vadd.f32 0.0, %v2941
    %v2943 = vpop.f32.mrb[0].mxu0
    %2944 = vmatprep.mubr.bf16.mxu0 0
    %2945 = vmatmul.mubr.bf16.gmra.mrb[0].mxu0 %v2873
    %v2946 = vpop.f32.mrb[0].mxu0
    %v2947 = vadd.f32 0.0, %v2946
    %v2948 = vpop.f32.mrb[0].mxu0
    %v2949 = vpop.f32.mrb[0].mxu0
    %v2950 = vadd.f32 0.0, %v2949
    %v2951 = vpop.f32.mrb[0].mxu0
    %2952 = vmatprep.mubr.bf16.mxu0 0
    %2953 = vmatmul.mubr.bf16.gmra.mrb[0].mxu0 %v2876
    %v2954 = vpop.f32.mrb[0].mxu0
    %v2955 = vadd.f32 0.0, %v2954
    %v2956 = vpop.f32.mrb[0].mxu0
    %v2957 = vpop.f32.mrb[0].mxu0
    %v2958 = vadd.f32 0.0, %v2957
    %v2959 = vpop.f32.mrb[0].mxu0
    %2960 = vmatprep.mubr.bf16.mxu0 0
    %2961 = vmatmul.mubr.bf16.gmra.mrb[0].mxu0 %v2879
    %v2962 = vpop.f32.mrb[0].mxu0
    %v2963 = vadd.f32 0.0, %v2962
    %v2964 = vpop.f32.mrb[0].mxu0
    %v2965 = vpop.f32.mrb[0].mxu0
    %v2966 = vadd.f32 0.0, %v2965
    %v2967 = vpop.f32.mrb[0].mxu0
    %2968 = vmatprep.mubr.bf16.mxu0 0
    %2969 = vmatmul.mubr.bf16.gmra.mrb[0].mxu0 %v2882
    %v2970 = vpop.f32.mrb[0].mxu0
    %v2971 = vadd.f32 0.0, %v2970
    %v2972 = vpop.f32.mrb[0].mxu0
    %v2973 = vpop.f32.mrb[0].mxu0
    %v2974 = vadd.f32 0.0, %v2973
    %v2975 = vpop.f32.mrb[0].mxu0
    %2976 = vmatprep.mubr.bf16.mxu0 0
    %2977 = vmatmul.mubr.bf16.gmra.mrb[0].mxu0 %v2885
    %v2978 = vpop.f32.mrb[0].mxu0
    %v2979 = vadd.f32 0.0, %v2978
    %v2980 = vpop.f32.mrb[0].mxu0
    %v2981 = vpop.f32.mrb[0].mxu0
    %v2982 = vadd.f32 0.0, %v2981
    %v2983 = vpop.f32.mrb[0].mxu0
    %2984 = vmatprep.mubr.bf16.mxu0 0
    %2985 = vmatmul.mubr.bf16.gmra.mrb[0].mxu0 %v2888
    %v2986 = vpop.f32.mrb[0].mxu0
    %v2987 = vadd.f32 0.0, %v2986
    %v2988 = vpop.f32.mrb[0].mxu0
    %v2989 = vpop.f32.mrb[0].mxu0
    %v2990 = vadd.f32 0.0, %v2989
    %v2991 = vpop.f32.mrb[0].mxu0
    %2992 = vmatprep.mubr.bf16.mxu0 0
    %2993 = vmatmul.mubr.bf16.gmra.mrb[0].mxu0 %v2891
    %v2994 = vpop.f32.mrb[0].mxu0
    %v2995 = vadd.f32 0.0, %v2994
    %v2996 = vpop.f32.mrb[0].mxu0
    %v2997 = vpop.f32.mrb[0].mxu0
    %v2998 = vadd.f32 0.0, %v2997
    %v2999 = vpop.f32.mrb[0].mxu0
    %3000 = vmatprep.mubr.bf16.mxu0 0
    %3001 = vmatmul.mubr.bf16.gmra.mrb[0].mxu0 %v2894
    %v3002 = vpop.f32.mrb[0].mxu0
    %v3003 = vadd.f32 0.0, %v3002
    %v3004 = vpop.f32.mrb[0].mxu0
    %v3005 = vpop.f32.mrb[0].mxu0
    %v3006 = vadd.f32 0.0, %v3005
    %v3007 = vpop.f32.mrb[0].mxu0
    %3008 = vdwg.mxu0
    %3009 = vrot.lane.b32.xlu0 %v2931, 2
    %v3010 = vpop.permute.xlu0 %3009
    %3011 = vrot.lane.b32.xlu0 %v2934, 2
    %v3012 = vpop.permute.xlu0 %3011
    %3013 = vrot.lane.b32.xlu0 %v2939, 2
    %v3014 = vpop.permute.xlu0 %3013
    %3015 = vrot.lane.b32.xlu0 %v2942, 2
    %v3016 = vpop.permute.xlu0 %3015
    %v3017 = vmul.f32 %v3010, %v485
    %v3018 = vmul.f32 %v3012, %v485
    %v3019 = vmul.f32 %v3014, %v485
    %v3020 = vmul.f32 %v3016, %v485
    %v3021 = vadd.f32 %v2963, %v3017
    %v3022 = vadd.f32 %v2966, %v3018
    %v3023 = vadd.f32 %v2971, %v3019
    %v3024 = vadd.f32 %v2974, %v3020
    %3025 = vrot.lane.b32.xlu0 %v2947, 1
    %v3026 = vpop.permute.xlu0 %3025
    %3027 = vrot.lane.b32.xlu0 %v2950, 1
    %v3028 = vpop.permute.xlu0 %3027
    %3029 = vrot.lane.b32.xlu0 %v2955, 1
    %v3030 = vpop.permute.xlu0 %3029
    %3031 = vrot.lane.b32.xlu0 %v2958, 1
    %v3032 = vpop.permute.xlu0 %3031
    %v3033 = vmul.f32 %v3026, %v505
    %v3034 = vmul.f32 %v3028, %v505
    %v3035 = vmul.f32 %v3030, %v505
    %v3036 = vmul.f32 %v3032, %v505
    %v3037 = vadd.f32 %v3021, %v3033
    %v3038 = vadd.f32 %v3022, %v3034
    %v3039 = vadd.f32 %v3023, %v3035
    %v3040 = vadd.f32 %v3024, %v3036
    %3041 = vrot.lane.b32.xlu0 %v2979, 127
    %v3042 = vpop.permute.xlu0 %3041
    %3043 = vrot.lane.b32.xlu0 %v2982, 127
    %v3044 = vpop.permute.xlu0 %3043
    %3045 = vrot.lane.b32.xlu0 %v2987, 127
    %v3046 = vpop.permute.xlu0 %3045
    %3047 = vrot.lane.b32.xlu0 %v2990, 127
    %v3048 = vpop.permute.xlu0 %3047
    %v3049 = vmul.f32 %v3042, %v525
    %v3050 = vmul.f32 %v3044, %v525
    %v3051 = vmul.f32 %v3046, %v525
    %v3052 = vmul.f32 %v3048, %v525
    %v3053 = vadd.f32 %v3037, %v3049
    %v3054 = vadd.f32 %v3038, %v3050
    %v3055 = vadd.f32 %v3039, %v3051
    %v3056 = vadd.f32 %v3040, %v3052
    %3057 = vrot.lane.b32.xlu0 %v2995, 126
    %v3058 = vpop.permute.xlu0 %3057
    %3059 = vrot.lane.b32.xlu0 %v2998, 126
    %v3060 = vpop.permute.xlu0 %3059
    %3061 = vrot.lane.b32.xlu0 %v3003, 126
    %v3062 = vpop.permute.xlu0 %3061
    %3063 = vrot.lane.b32.xlu0 %v3006, 126
    %v3064 = vpop.permute.xlu0 %3063
    %v3065 = vmul.f32 %v3058, %v545
    %v3066 = vmul.f32 %v3060, %v545
    %v3067 = vmul.f32 %v3062, %v545
    %v3068 = vmul.f32 %v3064, %v545
    %v3069 = vadd.f32 %v3053, %v3065
    %v3070 = vadd.f32 %v3054, %v3066
    %v3071 = vadd.f32 %v3055, %v3067
    %v3072 = vadd.f32 %v3056, %v3068
    %s3073 = scalar_lea.vmem [#allocation8], 256
    %v3074 = vld [vmem:[%s3073] sm:$0xff]
    %v3075 = vld [vmem:[%s3073 + $0x8] sm:$0xff]
    %v3076 = vld [vmem:[%s3073 + $0x10] sm:$0xff]
    %v3077 = vld [vmem:[%s3073 + $0x18] sm:$0xff]
    %3079 = vset.pattern.permute.xlu0 0
    %3080 = vperm.xlu0 %3079, %v3074
    %v3081 = vpop.permute.xlu0 %3080
    %3084 = vset.pattern.permute.xlu0 0
    %3085 = vperm.xlu0 %3084, %v3075
    %v3086 = vpop.permute.xlu0 %3085
    %3089 = vset.pattern.permute.xlu0 0
    %3090 = vperm.xlu0 %3089, %v3076
    %v3091 = vpop.permute.xlu0 %3090
    %3094 = vset.pattern.permute.xlu0 0
    %3095 = vperm.xlu0 %3094, %v3077
    %v3096 = vpop.permute.xlu0 %3095
    %v3098 = vadd.f32 %v3069, %v3081
    %v3099 = vadd.f32 %v3070, %v3086
    %v3100 = vadd.f32 %v3071, %v3091
    %v3101 = vadd.f32 %v3072, %v3096
    %v3102 = vmax.f32 %v3098, 0.0
    %v3103 = vmax.f32 %v3099, 0.0
    %v3104 = vmax.f32 %v3100, 0.0
    %v3105 = vmax.f32 %v3101, 0.0
    %s3106 = scalar_lea.vmem [#allocation7], 720
    %v3107 = vld [vmem:[%s3106] sm:$0xf]
    %v3108 = vld [vmem:[%s3106 + $0x4] sm:$0xf]
    %v3109 = vld [vmem:[%s3106 + $0x8] sm:$0xf]
    %v3110 = vld [vmem:[%s3106 + $0xc] sm:$0xf]
    %v3111 = vld [vmem:[%s3106 + $0x10] sm:$0xf]
    %v3112 = vld [vmem:[%s3106 + $0x14] sm:$0xf]
    %v3113 = vld [vmem:[%s3106 + $0x18] sm:$0xf]
    %v3114 = vld [vmem:[%s3106 + $0x1c] sm:$0xf]
    %v3115 = vld [vmem:[%s3106 + $0x20] sm:$0xf]
    %v3116 = vld [vmem:[%s3106 + $0x24] sm:$0xf]
    %v3117 = vld [vmem:[%s3106 + $0x28] sm:$0xf]
    %v3118 = vld [vmem:[%s3106 + $0x2c] sm:$0xf]
    %v3119 = vld [vmem:[%s3106 + $0x30] sm:$0xf]
    %v3120 = vld [vmem:[%s3106 + $0x34] sm:$0xf]
    %v3121 = vld [vmem:[%s3106 + $0x38] sm:$0xf]
    %v3122 = vld [vmem:[%s3106 + $0x3c] sm:$0xf]
    %v3123 = vld [vmem:[%s3106 + $0x40] sm:$0xf]
    %v3124 = vld [vmem:[%s3106 + $0x44] sm:$0xf]
    %v3125 = vld [vmem:[%s3106 + $0x48] sm:$0xf]
    %v3126 = vld [vmem:[%s3106 + $0x4c] sm:$0xf]
    %v3127 = vpack.c.bf16 %v3103, %v3102
    %v3128 = vpack.c.bf16 %v3105, %v3104
    %v3149 = vunpack.c.l.b16 %v3107
    %v3150 = vunpack.c.l.b16 %v3108
    %v3151 = vunpack.c.l.b16 %v3109
    %v3152 = vunpack.c.l.b16 %v3110
    %v3153 = vunpack.c.l.b16 %v3111
    %v3154 = vunpack.c.l.b16 %v3112
    %v3155 = vunpack.c.l.b16 %v3113
    %v3156 = vunpack.c.l.b16 %v3114
    %v3157 = vunpack.c.l.b16 %v3115
    %v3158 = vunpack.c.l.b16 %v3116
    %v3159 = vunpack.c.l.b16 %v3117
    %v3160 = vunpack.c.l.b16 %v3118
    %v3161 = vunpack.c.l.b16 %v3119
    %v3162 = vunpack.c.l.b16 %v3120
    %v3163 = vunpack.c.l.b16 %v3121
    %v3164 = vunpack.c.l.b16 %v3122
    %v3165 = vunpack.c.l.b16 %v3123
    %v3166 = vunpack.c.l.b16 %v3124
    %v3167 = vunpack.c.l.b16 %v3125
    %v3168 = vunpack.c.l.b16 %v3126
    %v3169 = vpack.c.b16 %v3150, %v3149
    %v3170 = vpack.c.b16 %v3152, %v3151
    %v3171 = vpack.c.b16 %v3154, %v3153
    %v3172 = vpack.c.b16 %v3156, %v3155
    %v3173 = vpack.c.b16 %v3158, %v3157
    %v3174 = vpack.c.b16 %v3160, %v3159
    %v3175 = vpack.c.b16 %v3162, %v3161
    %v3176 = vpack.c.b16 %v3164, %v3163
    %v3177 = vpack.c.b16 %v3166, %v3165
    %v3178 = vpack.c.b16 %v3168, %v3167
    %v3180 = vsel %vm330, %v3169, 0
    %v3183 = vsel %vm330, %v3170, 0
    %v3186 = vsel %vm330, %v3171, 0
    %v3189 = vsel %vm330, %v3172, 0
    %v3192 = vsel %vm330, %v3173, 0
    %v3195 = vsel %vm330, %v3174, 0
    %v3198 = vsel %vm330, %v3175, 0
    %v3201 = vsel %vm330, %v3176, 0
    %v3204 = vsel %vm330, %v3177, 0
    %v3207 = vsel %vm330, %v3178, 0
    %3209 = vmatprep.subr.bf16.mxu0 0
    %3210 = vmatpush1.bf16.msra.mxu0 %v3127
    %3211 = vmatprep.subr.bf16.mxu0 0
    %3212 = vmatpush1.bf16.msra.mxu0 %v3128
    %3213 = vmatprep.subr.bf16.mxu0 0
    %3214 = vmatpush1.bf16.msra.mxu0 0
    %3215 = vmatprep.subr.bf16.mxu0 0
    %3216 = vmatpush1.bf16.msra.mxu0 0
    %3217 = vmatprep.subr.bf16.mxu0 0
    %3218 = vmatpush1.bf16.msra.mxu0 0
    %3219 = vmatprep.subr.bf16.mxu0 0
    %3220 = vmatpush1.bf16.msra.mxu0 0
    %3221 = vmatprep.subr.bf16.mxu0 0
    %3222 = vmatpush1.bf16.msra.mxu0 0
    %3223 = vmatprep.subr.bf16.mxu0 0
    %3224 = vmatpush1.bf16.msra.mxu0 0
    %3225 = vmatprep.subr.bf16.mxu0 0
    %3226 = vmatpush1.bf16.msra.mxu0 0
    %3227 = vmatprep.subr.bf16.mxu0 0
    %3228 = vmatpush1.bf16.msra.mxu0 0
    %3229 = vmatprep.subr.bf16.mxu0 0
    %3230 = vmatpush1.bf16.msra.mxu0 0
    %3231 = vmatprep.subr.bf16.mxu0 0
    %3232 = vmatpush1.bf16.msra.mxu0 0
    %3233 = vmatprep.subr.bf16.mxu0 0
    %3234 = vmatpush1.bf16.msra.mxu0 0
    %3235 = vmatprep.subr.bf16.mxu0 0
    %3236 = vmatpush1.bf16.msra.mxu0 0
    %3237 = vmatprep.subr.bf16.mxu0 0
    %3238 = vmatpush1.bf16.msra.mxu0 0
    %3239 = vmatprep.subr.bf16.mxu0 0
    %3240 = vmatpush1.bf16.msra.mxu0 0
    %3241 = vmatprep.mubr.bf16.mxu0 0
    %3242 = vmatmul.mubr.bf16.gmra.mrb[0].mxu0 %v3180
    %v3243 = vpop.f32.mrb[0].mxu0
    %v3244 = vadd.f32 0.0, %v3243
    %v3245 = vpop.f32.mrb[0].mxu0
    %v3246 = vpop.f32.mrb[0].mxu0
    %v3247 = vadd.f32 0.0, %v3246
    %v3248 = vpop.f32.mrb[0].mxu0
    %3249 = vmatprep.mubr.bf16.mxu0 0
    %3250 = vmatmul.mubr.bf16.gmra.mrb[0].mxu0 %v3183
    %v3251 = vpop.f32.mrb[0].mxu0
    %v3252 = vadd.f32 0.0, %v3251
    %v3253 = vpop.f32.mrb[0].mxu0
    %v3254 = vpop.f32.mrb[0].mxu0
    %v3255 = vadd.f32 0.0, %v3254
    %v3256 = vpop.f32.mrb[0].mxu0
    %3257 = vmatprep.mubr.bf16.mxu0 0
    %3258 = vmatmul.mubr.bf16.gmra.mrb[0].mxu0 %v3186
    %v3259 = vpop.f32.mrb[0].mxu0
    %v3260 = vadd.f32 0.0, %v3259
    %v3261 = vpop.f32.mrb[0].mxu0
    %v3262 = vpop.f32.mrb[0].mxu0
    %v3263 = vadd.f32 0.0, %v3262
    %v3264 = vpop.f32.mrb[0].mxu0
    %3265 = vmatprep.mubr.bf16.mxu0 0
    %3266 = vmatmul.mubr.bf16.gmra.mrb[0].mxu0 %v3189
    %v3267 = vpop.f32.mrb[0].mxu0
    %v3268 = vadd.f32 0.0, %v3267
    %v3269 = vpop.f32.mrb[0].mxu0
    %v3270 = vpop.f32.mrb[0].mxu0
    %v3271 = vadd.f32 0.0, %v3270
    %v3272 = vpop.f32.mrb[0].mxu0
    %3273 = vmatprep.mubr.bf16.mxu0 0
    %3274 = vmatmul.mubr.bf16.gmra.mrb[0].mxu0 %v3192
    %v3275 = vpop.f32.mrb[0].mxu0
    %v3276 = vadd.f32 0.0, %v3275
    %v3277 = vpop.f32.mrb[0].mxu0
    %v3278 = vpop.f32.mrb[0].mxu0
    %v3279 = vadd.f32 0.0, %v3278
    %v3280 = vpop.f32.mrb[0].mxu0
    %3281 = vmatprep.mubr.bf16.mxu0 0
    %3282 = vmatmul.mubr.bf16.gmra.mrb[0].mxu0 %v3195
    %v3283 = vpop.f32.mrb[0].mxu0
    %v3284 = vadd.f32 0.0, %v3283
    %v3285 = vpop.f32.mrb[0].mxu0
    %v3286 = vpop.f32.mrb[0].mxu0
    %v3287 = vadd.f32 0.0, %v3286
    %v3288 = vpop.f32.mrb[0].mxu0
    %3289 = vmatprep.mubr.bf16.mxu0 0
    %3290 = vmatmul.mubr.bf16.gmra.mrb[0].mxu0 %v3198
    %v3291 = vpop.f32.mrb[0].mxu0
    %v3292 = vadd.f32 0.0, %v3291
    %v3293 = vpop.f32.mrb[0].mxu0
    %v3294 = vpop.f32.mrb[0].mxu0
    %v3295 = vadd.f32 0.0, %v3294
    %v3296 = vpop.f32.mrb[0].mxu0
    %3297 = vmatprep.mubr.bf16.mxu0 0
    %3298 = vmatmul.mubr.bf16.gmra.mrb[0].mxu0 %v3201
    %v3299 = vpop.f32.mrb[0].mxu0
    %v3300 = vadd.f32 0.0, %v3299
    %v3301 = vpop.f32.mrb[0].mxu0
    %v3302 = vpop.f32.mrb[0].mxu0
    %v3303 = vadd.f32 0.0, %v3302
    %v3304 = vpop.f32.mrb[0].mxu0
    %3305 = vmatprep.mubr.bf16.mxu0 0
    %3306 = vmatmul.mubr.bf16.gmra.mrb[0].mxu0 %v3204
    %v3307 = vpop.f32.mrb[0].mxu0
    %v3308 = vadd.f32 0.0, %v3307
    %v3309 = vpop.f32.mrb[0].mxu0
    %v3310 = vpop.f32.mrb[0].mxu0
    %v3311 = vadd.f32 0.0, %v3310
    %v3312 = vpop.f32.mrb[0].mxu0
    %3313 = vmatprep.mubr.bf16.mxu0 0
    %3314 = vmatmul.mubr.bf16.gmra.mrb[0].mxu0 %v3207
    %v3315 = vpop.f32.mrb[0].mxu0
    %v3316 = vadd.f32 0.0, %v3315
    %v3317 = vpop.f32.mrb[0].mxu0
    %v3318 = vpop.f32.mrb[0].mxu0
    %v3319 = vadd.f32 0.0, %v3318
    %v3320 = vpop.f32.mrb[0].mxu0
    %3321 = vdwg.mxu0
    %3322 = vrot.lane.b32.xlu0 %v3244, 2
    %v3323 = vpop.permute.xlu0 %3322
    %3324 = vrot.lane.b32.xlu0 %v3247, 2
    %v3325 = vpop.permute.xlu0 %3324
    %3326 = vrot.lane.b32.xlu0 %v3252, 2
    %v3327 = vpop.permute.xlu0 %3326
    %3328 = vrot.lane.b32.xlu0 %v3255, 2
    %v3329 = vpop.permute.xlu0 %3328
    %v3330 = vmul.f32 %v3323, %v485
    %v3331 = vmul.f32 %v3325, %v485
    %v3332 = vmul.f32 %v3327, %v485
    %v3333 = vmul.f32 %v3329, %v485
    %v3334 = vadd.f32 %v3276, %v3330
    %v3335 = vadd.f32 %v3279, %v3331
    %v3336 = vadd.f32 %v3284, %v3332
    %v3337 = vadd.f32 %v3287, %v3333
    %3338 = vrot.lane.b32.xlu0 %v3260, 1
    %v3339 = vpop.permute.xlu0 %3338
    %3340 = vrot.lane.b32.xlu0 %v3263, 1
    %v3341 = vpop.permute.xlu0 %3340
    %3342 = vrot.lane.b32.xlu0 %v3268, 1
    %v3343 = vpop.permute.xlu0 %3342
    %3344 = vrot.lane.b32.xlu0 %v3271, 1
    %v3345 = vpop.permute.xlu0 %3344
    %v3346 = vmul.f32 %v3339, %v505
    %v3347 = vmul.f32 %v3341, %v505
    %v3348 = vmul.f32 %v3343, %v505
    %v3349 = vmul.f32 %v3345, %v505
    %v3350 = vadd.f32 %v3334, %v3346
    %v3351 = vadd.f32 %v3335, %v3347
    %v3352 = vadd.f32 %v3336, %v3348
    %v3353 = vadd.f32 %v3337, %v3349
    %3354 = vrot.lane.b32.xlu0 %v3292, 127
    %v3355 = vpop.permute.xlu0 %3354
    %3356 = vrot.lane.b32.xlu0 %v3295, 127
    %v3357 = vpop.permute.xlu0 %3356
    %3358 = vrot.lane.b32.xlu0 %v3300, 127
    %v3359 = vpop.permute.xlu0 %3358
    %3360 = vrot.lane.b32.xlu0 %v3303, 127
    %v3361 = vpop.permute.xlu0 %3360
    %v3362 = vmul.f32 %v3355, %v525
    %v3363 = vmul.f32 %v3357, %v525
    %v3364 = vmul.f32 %v3359, %v525
    %v3365 = vmul.f32 %v3361, %v525
    %v3366 = vadd.f32 %v3350, %v3362
    %v3367 = vadd.f32 %v3351, %v3363
    %v3368 = vadd.f32 %v3352, %v3364
    %v3369 = vadd.f32 %v3353, %v3365
    %3370 = vrot.lane.b32.xlu0 %v3308, 126
    %v3371 = vpop.permute.xlu0 %3370
    %3372 = vrot.lane.b32.xlu0 %v3311, 126
    %v3373 = vpop.permute.xlu0 %3372
    %3374 = vrot.lane.b32.xlu0 %v3316, 126
    %v3375 = vpop.permute.xlu0 %3374
    %3376 = vrot.lane.b32.xlu0 %v3319, 126
    %v3377 = vpop.permute.xlu0 %3376
    %v3378 = vmul.f32 %v3371, %v545
    %v3379 = vmul.f32 %v3373, %v545
    %v3380 = vmul.f32 %v3375, %v545
    %v3381 = vmul.f32 %v3377, %v545
    %v3382 = vadd.f32 %v3366, %v3378
    %v3383 = vadd.f32 %v3367, %v3379
    %v3384 = vadd.f32 %v3368, %v3380
    %v3385 = vadd.f32 %v3369, %v3381
    %s3386 = scalar_lea.vmem [#allocation8], 288
    %v3387 = vld [vmem:[%s3386] sm:$0xff]
    %v3388 = vld [vmem:[%s3386 + $0x8] sm:$0xff]
    %v3389 = vld [vmem:[%s3386 + $0x10] sm:$0xff]
    %v3390 = vld [vmem:[%s3386 + $0x18] sm:$0xff]
    %3392 = vset.pattern.permute.xlu0 0
    %3393 = vperm.xlu0 %3392, %v3387
    %v3394 = vpop.permute.xlu0 %3393
    %3397 = vset.pattern.permute.xlu0 0
    %3398 = vperm.xlu0 %3397, %v3388
    %v3399 = vpop.permute.xlu0 %3398
    %3402 = vset.pattern.permute.xlu0 0
    %3403 = vperm.xlu0 %3402, %v3389
    %v3404 = vpop.permute.xlu0 %3403
    %3407 = vset.pattern.permute.xlu0 0
    %3408 = vperm.xlu0 %3407, %v3390
    %v3409 = vpop.permute.xlu0 %3408
    %v3411 = vadd.f32 %v3382, %v3394
    %v3412 = vadd.f32 %v3383, %v3399
    %v3413 = vadd.f32 %v3384, %v3404
    %v3414 = vadd.f32 %v3385, %v3409
    %v3415 = vadd.f32 %v2785, %v3411
    %v3416 = vadd.f32 %v2786, %v3412
    %v3417 = vadd.f32 %v2787, %v3413
    %v3418 = vadd.f32 %v2788, %v3414
    %v3419 = vld [vmem:[%s6] sm:$0xff]
    %v3420 = vld [vmem:[%s6 + $0x8] sm:$0xff]
    %v3421 = vld [vmem:[%s6 + $0x10] sm:$0xff]
    %v3422 = vld [vmem:[%s6 + $0x18] sm:$0xff]
    %v3423 = vmul.f32 %v3415, %v3419
    %v3424 = vmul.f32 %v3416, %v3420
    %v3425 = vmul.f32 %v3417, %v3421
    %v3426 = vmul.f32 %v3418, %v3422
    %v3427 = vld [vmem:[#allocation10] sm:$0xff]
    %v3428 = vld [vmem:[#allocation10 + $0x8] sm:$0xff]
    %v3429 = vld [vmem:[#allocation10 + $0x10] sm:$0xff]
    %v3430 = vld [vmem:[#allocation10 + $0x18] sm:$0xff]
    %v3431 = vld [vmem:[#allocation10 + $0x20] sm:$0xff]
    %v3432 = vld [vmem:[#allocation10 + $0x28] sm:$0xff]
    %v3433 = vld [vmem:[#allocation10 + $0x30] sm:$0xff]
    %v3434 = vld [vmem:[#allocation10 + $0x38] sm:$0xff]
    %v3435 = vld [vmem:[#allocation10 + $0x40] sm:$0xff]
    %v3436 = vld [vmem:[#allocation10 + $0x48] sm:$0xff]
    %v3437 = vld [vmem:[#allocation10 + $0x50] sm:$0xff]
    %v3438 = vld [vmem:[#allocation10 + $0x58] sm:$0xff]
    %v3439 = vld [vmem:[#allocation10 + $0x60] sm:$0xff]
    %v3440 = vld [vmem:[#allocation10 + $0x68] sm:$0xff]
    %v3441 = vld [vmem:[#allocation10 + $0x70] sm:$0xff]
    %v3442 = vld [vmem:[#allocation10 + $0x78] sm:$0xff]
    %3443 = vmatprep.subr.mxu0 0.0
    %3444 = vmatpush1.msra.mxu0 %v3427
    %3445 = vmatprep.subr.mxu0 0.0
    %3446 = vmatpush1.msra.mxu0 %v3428
    %3447 = vmatprep.subr.mxu0 0.0
    %3448 = vmatpush1.msra.mxu0 %v3429
    %3449 = vmatprep.subr.mxu0 0.0
    %3450 = vmatpush1.msra.mxu0 %v3430
    %3451 = vmatprep.subr.mxu0 0.0
    %3452 = vmatpush1.msra.mxu0 %v3431
    %3453 = vmatprep.subr.mxu0 0.0
    %3454 = vmatpush1.msra.mxu0 %v3432
    %3455 = vmatprep.subr.mxu0 0.0
    %3456 = vmatpush1.msra.mxu0 %v3433
    %3457 = vmatprep.subr.mxu0 0.0
    %3458 = vmatpush1.msra.mxu0 %v3434
    %3459 = vmatprep.subr.mxu0 0.0
    %3460 = vmatpush1.msra.mxu0 %v3435
    %3461 = vmatprep.subr.mxu0 0.0
    %3462 = vmatpush1.msra.mxu0 %v3436
    %3463 = vmatprep.subr.mxu0 0.0
    %3464 = vmatpush1.msra.mxu0 %v3437
    %3465 = vmatprep.subr.mxu0 0.0
    %3466 = vmatpush1.msra.mxu0 %v3438
    %3467 = vmatprep.subr.mxu0 0.0
    %3468 = vmatpush1.msra.mxu0 %v3439
    %3469 = vmatprep.subr.mxu0 0.0
    %3470 = vmatpush1.msra.mxu0 %v3440
    %3471 = vmatprep.subr.mxu0 0.0
    %3472 = vmatpush1.msra.mxu0 %v3441
    %3473 = vmatprep.subr.mxu0 0.0
    %3474 = vmatpush1.msra.mxu0 %v3442
    %3475 = vmatprep.subr.mxu0 0.0
    %3476 = vmatpush1.msra.mxu0 0.0
    %3477 = vmatprep.subr.mxu0 0.0
    %3478 = vmatpush1.msra.mxu0 0.0
    %3479 = vmatprep.subr.mxu0 0.0
    %3480 = vmatpush1.msra.mxu0 0.0
    %3481 = vmatprep.subr.mxu0 0.0
    %3482 = vmatpush1.msra.mxu0 0.0
    %3483 = vmatprep.subr.mxu0 0.0
    %3484 = vmatpush1.msra.mxu0 0.0
    %3485 = vmatprep.subr.mxu0 0.0
    %3486 = vmatpush1.msra.mxu0 0.0
    %3487 = vmatprep.subr.mxu0 0.0
    %3488 = vmatpush1.msra.mxu0 0.0
    %3489 = vmatprep.subr.mxu0 0.0
    %3490 = vmatpush1.msra.mxu0 0.0
    %3491 = vmatprep.subr.mxu0 0.0
    %3492 = vmatpush1.msra.mxu0 0.0
    %3493 = vmatprep.subr.mxu0 0.0
    %3494 = vmatpush1.msra.mxu0 0.0
    %3495 = vmatprep.subr.mxu0 0.0
    %3496 = vmatpush1.msra.mxu0 0.0
    %3497 = vmatprep.subr.mxu0 0.0
    %3498 = vmatpush1.msra.mxu0 0.0
    %3499 = vmatprep.subr.mxu0 0.0
    %3500 = vmatpush1.msra.mxu0 0.0
    %3501 = vmatprep.subr.mxu0 0.0
    %3502 = vmatpush1.msra.mxu0 0.0
    %3503 = vmatprep.subr.mxu0 0.0
    %3504 = vmatpush1.msra.mxu0 0.0
    %3505 = vmatprep.subr.mxu0 0.0
    %3506 = vmatpush1.msra.mxu0 0.0
    %3507 = vmatprep.mubr.f32.mxu0 0.0
    %3508 = vmatmul.mubr.f32.gmra.mrb[0].mxu0 %v3423
    %v3509 = vpop.f32.mrb[0].mxu0
    %v3510 = vadd.f32 0.0, %v3509
    %v3511 = vpop.f32.mrb[0].mxu0
    %3512 = vmatprep.mubr.f32.mxu0 0.0
    %3513 = vmatmul.mubr.f32.gmra.mrb[0].mxu0 %v3424
    %v3514 = vpop.f32.mrb[0].mxu0
    %v3515 = vadd.f32 0.0, %v3514
    %v3516 = vpop.f32.mrb[0].mxu0
    %3517 = vmatprep.mubr.f32.mxu0 0.0
    %3518 = vmatmul.mubr.f32.gmra.mrb[0].mxu0 %v3425
    %v3519 = vpop.f32.mrb[0].mxu0
    %v3520 = vadd.f32 0.0, %v3519
    %v3521 = vpop.f32.mrb[0].mxu0
    %3522 = vmatprep.mubr.f32.mxu0 0.0
    %3523 = vmatmul.mubr.f32.gmra.mrb[0].mxu0 %v3426
    %v3524 = vpop.f32.mrb[0].mxu0
    %v3525 = vadd.f32 0.0, %v3524
    %v3526 = vpop.f32.mrb[0].mxu0
    %3527 = vdwg.mxu0
    %v3528 = vadd.f32 %v3510, %v3515
    %v3529 = vadd.f32 %v3528, %v3520
    %v3530 = vadd.f32 %v3529, %v3525
    %v3531 = vrot.slane %v3530, 4
    %v3532 = vadd.f32 %v3530, %v3531
    %v3533 = vrot.slane %v3532, 2
    %v3534 = vadd.f32 %v3532, %v3533
    %v3535 = vrot.slane %v3534, 1
    %v3536 = vadd.f32 %v3534, %v3535
    %s3537 = sld [smem:[#allocation2]]
    %v3538 = vstv %s3537
    %v3539 = vadd.f32 %v3536, %v3538
    %3540 = vst [vmem:[%s9] sm:$0x1] %v3539
    // Predicated region
    $region58: #{_lambda_.1} parent=1 // pred_check
      _
    $region59: #{_lambda_.1} parent=1 // pred_check_branch
      %3542 = sbr.rel (0) target = $region61
    $region60: #{_lambda_.1} parent=1 // pred_region
      _
    $region61: #{_lambda_.1} parent=1 // pred_fallthru
      _
    // Predicated region
    $region62: #{_lambda_.1} parent=1 // pred_check
      _
    $region63: #{_lambda_.1} parent=1 // pred_check_branch
      %3544 = sbr.rel (0) target = $region65
    $region64: #{_lambda_.1} parent=1 // pred_region
      _
    $region65: #{_lambda_.1} parent=1 // pred_fallthru
      _
    %3545 = vsyncpa [#allocation4], 1
    %3546 = vsyncpa [#allocation6], 1
    %3547 = vsyncpa [#allocation9], 1

</llo_original>
